<compile_context>
chip_gen: v5e
topology: v5e:2x2
jax: 0.10.0
libtpu: 0.0.40
codegen_flags: <defaults>
</compile_context>

<pallas_src>
import jax
import jax.numpy as jnp
from jax.experimental import pallas as pl
from jax.experimental.pallas import tpu as pltpu


# ----------------------------------------------------------------------------
# Kernel 1: fused CNN features + bvp embedding + LSTM input-gate projection
# ----------------------------------------------------------------------------
def _cnn_xgates_kernel(p_ref, bvp_ref, cw_ref, cb_ref, pw_ref, pb_ref,
                       bw_ref, bb_ref, wimg_ref, wbvp_ref, lb_ref, o_ref):
    f, hw, k = p_ref.shape
    # One big matmul over all F frames in this block: (F*HW, 27) @ (27, Cc).
    patches = p_ref[...].reshape(f * hw, k)
    conv = jnp.dot(patches, cw_ref[...], preferred_element_type=jnp.float32)
    conv = jnp.maximum(conv + cb_ref[...], 0.0)               # (F*HW, Cc) f32
    # Segmented global average pool per frame.
    pooled = jnp.mean(conv.reshape(f, hw, -1), axis=1)        # (F, Cc) f32
    # Fused projection to the 512-dim feature (kept in registers/VMEM only).
    feats = jnp.dot(pooled.astype(pw_ref.dtype), pw_ref[...],
                    preferred_element_type=jnp.float32)
    feats = jnp.maximum(feats + pb_ref[...], 0.0)             # (F, 512) f32
    # bvp embedding (K=1 "matmul" as a VPU broadcast) + ReLU: (F, be).
    bvp_e = jnp.maximum(bvp_ref[...] * bw_ref[...] + bb_ref[...], 0.0)
    # Input-side LSTM gate pre-activations: the K=512 contraction lives here,
    # outside the serial recurrence.  Output is lane-dense (F, 4*hs = 128).
    xg = (jnp.dot(feats.astype(wimg_ref.dtype), wimg_ref[...],
                  preferred_element_type=jnp.float32)
          + jnp.dot(bvp_e.astype(wbvp_ref.dtype), wbvp_ref[...],
                    preferred_element_type=jnp.float32)
          + lb_ref[...])
    o_ref[...] = xg.astype(o_ref.dtype)


def _pick_frames_per_block(n_frames, target):
    # F must be a multiple of 8 (clean sublane tiling of the (F, 128) output
    # block) or cover all frames.  Prefer >=2 grid steps so v7x megacore can
    # shard the frame axis across its 2 TensorCores.
    if n_frames <= target:
        return n_frames
    f = max(8, (target // 8) * 8)
    while f >= 8:
        if n_frames % f == 0:
            return f
        f -= 8
    return n_frames


def cnn_xgates(patches, bvp_flat, conv_w, conv_b, proj_w, proj_b,
               bvp_w, bvp_b, wih_img, wih_bvp, lstm_b, frames_per_block=8):
    """patches: (N, H*W, Cin*9), bvp_flat: (N, 1) -> xgates (N, 4*hidden) f32."""
    n, hw, k = patches.shape
    cc = conv_w.shape[1]
    d = proj_w.shape[1]
    be = bvp_w.shape[1]
    g4 = wih_img.shape[1]
    fb = _pick_frames_per_block(n, frames_per_block)
    # NOTE: for large H*W, retune frames_per_block (and vmem_limit_bytes via
    # pltpu.CompilerParams) for v7x's 64 MiB VMEM vs 128 MiB on v5e/v6e.
    return pl.pallas_call(
        _cnn_xgates_kernel,
        grid=(n // fb,),
        in_specs=[
            pl.BlockSpec((fb, hw, k), lambda i: (i, 0, 0)),
            pl.BlockSpec((fb, 1), lambda i: (i, 0)),
            pl.BlockSpec((k, cc), lambda i: (0, 0)),
            pl.BlockSpec((1, cc), lambda i: (0, 0)),
            pl.BlockSpec((cc, d), lambda i: (0, 0)),
            pl.BlockSpec((1, d), lambda i: (0, 0)),
            pl.BlockSpec((1, be), lambda i: (0, 0)),
            pl.BlockSpec((1, be), lambda i: (0, 0)),
            pl.BlockSpec((d, g4), lambda i: (0, 0)),
            pl.BlockSpec((be, g4), lambda i: (0, 0)),
            pl.BlockSpec((1, g4), lambda i: (0, 0)),
        ],
        out_specs=pl.BlockSpec((fb, g4), lambda i: (i, 0)),
        out_shape=jax.ShapeDtypeStruct((n, g4), jnp.float32),
        compiler_params=pltpu.CompilerParams(
            dimension_semantics=("parallel",)),
    )(patches, bvp_flat,
      conv_w, conv_b.reshape(1, cc),
      proj_w, proj_b.reshape(1, d),
      bvp_w, bvp_b.reshape(1, be),
      wih_img, wih_bvp, lstm_b.reshape(1, g4))


# ----------------------------------------------------------------------------
# Kernel 2: LSTM recurrence (input projection precomputed) + fused final fc
# ----------------------------------------------------------------------------
def _lstm_fc_kernel(xg_ref, whh_ref, fcw_ref, fcb_ref, o_ref,
                    h_sc, c_sc, hseq_sc):
    t = pl.program_id(0)
    T = pl.num_programs(0)
    hs = h_sc.shape[-1]

    @pl.when(t == 0)
    def _():
        h_sc[...] = jnp.zeros_like(h_sc)
        c_sc[...] = jnp.zeros_like(c_sc)

    # Only the tiny recurrent contraction (B, hs) @ (hs, 4hs) sits in the
    # serial loop; all input-side work was hoisted into kernel 1.
    gates = xg_ref[0] + jnp.dot(h_sc[...].astype(whh_ref.dtype), whh_ref[...],
                                preferred_element_type=jnp.float32)

    # PyTorch gate ordering: i, f, g, o.  (32-lane slices are negligible at
    # hs=32; for large hidden lay gates out gate-major instead.)
    i = jax.nn.sigmoid(gates[:, 0 * hs:1 * hs])
    f = jax.nn.sigmoid(gates[:, 1 * hs:2 * hs])
    g = jnp.tanh(gates[:, 2 * hs:3 * hs])
    o = jax.nn.sigmoid(gates[:, 3 * hs:4 * hs])
    c = f * c_sc[...] + i * g
    h = o * jnp.tanh(c)
    c_sc[...] = c
    h_sc[...] = h
    hseq_sc[t] = h                                    # accumulate in VMEM

    @pl.when(t == T - 1)
    def _():
        # Fused fc (hidden -> 1) as a lane reduction; single bulk store.
        preds = jnp.sum(hseq_sc[...] * fcw_ref[...], axis=-1, keepdims=True)
        o_ref[...] = (preds + fcb_ref[...]).astype(o_ref.dtype)


def lstm_fc(xg_tbd, whh, fc_w, fc_b):
    """xg_tbd: (T, B, 4*hidden) input gate pre-activations -> (T, B, 1)."""
    T, B, g4 = xg_tbd.shape
    hs = whh.shape[0]
    return pl.pallas_call(
        _lstm_fc_kernel,
        grid=(T,),
        in_specs=[
            pl.BlockSpec((1, B, g4), lambda t: (t, 0, 0)),
            pl.BlockSpec((hs, g4), lambda t: (0, 0)),
            pl.BlockSpec((1, 1, hs), lambda t: (0, 0, 0)),
            pl.BlockSpec((1, 1, 1), lambda t: (0, 0, 0)),
        ],
        # Full-extent output block, constant index_map: stays resident in
        # VMEM across the whole T loop and is written back once at the end.
        out_specs=pl.BlockSpec((T, B, 1), lambda t: (0, 0, 0)),
        out_shape=jax.ShapeDtypeStruct((T, B, 1), jnp.float32),
        scratch_shapes=[pltpu.VMEM((B, hs), jnp.float32),
                        pltpu.VMEM((B, hs), jnp.float32),
                        pltpu.VMEM((T, B, hs), jnp.float32)],
        compiler_params=pltpu.CompilerParams(
            dimension_semantics=("arbitrary",)),   # carries h/c: sequential
    )(xg_tbd, whh, fc_w.reshape(1, 1, hs), fc_b.reshape(1, 1, 1))


# ----------------------------------------------------------------------------
# JAX glue (im2col / layout / parameters)
# ----------------------------------------------------------------------------
def im2col_3x3(x):
    """x: (N, C, H, W) NCHW -> patches (N, H*W, C*9), pad=1 'same' conv."""
    # TODO(synk): build the 9 shifted conv views in-kernel from a padded-frame
    # DMA to kill the 9x im2col HBM amplification at realistic H, W; for now
    # the patch stream is emitted in the matmul dtype (bf16 on v6e/v7x) which
    # halves it, and it is negligible at these small shapes.
    n, c, h, w = x.shape
    xp = jnp.pad(x, ((0, 0), (0, 0), (1, 1), (1, 1)))
    cols = []
    for ci in range(c):
        for dh in range(3):
            for dw in range(3):
                cols.append(xp[:, ci, dh:dh + h, dw:dw + w])
    patches = jnp.stack(cols, axis=-1)               # (N, H, W, C*9)
    return patches.reshape(n, h * w, c * 9)


def forward(params, x, bvp, mm_dtype=jnp.float32, frames_per_block=8):
    """x: (B, T, 3, H, W), bvp: (B, T) -> (B, T, 1)  (matches PyTorch forward)."""
    B, T, C, H, W = x.shape
    mm = mm_dtype
    xf = x.reshape(B * T, C, H, W)
    patches = im2col_3x3(xf).astype(mm)                          # (BT, HW, 27)
    bvp_flat = bvp.reshape(B * T, 1).astype(jnp.float32)         # (BT, 1)
    xg = cnn_xgates(patches, bvp_flat,
                    params['conv_w'].astype(mm), params['conv_b'],
                    params['proj_w'].astype(mm), params['proj_b'],
                    params['bvp_w'], params['bvp_b'],
                    params['wih_img'].astype(mm), params['wih_bvp'].astype(mm),
                    params['lstm_b'],
                    frames_per_block=frames_per_block)           # (BT, 4hs) f32
    xg_tbd = xg.reshape(B, T, -1).transpose(1, 0, 2)             # (T, B, 4hs)
    preds = lstm_fc(xg_tbd, params['whh'].astype(mm),
                    params['fc_w'], params['fc_b'])              # (T, B, 1)
    return preds.transpose(1, 0, 2)                              # (B, T, 1)


def init_params(key, hidden=32, bvp_embed=32, conv_c=8, feat_dim=512, cin=3):
    ks = jax.random.split(key, 12)
    s = 0.1
    return dict(
        conv_w=jax.random.normal(ks[0], (cin * 9, conv_c), jnp.float32) * s,
        conv_b=jax.random.normal(ks[1], (conv_c,), jnp.float32) * s,
        proj_w=jax.random.normal(ks[2], (conv_c, feat_dim), jnp.float32) * s,
        proj_b=jax.random.normal(ks[3], (feat_dim,), jnp.float32) * s,
        bvp_w=jax.random.normal(ks[4], (1, bvp_embed), jnp.float32) * s,
        bvp_b=jax.random.normal(ks[5], (bvp_embed,), jnp.float32) * s,
        # LSTM input weights pre-split: image-feature rows and bvp-embed rows.
        wih_img=jax.random.normal(ks[6], (feat_dim, 4 * hidden), jnp.float32) * s,
        wih_bvp=jax.random.normal(ks[7], (bvp_embed, 4 * hidden), jnp.float32) * s,
        whh=jax.random.normal(ks[8], (hidden, 4 * hidden), jnp.float32) * s,
        lstm_b=jax.random.normal(ks[9], (4 * hidden,), jnp.float32) * s,
        fc_w=jax.random.normal(ks[10], (hidden, 1), jnp.float32) * s,
        fc_b=jax.random.normal(ks[11], (1,), jnp.float32) * s,
    )


# ----------------------------------------------------------------------------
# Pure-JAX reference (same math, no Pallas)
# ----------------------------------------------------------------------------
def ref_forward(params, x, bvp):
    B, T, C, H, W = x.shape
    xf = x.reshape(B * T, C, H, W)
    patches = im2col_3x3(xf)
    conv = jnp.maximum(
        jnp.einsum('npk,kc->npc', patches, params['conv_w']) + params['conv_b'], 0.0)
    pooled = conv.mean(axis=1)
    feats = jnp.maximum(pooled @ params['proj_w'] + params['proj_b'], 0.0)
    bvp_e = jnp.maximum(
        bvp.reshape(B * T, 1).astype(jnp.float32) @ params['bvp_w'] + params['bvp_b'], 0.0)
    feats = feats.reshape(B, T, -1).transpose(1, 0, 2)   # (T, B, 512)
    bvp_e = bvp_e.reshape(B, T, -1).transpose(1, 0, 2)   # (T, B, 32)
    hs_dim = params['whh'].shape[0]

    def step(carry, xs):
        f_t, b_t = xs
        h, c = carry
        gates = (f_t @ params['wih_img'] + b_t @ params['wih_bvp']
                 + h @ params['whh'] + params['lstm_b'])
        i = jax.nn.sigmoid(gates[:, :hs_dim])
        f = jax.nn.sigmoid(gates[:, hs_dim:2 * hs_dim])
        g = jnp.tanh(gates[:, 2 * hs_dim:3 * hs_dim])
        o = jax.nn.sigmoid(gates[:, 3 * hs_dim:])
        c = f * c + i * g
        h = o * jnp.tanh(c)
        return (h, c), h

    h0 = jnp.zeros((B, hs_dim), jnp.float32)
    c0 = jnp.zeros((B, hs_dim), jnp.float32)
    _, hs = jax.lax.scan(step, (h0, c0), (feats, bvp_e))
    out = hs.reshape(T * B, hs_dim) @ params['fc_w'] + params['fc_b']
    return out.reshape(T, B, 1).transpose(1, 0, 2)


if __name__ == "__main__":
    key = jax.random.PRNGKey(0)
    kx, kb, kp = jax.random.split(key, 3)
    B, T, C, H, W = 2, 8, 3, 16, 16
    x = jax.random.normal(kx, (B, T, C, H, W), jnp.float32)
    bvp = jax.random.normal(kb, (B, T), jnp.float32)
    params = init_params(kp, hidden=32, bvp_embed=32)

    fwd = jax.jit(forward, static_argnames=("mm_dtype", "frames_per_block"))

    # f32 path: strict check against the pure-JAX reference.
    out = jax.block_until_ready(fwd(params, x, bvp))
    assert out.shape == (B, T, 1), out.shape
    ref = ref_forward(params, x, bvp)
    err = float(jnp.max(jnp.abs(out - ref)))
    assert jnp.allclose(out, ref, rtol=1e-4, atol=1e-4), err

    # bf16 matmul path (v6e/v7x): bf16 weights + patch stream, f32 accumulation
    # and f32 elementwise/gate math (v5e-safe).  Loose tolerance.
    out_bf16 = jax.block_until_ready(fwd(params, x, bvp, mm_dtype=jnp.bfloat16))
    assert out_bf16.shape == (B, T, 1)
    assert bool(jnp.all(jnp.isfinite(out_bf16)))
    err_bf16 = float(jnp.max(jnp.abs(out_bf16 - ref)))
    assert jnp.allclose(out_bf16, ref, rtol=1e-1, atol=1e-1), err_bf16

    print("KERNEL_OK")
</pallas_src>

<mosaic_0001>
module attributes {stable_mosaic.version = 11 : i64} {
  func.func @_cnn_xgates_kernel(%arg0: i32, %arg1: memref<8x256x27xf32, #tpu.memory_space<vmem>>, %arg2: memref<8x1xf32, #tpu.memory_space<vmem>>, %arg3: memref<27x8xf32, #tpu.memory_space<vmem>>, %arg4: memref<1x8xf32, #tpu.memory_space<vmem>>, %arg5: memref<8x512xf32, #tpu.memory_space<vmem>>, %arg6: memref<1x512xf32, #tpu.memory_space<vmem>>, %arg7: memref<1x32xf32, #tpu.memory_space<vmem>>, %arg8: memref<1x32xf32, #tpu.memory_space<vmem>>, %arg9: memref<512x128xf32, #tpu.memory_space<vmem>>, %arg10: memref<32x128xf32, #tpu.memory_space<vmem>>, %arg11: memref<1x128xf32, #tpu.memory_space<vmem>>, %arg12: memref<8x128xf32, #tpu.memory_space<vmem>>) attributes {dimension_semantics = [#tpu.dimension_semantics<parallel>], iteration_bounds = array<i64: 2>, scalar_prefetch = 0 : i64, scratch_operands = 0 : i64, tpu.core_type = #tpu.core_type<tc>, window_params = [{transform_indices = @transform_0, window_bounds = array<i64: 8, 256, 27>}, {transform_indices = @transform_1, window_bounds = array<i64: 8, 1>}, {pipeline_mode = #tpu.pipeline_mode<synchronous>, transform_indices = @transform_2, window_bounds = array<i64: 27, 8>}, {pipeline_mode = #tpu.pipeline_mode<synchronous>, transform_indices = @transform_3, window_bounds = array<i64: 1, 8>}, {pipeline_mode = #tpu.pipeline_mode<synchronous>, transform_indices = @transform_4, window_bounds = array<i64: 8, 512>}, {pipeline_mode = #tpu.pipeline_mode<synchronous>, transform_indices = @transform_5, window_bounds = array<i64: 1, 512>}, {pipeline_mode = #tpu.pipeline_mode<synchronous>, transform_indices = @transform_6, window_bounds = array<i64: 1, 32>}, {pipeline_mode = #tpu.pipeline_mode<synchronous>, transform_indices = @transform_7, window_bounds = array<i64: 1, 32>}, {pipeline_mode = #tpu.pipeline_mode<synchronous>, transform_indices = @transform_8, window_bounds = array<i64: 512, 128>}, {pipeline_mode = #tpu.pipeline_mode<synchronous>, transform_indices = @transform_9, window_bounds = array<i64: 32, 128>}, {pipeline_mode = #tpu.pipeline_mode<synchronous>, transform_indices = @transform_10, window_bounds = array<i64: 1, 128>}, {transform_indices = @transform_11, window_bounds = array<i64: 8, 128>}]} {
    %c0 = arith.constant 0 : index
    %c0_0 = arith.constant 0 : index
    %c0_1 = arith.constant 0 : index
    %0 = vector.load %arg1[%c0, %c0_0, %c0_1] : memref<8x256x27xf32, #tpu.memory_space<vmem>>, vector<8x256x27xf32>
    %1 = vector.shape_cast %0 : vector<8x256x27xf32> to vector<2048x27xf32>
    %c0_2 = arith.constant 0 : index
    %c0_3 = arith.constant 0 : index
    %2 = vector.load %arg3[%c0_2, %c0_3] : memref<27x8xf32, #tpu.memory_space<vmem>>, vector<27x8xf32>
    %cst = arith.constant dense<0.000000e+00> : vector<2048x8xf32>
    %3 = tpu.matmul %1, %2, %cst {dimension_numbers = #tpu.dot_dimension_numbers<[1], [0], [0], [1], [0, 0, 1, 1], [], []>} : vector<2048x27xf32>, vector<27x8xf32>, vector<2048x8xf32> -> vector<2048x8xf32>
    %c0_4 = arith.constant 0 : index
    %c0_5 = arith.constant 0 : index
    %4 = vector.load %arg4[%c0_4, %c0_5] : memref<1x8xf32, #tpu.memory_space<vmem>>, vector<1x8xf32>
    %5 = vector.broadcast %4 : vector<1x8xf32> to vector<2048x8xf32>
    %6 = arith.addf %3, %5 : vector<2048x8xf32>
    %cst_6 = arith.constant 0.000000e+00 : f32
    %7 = vector.broadcast %cst_6 : f32 to vector<2048x8xf32>
    %8 = arith.maximumf %6, %7 : vector<2048x8xf32>
    %9 = vector.shape_cast %8 : vector<2048x8xf32> to vector<8x256x8xf32>
    %cst_7 = arith.constant dense<0.000000e+00> : vector<8x8xf32>
    %10 = vector.multi_reduction <add>, %9, %cst_7 [1] : vector<8x256x8xf32> to vector<8x8xf32>
    %cst_8 = arith.constant 2.560000e+02 : f32
    %11 = vector.broadcast %cst_8 : f32 to vector<8x8xf32>
    %12 = arith.divf %10, %11 : vector<8x8xf32>
    %c0_9 = arith.constant 0 : index
    %c0_10 = arith.constant 0 : index
    %13 = vector.load %arg5[%c0_9, %c0_10] : memref<8x512xf32, #tpu.memory_space<vmem>>, vector<8x512xf32>
    %cst_11 = arith.constant dense<0.000000e+00> : vector<8x512xf32>
    %14 = tpu.matmul %12, %13, %cst_11 {dimension_numbers = #tpu.dot_dimension_numbers<[1], [0], [0], [1], [0, 0, 1, 1], [], []>} : vector<8x8xf32>, vector<8x512xf32>, vector<8x512xf32> -> vector<8x512xf32>
    %c0_12 = arith.constant 0 : index
    %c0_13 = arith.constant 0 : index
    %15 = vector.load %arg6[%c0_12, %c0_13] : memref<1x512xf32, #tpu.memory_space<vmem>>, vector<1x512xf32>
    %16 = vector.broadcast %15 : vector<1x512xf32> to vector<8x512xf32>
    %17 = arith.addf %14, %16 : vector<8x512xf32>
    %cst_14 = arith.constant 0.000000e+00 : f32
    %18 = vector.broadcast %cst_14 : f32 to vector<8x512xf32>
    %19 = arith.maximumf %17, %18 : vector<8x512xf32>
    %c0_15 = arith.constant 0 : index
    %c0_16 = arith.constant 0 : index
    %20 = vector.load %arg2[%c0_15, %c0_16] : memref<8x1xf32, #tpu.memory_space<vmem>>, vector<8x1xf32>
    %c0_17 = arith.constant 0 : index
    %c0_18 = arith.constant 0 : index
    %21 = vector.load %arg7[%c0_17, %c0_18] : memref<1x32xf32, #tpu.memory_space<vmem>>, vector<1x32xf32>
    %22 = vector.broadcast %20 : vector<8x1xf32> to vector<8x32xf32>
    %23 = vector.broadcast %21 : vector<1x32xf32> to vector<8x32xf32>
    %24 = arith.mulf %22, %23 : vector<8x32xf32>
    %c0_19 = arith.constant 0 : index
    %c0_20 = arith.constant 0 : index
    %25 = vector.load %arg8[%c0_19, %c0_20] : memref<1x32xf32, #tpu.memory_space<vmem>>, vector<1x32xf32>
    %26 = vector.broadcast %25 : vector<1x32xf32> to vector<8x32xf32>
    %27 = arith.addf %24, %26 : vector<8x32xf32>
    %cst_21 = arith.constant 0.000000e+00 : f32
    %28 = vector.broadcast %cst_21 : f32 to vector<8x32xf32>
    %29 = arith.maximumf %27, %28 : vector<8x32xf32>
    %c0_22 = arith.constant 0 : index
    %c0_23 = arith.constant 0 : index
    %30 = vector.load %arg9[%c0_22, %c0_23] : memref<512x128xf32, #tpu.memory_space<vmem>>, vector<512x128xf32>
    %cst_24 = arith.constant dense<0.000000e+00> : vector<8x128xf32>
    %31 = tpu.matmul %19, %30, %cst_24 {dimension_numbers = #tpu.dot_dimension_numbers<[1], [0], [0], [1], [0, 0, 1, 1], [], []>} : vector<8x512xf32>, vector<512x128xf32>, vector<8x128xf32> -> vector<8x128xf32>
    %c0_25 = arith.constant 0 : index
    %c0_26 = arith.constant 0 : index
    %32 = vector.load %arg10[%c0_25, %c0_26] : memref<32x128xf32, #tpu.memory_space<vmem>>, vector<32x128xf32>
    %cst_27 = arith.constant dense<0.000000e+00> : vector<8x128xf32>
    %33 = tpu.matmul %29, %32, %cst_27 {dimension_numbers = #tpu.dot_dimension_numbers<[1], [0], [0], [1], [0, 0, 1, 1], [], []>} : vector<8x32xf32>, vector<32x128xf32>, vector<8x128xf32> -> vector<8x128xf32>
    %34 = arith.addf %31, %33 : vector<8x128xf32>
    %c0_28 = arith.constant 0 : index
    %c0_29 = arith.constant 0 : index
    %35 = vector.load %arg11[%c0_28, %c0_29] : memref<1x128xf32, #tpu.memory_space<vmem>>, vector<1x128xf32>
    %36 = vector.broadcast %35 : vector<1x128xf32> to vector<8x128xf32>
    %37 = arith.addf %34, %36 : vector<8x128xf32>
    %c0_30 = arith.constant 0 : index
    %c0_31 = arith.constant 0 : index
    %38 = vector.load %arg12[%c0_30, %c0_31] : memref<8x128xf32, #tpu.memory_space<vmem>>, vector<8x128xf32>
    tpu.vector_store %arg12[%c0_30, %c0_31], %37 {strides = array<i32>} : memref<8x128xf32, #tpu.memory_space<vmem>>, vector<8x128xf32>,
    return
  }
  func.func @transform_0(%arg0: i32) -> (i32, i32, i32) {
    %c0_i32 = arith.constant 0 : i32
    %c0_i32_0 = arith.constant 0 : i32
    %c0_i32_1 = arith.constant 0 : i32
    return %arg0, %c0_i32, %c0_i32_0 : i32, i32, i32
  }
  func.func @transform_1(%arg0: i32) -> (i32, i32) {
    %c0_i32 = arith.constant 0 : i32
    %c0_i32_0 = arith.constant 0 : i32
    return %arg0, %c0_i32 : i32, i32
  }
  func.func @transform_2(%arg0: i32) -> (i32, i32) {
    %c0_i32 = arith.constant 0 : i32
    %c0_i32_0 = arith.constant 0 : i32
    %c0_i32_1 = arith.constant 0 : i32
    return %c0_i32, %c0_i32_0 : i32, i32
  }
  func.func @transform_3(%arg0: i32) -> (i32, i32) {
    %c0_i32 = arith.constant 0 : i32
    %c0_i32_0 = arith.constant 0 : i32
    %c0_i32_1 = arith.constant 0 : i32
    return %c0_i32, %c0_i32_0 : i32, i32
  }
  func.func @transform_4(%arg0: i32) -> (i32, i32) {
    %c0_i32 = arith.constant 0 : i32
    %c0_i32_0 = arith.constant 0 : i32
    %c0_i32_1 = arith.constant 0 : i32
    return %c0_i32, %c0_i32_0 : i32, i32
  }
  func.func @transform_5(%arg0: i32) -> (i32, i32) {
    %c0_i32 = arith.constant 0 : i32
    %c0_i32_0 = arith.constant 0 : i32
    %c0_i32_1 = arith.constant 0 : i32
    return %c0_i32, %c0_i32_0 : i32, i32
  }
  func.func @transform_6(%arg0: i32) -> (i32, i32) {
    %c0_i32 = arith.constant 0 : i32
    %c0_i32_0 = arith.constant 0 : i32
    %c0_i32_1 = arith.constant 0 : i32
    return %c0_i32, %c0_i32_0 : i32, i32
  }
  func.func @transform_7(%arg0: i32) -> (i32, i32) {
    %c0_i32 = arith.constant 0 : i32
    %c0_i32_0 = arith.constant 0 : i32
    %c0_i32_1 = arith.constant 0 : i32
    return %c0_i32, %c0_i32_0 : i32, i32
  }
  func.func @transform_8(%arg0: i32) -> (i32, i32) {
    %c0_i32 = arith.constant 0 : i32
    %c0_i32_0 = arith.constant 0 : i32
    %c0_i32_1 = arith.constant 0 : i32
    return %c0_i32, %c0_i32_0 : i32, i32
  }
  func.func @transform_9(%arg0: i32) -> (i32, i32) {
    %c0_i32 = arith.constant 0 : i32
    %c0_i32_0 = arith.constant 0 : i32
    %c0_i32_1 = arith.constant 0 : i32
    return %c0_i32, %c0_i32_0 : i32, i32
  }
  func.func @transform_10(%arg0: i32) -> (i32, i32) {
    %c0_i32 = arith.constant 0 : i32
    %c0_i32_0 = arith.constant 0 : i32
    %c0_i32_1 = arith.constant 0 : i32
    return %c0_i32, %c0_i32_0 : i32, i32
  }
  func.func @transform_11(%arg0: i32) -> (i32, i32) {
    %c0_i32 = arith.constant 0 : i32
    %c0_i32_0 = arith.constant 0 : i32
    return %arg0, %c0_i32 : i32, i32
  }
}

module attributes {stable_mosaic.version = 11 : i64} {
  func.func @_lstm_fc_kernel(%arg0: i32, %arg1: memref<1x2x128xf32, #tpu.memory_space<vmem>>, %arg2: memref<32x128xf32, #tpu.memory_space<vmem>>, %arg3: memref<1x1x32xf32, #tpu.memory_space<vmem>>, %arg4: memref<1x1x1xf32, #tpu.memory_space<vmem>>, %arg5: memref<8x2x1xf32, #tpu.memory_space<vmem>>, %arg6: memref<2x32xf32, #tpu.memory_space<vmem>>, %arg7: memref<2x32xf32, #tpu.memory_space<vmem>>, %arg8: memref<8x2x32xf32, #tpu.memory_space<vmem>>) attributes {dimension_semantics = [#tpu.dimension_semantics<arbitrary>], iteration_bounds = array<i64: 8>, scalar_prefetch = 0 : i64, scratch_operands = 3 : i64, tpu.core_type = #tpu.core_type<tc>, window_params = [{transform_indices = @transform_0, window_bounds = array<i64: 1, 2, 128>}, {pipeline_mode = #tpu.pipeline_mode<synchronous>, transform_indices = @transform_1, window_bounds = array<i64: 32, 128>}, {pipeline_mode = #tpu.pipeline_mode<synchronous>, transform_indices = @transform_2, window_bounds = array<i64: 1, 1, 32>}, {pipeline_mode = #tpu.pipeline_mode<synchronous>, transform_indices = @transform_3, window_bounds = array<i64: 1, 1, 1>}, {pipeline_mode = #tpu.pipeline_mode<synchronous>, transform_indices = @transform_4, window_bounds = array<i64: 8, 2, 1>}]} {
    %c0_i32 = arith.constant 0 : i32
    %0 = arith.cmpi eq, %arg0, %c0_i32 : i32
    %1 = arith.extui %0 : i1 to i32
    %c0_i32_0 = arith.constant 0 : i32
    %2 = arith.cmpi ne, %1, %c0_i32_0 : i32
    scf.if %2 {
      %cst_19 = arith.constant 0.000000e+00 : f32
      %44 = vector.broadcast %cst_19 : f32 to vector<2x32xf32>
      %c0_20 = arith.constant 0 : index
      %c0_21 = arith.constant 0 : index
      %45 = vector.load %arg6[%c0_20, %c0_21] : memref<2x32xf32, #tpu.memory_space<vmem>>, vector<2x32xf32>
      tpu.vector_store %arg6[%c0_20, %c0_21], %44 {strides = array<i32>} : memref<2x32xf32, #tpu.memory_space<vmem>>, vector<2x32xf32>,
      %cst_22 = arith.constant 0.000000e+00 : f32
      %46 = vector.broadcast %cst_22 : f32 to vector<2x32xf32>
      %c0_23 = arith.constant 0 : index
      %c0_24 = arith.constant 0 : index
      %47 = vector.load %arg7[%c0_23, %c0_24] : memref<2x32xf32, #tpu.memory_space<vmem>>, vector<2x32xf32>
      tpu.vector_store %arg7[%c0_23, %c0_24], %46 {strides = array<i32>} : memref<2x32xf32, #tpu.memory_space<vmem>>, vector<2x32xf32>,
    } else {
    }
    %c0 = arith.constant 0 : index
    %c0_1 = arith.constant 0 : index
    %c0_2 = arith.constant 0 : index
    %3 = vector.load %arg1[%c0, %c0_1, %c0_2] : memref<1x2x128xf32, #tpu.memory_space<vmem>>, vector<1x2x128xf32>
    %4 = vector.shape_cast %3 : vector<1x2x128xf32> to vector<2x128xf32>
    %c0_3 = arith.constant 0 : index
    %c0_4 = arith.constant 0 : index
    %5 = vector.load %arg6[%c0_3, %c0_4] : memref<2x32xf32, #tpu.memory_space<vmem>>, vector<2x32xf32>
    %c0_5 = arith.constant 0 : index
    %c0_6 = arith.constant 0 : index
    %6 = vector.load %arg2[%c0_5, %c0_6] : memref<32x128xf32, #tpu.memory_space<vmem>>, vector<32x128xf32>
    %cst = arith.constant dense<0.000000e+00> : vector<2x128xf32>
    %7 = tpu.matmul %5, %6, %cst {dimension_numbers = #tpu.dot_dimension_numbers<[1], [0], [0], [1], [0, 0, 1, 1], [], []>} : vector<2x32xf32>, vector<32x128xf32>, vector<2x128xf32> -> vector<2x128xf32>
    %8 = arith.addf %4, %7 : vector<2x128xf32>
    %9 = vector.extract_strided_slice %8 {offsets = [0, 0], sizes = [2, 32], strides = [1, 1]} : vector<2x128xf32> to vector<2x32xf32>
    %10 = arith.negf %9 : vector<2x32xf32>
    %11 = math.exp %10 : vector<2x32xf32>
    %cst_7 = arith.constant 1.000000e+00 : f32
    %12 = vector.broadcast %cst_7 : f32 to vector<2x32xf32>
    %13 = arith.addf %12, %11 : vector<2x32xf32>
    %14 = arith.divf %12, %13 : vector<2x32xf32>
    %15 = vector.extract_strided_slice %8 {offsets = [0, 32], sizes = [2, 32], strides = [1, 1]} : vector<2x128xf32> to vector<2x32xf32>
    %16 = arith.negf %15 : vector<2x32xf32>
    %17 = math.exp %16 : vector<2x32xf32>
    %cst_8 = arith.constant 1.000000e+00 : f32
    %18 = vector.broadcast %cst_8 : f32 to vector<2x32xf32>
    %19 = arith.addf %18, %17 : vector<2x32xf32>
    %20 = arith.divf %18, %19 : vector<2x32xf32>
    %21 = vector.extract_strided_slice %8 {offsets = [0, 64], sizes = [2, 32], strides = [1, 1]} : vector<2x128xf32> to vector<2x32xf32>
    %22 = math.tanh %21 : vector<2x32xf32>
    %23 = vector.extract_strided_slice %8 {offsets = [0, 96], sizes = [2, 32], strides = [1, 1]} : vector<2x128xf32> to vector<2x32xf32>
    %24 = arith.negf %23 : vector<2x32xf32>
    %25 = math.exp %24 : vector<2x32xf32>
    %cst_9 = arith.constant 1.000000e+00 : f32
    %26 = vector.broadcast %cst_9 : f32 to vector<2x32xf32>
    %27 = arith.addf %26, %25 : vector<2x32xf32>
    %28 = arith.divf %26, %27 : vector<2x32xf32>
    %c0_10 = arith.constant 0 : index
    %c0_11 = arith.constant 0 : index
    %29 = vector.load %arg7[%c0_10, %c0_11] : memref<2x32xf32, #tpu.memory_space<vmem>>, vector<2x32xf32>
    %30 = arith.mulf %20, %29 : vector<2x32xf32>
    %31 = arith.mulf %14, %22 : vector<2x32xf32>
    %32 = arith.addf %30, %31 : vector<2x32xf32>
    %33 = math.tanh %32 : vector<2x32xf32>
    %34 = arith.mulf %28, %33 : vector<2x32xf32>
    %c0_12 = arith.constant 0 : index
    %c0_13 = arith.constant 0 : index
    %35 = vector.load %arg7[%c0_12, %c0_13] : memref<2x32xf32, #tpu.memory_space<vmem>>, vector<2x32xf32>
    tpu.vector_store %arg7[%c0_12, %c0_13], %32 {strides = array<i32>} : memref<2x32xf32, #tpu.memory_space<vmem>>, vector<2x32xf32>,
    %c0_14 = arith.constant 0 : index
    %c0_15 = arith.constant 0 : index
    %36 = vector.load %arg6[%c0_14, %c0_15] : memref<2x32xf32, #tpu.memory_space<vmem>>, vector<2x32xf32>
    tpu.vector_store %arg6[%c0_14, %c0_15], %34 {strides = array<i32>} : memref<2x32xf32, #tpu.memory_space<vmem>>, vector<2x32xf32>,
    %37 = arith.index_cast %arg0 : i32 to index
    %c0_16 = arith.constant 0 : index
    %c0_17 = arith.constant 0 : index
    %38 = vector.load %arg8[%37, %c0_16, %c0_17] : memref<8x2x32xf32, #tpu.memory_space<vmem>>, vector<1x2x32xf32>
    %39 = vector.shape_cast %38 : vector<1x2x32xf32> to vector<2x32xf32>
    %40 = vector.shape_cast %34 : vector<2x32xf32> to vector<1x2x32xf32>
    tpu.vector_store %arg8[%37, %c0_16, %c0_17], %40 {strides = array<i32>} : memref<8x2x32xf32, #tpu.memory_space<vmem>>, vector<1x2x32xf32>,
    %c7_i32 = arith.constant 7 : i32
    %41 = arith.cmpi eq, %arg0, %c7_i32 : i32
    %42 = arith.extui %41 : i1 to i32
    %c0_i32_18 = arith.constant 0 : i32
    %43 = arith.cmpi ne, %42, %c0_i32_18 : i32
    scf.if %43 {
      %c0_19 = arith.constant 0 : index
      %c0_20 = arith.constant 0 : index
      %c0_21 = arith.constant 0 : index
      %44 = vector.load %arg8[%c0_19, %c0_20, %c0_21] : memref<8x2x32xf32, #tpu.memory_space<vmem>>, vector<8x2x32xf32>
      %c0_22 = arith.constant 0 : index
      %c0_23 = arith.constant 0 : index
      %c0_24 = arith.constant 0 : index
      %45 = vector.load %arg3[%c0_22, %c0_23, %c0_24] : memref<1x1x32xf32, #tpu.memory_space<vmem>>, vector<1x1x32xf32>
      %46 = vector.broadcast %45 : vector<1x1x32xf32> to vector<8x2x32xf32>
      %47 = arith.mulf %44, %46 : vector<8x2x32xf32>
      %cst_25 = arith.constant dense<0.000000e+00> : vector<8x2xf32>
      %48 = vector.multi_reduction <add>, %47, %cst_25 [2] : vector<8x2x32xf32> to vector<8x2xf32>
      %49 = vector.shape_cast %48 : vector<8x2xf32> to vector<8x2x1xf32>
      %c0_26 = arith.constant 0 : index
      %c0_27 = arith.constant 0 : index
      %c0_28 = arith.constant 0 : index
      %50 = vector.load %arg4[%c0_26, %c0_27, %c0_28] : memref<1x1x1xf32, #tpu.memory_space<vmem>>, vector<1x1x1xf32>
      %51 = vector.broadcast %50 : vector<1x1x1xf32> to vector<8x2x1xf32>
      %52 = arith.addf %49, %51 : vector<8x2x1xf32>
      %c0_29 = arith.constant 0 : index
      %c0_30 = arith.constant 0 : index
      %c0_31 = arith.constant 0 : index
      %53 = vector.load %arg5[%c0_29, %c0_30, %c0_31] : memref<8x2x1xf32, #tpu.memory_space<vmem>>, vector<8x2x1xf32>
      tpu.vector_store %arg5[%c0_29, %c0_30, %c0_31], %52 {strides = array<i32>} : memref<8x2x1xf32, #tpu.memory_space<vmem>>, vector<8x2x1xf32>,
    } else {
    }
    return
  }
  func.func @transform_0(%arg0: i32) -> (i32, i32, i32) {
    %c0_i32 = arith.constant 0 : i32
    %c0_i32_0 = arith.constant 0 : i32
    %c0_i32_1 = arith.constant 0 : i32
    return %arg0, %c0_i32, %c0_i32_0 : i32, i32, i32
  }
  func.func @transform_1(%arg0: i32) -> (i32, i32) {
    %c0_i32 = arith.constant 0 : i32
    %c0_i32_0 = arith.constant 0 : i32
    %c0_i32_1 = arith.constant 0 : i32
    return %c0_i32, %c0_i32_0 : i32, i32
  }
  func.func @transform_2(%arg0: i32) -> (i32, i32, i32) {
    %c0_i32 = arith.constant 0 : i32
    %c0_i32_0 = arith.constant 0 : i32
    %c0_i32_1 = arith.constant 0 : i32
    %c0_i32_2 = arith.constant 0 : i32
    return %c0_i32, %c0_i32_0, %c0_i32_1 : i32, i32, i32
  }
  func.func @transform_3(%arg0: i32) -> (i32, i32, i32) {
    %c0_i32 = arith.constant 0 : i32
    %c0_i32_0 = arith.constant 0 : i32
    %c0_i32_1 = arith.constant 0 : i32
    %c0_i32_2 = arith.constant 0 : i32
    return %c0_i32, %c0_i32_0, %c0_i32_1 : i32, i32, i32
  }
  func.func @transform_4(%arg0: i32) -> (i32, i32, i32) {
    %c0_i32 = arith.constant 0 : i32
    %c0_i32_0 = arith.constant 0 : i32
    %c0_i32_1 = arith.constant 0 : i32
    %c0_i32_2 = arith.constant 0 : i32
    return %c0_i32, %c0_i32_0, %c0_i32_1 : i32, i32, i32
  }
}

</mosaic_0001>

<llo_original>
// kernel: forward.3
$region0: #{forward.3}
  #allocation0 [shape = 'u32[]', space=smem, size = 0x4, offset = 0x4, fixed_abs, tag = 'smem constant byte address 0x4 - core index']
  #allocation1 [shape = 'u32[72,128]{1,0:T(1,128)}', space=vmem, size = 0x9000, scoped, tag = 'internal scratch']
  #allocation2 [shape = 'f32[2,32]{1,0:T(2,128)}', space=vmem, size = 0x400, scoped, tag = 'scratch operand']
  #allocation3 [shape = 'f32[2,32]{1,0:T(2,128)}', space=vmem, size = 0x400, scoped, tag = 'scratch operand']
  #allocation4 [shape = 'f32[8,2,32]{2,1,0:T(2,128)}', space=vmem, size = 0x2000, scoped, tag = 'scratch operand']
  #allocation5 [shape = 'f32[1,1,1]{2,1,0:T(1,128)S(1)}', space=vmem, size = 0x200, scoped, tag = 'scoped memory for forward.3']
  %s0 = inlined_call_operand.vmem [shape: f32[8,2,128], index: 0, kind: input, shape index: {}]
  %s1 = inlined_call_operand.vmem [shape: f32[32,128], index: 1, kind: input, shape index: {}]
  %s2 = inlined_call_operand.vmem [shape: f32[1,1,32], index: 2, kind: input, shape index: {}]
  %s3 = inlined_call_operand.<no memory space> [shape: f32[1,1,1], index: 3, kind: input, shape index: {}]
  %s4 = inlined_call_operand.vmem [shape: f32[8,2,1], index: 4, kind: output, shape index: {}]
  %s5 = sld [smem:[#allocation0]]
  $region57: #{forward.3} parent=0
    _
  %s7 = ssub.s32 1, %s5
  %s8 = scalar_select 0, %s7, %s5
  %v9 = vstv %s3
  %10 = vst [vmem:[#allocation5] sm:$0x1] %v9
  loop: start=0, step=1, limit=10
  $region2: #{forward.3} parent=0 // loop_pre_header
    _
  $region3: #{forward.3} parent=0 // loop_header
    %s12 = sphi 0, %s16
    %p13 = scmp.ge.s32.totalorder %s12, 10
    %s22 = sphi 0, %s24
    %s25 = sphi 0, %s22
    %s26 = sphi 0, %s25
    %s42 = sphi 0, %s26
    %s46 = sphi 0, %s46
    %s48 = sphi 0, %s46
    %s49 = sphi 0, %s48
    %s63 = sphi 0, %s49
    %s67 = sphi 0, %s67
    %s69 = sphi 0, %s67
    %s70 = sphi 0, %s69
    %s84 = sphi 0, %s70
    %s88 = sphi 0, %s88
    %s90 = sphi 0, %s88
    %s91 = sphi 0, %s90
    %s105 = sphi 0, %s91
    %s109 = sphi 0, %s109
    %s111 = sphi 0, %s109
    %s112 = sphi 0, %s111
    %s126 = sphi 0, %s112
  $region4: #{forward.3} parent=0 // loop_header_branch
    %15 = sbr.rel (%p13) target = $region8
  $region5: #{forward.3} parent=0 // loop_body
    %s17 = ssub.s32 %s12, 1
    %s18 = ssub.s32 %s12, 2
    %s19 = sadd.s32 %s12, 1
    %s20 = ssub.s32 %s12, %s19
    %p21 = scmp.eq.s32.totalorder %s20, 0
    %s23 = sadd.s32 %s22, 1
    %s24 = scalar_select %p21, %s22, %s23
    %p27 = pneg %p21
    %p28 = scmp.eq.s32.totalorder %s12, 7
    %p29 = por %p27, %p28
    %p30 = scmp.ne.s32.totalorder %s22, %s25
    %p31 = scmp.eq.s32.totalorder %s12, 0
    %p32 = por %p30, %p31
    %p33 = scmp.ne.s32.totalorder %s22, %s25
    %p34 = scmp.eq.s32.totalorder %s17, 7
    %p35 = por %p33, %p34
    %p36 = scmp.ne.s32.totalorder %s25, %s26
    %p37 = scmp.eq.s32.totalorder %s17, 0
    %p38 = por %p36, %p37
    %p39 = scmp.ne.s32.totalorder %s25, %s26
    %p40 = scmp.eq.s32.totalorder %s18, 7
    %p41 = por %p39, %p40
    %p43 = scmp.ne.s32.totalorder %s26, %s42
    %p44 = scmp.eq.s32.totalorder %s18, 0
    %p45 = por %p43, %p44
    %s47 = sadd.s32 %s46, 1
    %p50 = scmp.eq.s32.totalorder %s12, 7
    %p51 = scmp.ne.s32.totalorder %s46, %s48
    %p52 = scmp.eq.s32.totalorder %s12, 0
    %p53 = por %p51, %p52
    %p54 = scmp.ne.s32.totalorder %s46, %s48
    %p55 = scmp.eq.s32.totalorder %s17, 7
    %p56 = por %p54, %p55
    %p57 = scmp.ne.s32.totalorder %s48, %s49
    %p58 = scmp.eq.s32.totalorder %s17, 0
    %p59 = por %p57, %p58
    %p60 = scmp.ne.s32.totalorder %s48, %s49
    %p61 = scmp.eq.s32.totalorder %s18, 7
    %p62 = por %p60, %p61
    %p64 = scmp.ne.s32.totalorder %s49, %s63
    %p65 = scmp.eq.s32.totalorder %s18, 0
    %p66 = por %p64, %p65
    %s68 = sadd.s32 %s67, 1
    %p71 = scmp.eq.s32.totalorder %s12, 7
    %p72 = scmp.ne.s32.totalorder %s67, %s69
    %p73 = scmp.eq.s32.totalorder %s12, 0
    %p74 = por %p72, %p73
    %p75 = scmp.ne.s32.totalorder %s67, %s69
    %p76 = scmp.eq.s32.totalorder %s17, 7
    %p77 = por %p75, %p76
    %p78 = scmp.ne.s32.totalorder %s69, %s70
    %p79 = scmp.eq.s32.totalorder %s17, 0
    %p80 = por %p78, %p79
    %p81 = scmp.ne.s32.totalorder %s69, %s70
    %p82 = scmp.eq.s32.totalorder %s18, 7
    %p83 = por %p81, %p82
    %p85 = scmp.ne.s32.totalorder %s70, %s84
    %p86 = scmp.eq.s32.totalorder %s18, 0
    %p87 = por %p85, %p86
    %s89 = sadd.s32 %s88, 1
    %p92 = scmp.eq.s32.totalorder %s12, 7
    %p93 = scmp.ne.s32.totalorder %s88, %s90
    %p94 = scmp.eq.s32.totalorder %s12, 0
    %p95 = por %p93, %p94
    %p96 = scmp.ne.s32.totalorder %s88, %s90
    %p97 = scmp.eq.s32.totalorder %s17, 7
    %p98 = por %p96, %p97
    %p99 = scmp.ne.s32.totalorder %s90, %s91
    %p100 = scmp.eq.s32.totalorder %s17, 0
    %p101 = por %p99, %p100
    %p102 = scmp.ne.s32.totalorder %s90, %s91
    %p103 = scmp.eq.s32.totalorder %s18, 7
    %p104 = por %p102, %p103
    %p106 = scmp.ne.s32.totalorder %s91, %s105
    %p107 = scmp.eq.s32.totalorder %s18, 0
    %p108 = por %p106, %p107
    %s110 = sadd.s32 %s109, 1
    %p113 = scmp.eq.s32.totalorder %s12, 7
    %p114 = scmp.ne.s32.totalorder %s109, %s111
    %p115 = scmp.eq.s32.totalorder %s12, 0
    %p116 = por %p114, %p115
    %p117 = scmp.ne.s32.totalorder %s109, %s111
    %p118 = scmp.eq.s32.totalorder %s17, 7
    %p119 = por %p117, %p118
    %p120 = scmp.ne.s32.totalorder %s111, %s112
    %p121 = scmp.eq.s32.totalorder %s17, 0
    %p122 = por %p120, %p121
    %p123 = scmp.ne.s32.totalorder %s111, %s112
    %p124 = scmp.eq.s32.totalorder %s18, 7
    %p125 = por %p123, %p124
    %p127 = scmp.ne.s32.totalorder %s112, %s126
    %p128 = scmp.eq.s32.totalorder %s18, 0
    %p129 = por %p127, %p128
    %p130 = scmp.le.s32.totalorder 1, %s12
    %p131 = scmp.lt.s32.totalorder %s12, 9
    %p132 = pnand %p130, %p131
    %p133 = pneg %p132
    // Predicated region
    $region9: #{forward.3} parent=5 // pred_check
      _
    $region10: #{forward.3} parent=5 // pred_check_branch
      %135 = sbr.rel (%p132) target = $region12
    $region11: #{forward.3} parent=5 // pred_region
      %s136 = ssub.s32 %s12, 1
      // Predicated region
      $region13: #{forward.3} parent=11 // pred_check
        %p137 = pneg %p59
      $region14: #{forward.3} parent=11 // pred_check_branch
        %139 = sbr.rel (%p137) target = $region16
      $region15: #{forward.3} parent=11 // pred_region
        _
      $region16: #{forward.3} parent=11 // pred_fallthru
        _
      // Predicated region
      $region17: #{forward.3} parent=11 // pred_check
        %p140 = pneg %p80
      $region18: #{forward.3} parent=11 // pred_check_branch
        %142 = sbr.rel (%p140) target = $region20
      $region19: #{forward.3} parent=11 // pred_region
        _
      $region20: #{forward.3} parent=11 // pred_fallthru
        _
      // Predicated region
      $region21: #{forward.3} parent=11 // pred_check
        %p143 = pneg %p101
      $region22: #{forward.3} parent=11 // pred_check_branch
        %145 = sbr.rel (%p143) target = $region24
      $region23: #{forward.3} parent=11 // pred_region
        _
      $region24: #{forward.3} parent=11 // pred_fallthru
        _
    $region12: #{forward.3} parent=5 // pred_fallthru
      _
    %p146 = scmp.lt.s32.totalorder %s12, 8
    // Predicated region
    $region25: #{forward.3} parent=5 // pred_check
      %p147 = pneg %p146
    $region26: #{forward.3} parent=5 // pred_check_branch
      %149 = sbr.rel (%p147) target = $region28
    $region27: #{forward.3} parent=5 // pred_region
      // Predicated region
      $region29: #{forward.3} parent=27 // pred_check
        %p150 = pneg %p32
      $region30: #{forward.3} parent=27 // pred_check_branch
        %152 = sbr.rel (%p150) target = $region32
      $region31: #{forward.3} parent=27 // pred_region
        %p153 = scmp.lt.s32.totalorder %s12, 7
        %s154 = scalar_select %p153, %s12, 7
        %s155 = smul.addr %s154, 2
        %s156 = scalar_lea.vmem %s0, %s155
      $region32: #{forward.3} parent=27 // pred_fallthru
        _
    $region28: #{forward.3} parent=5 // pred_fallthru
      _
    %p157 = scmp.le.s32.totalorder 1, %s12
    %p158 = scmp.lt.s32.totalorder %s12, 9
    %p159 = pnand %p157, %p158
    %p160 = pneg %p159
    // Predicated region
    $region33: #{forward.3} parent=5 // pred_check
      _
    $region34: #{forward.3} parent=5 // pred_check_branch
      %162 = sbr.rel (%p159) target = $region36
    $region35: #{forward.3} parent=5 // pred_region
      %s163 = ssub.s32 %s12, 1
      %p164 = scmp.lt.s32.totalorder %s17, 7
      %s165 = scalar_select %p164, %s17, 7
      %s166 = smul.addr %s165, 2
      %s167 = scalar_lea.vmem %s0, %s166
      %p168 = pneg %p38
      %p169 = pneg %p35
      %p170 = pneg %p59
      %p171 = pneg %p56
      %p172 = pneg %p80
      %p173 = pneg %p77
      %p174 = pneg %p101
      %p175 = pneg %p98
      %p176 = pneg %p122
      %p177 = pneg %p119
      %p178 = scmp.lt.s32.totalorder %s17, 7
      %s179 = scalar_select %p178, %s17, 7
      %s180 = smul.addr %s179, 2
      %s181 = scalar_lea.vmem %s0, %s180
      %p182 = scmp.eq.s32.totalorder %s17, 0
      // Predicated region
      $region37: #{forward.3} parent=35 // pred_check
        %p183 = pneg %p182
      $region38: #{forward.3} parent=35 // pred_check_branch
        %185 = sbr.rel (%p183) target = $region40
      $region39: #{forward.3} parent=35 // pred_region
        %vm186 = vcmask 254976
        %187 = vst.msk [vmem:[#allocation2] sm:$0x3] %vm186, 0.0
        %188 = vst.msk [vmem:[#allocation3] sm:$0x3] %vm186, 0.0
      $region40: #{forward.3} parent=35 // pred_fallthru
        _
      %v189 = vld [vmem:[%s181] sm:$0x3]
      %v190 = vld [vmem:[#allocation2] sm:$0x3]
      %v191 = vld [vmem:[%s1] sm:$0xff]
      %v192 = vld [vmem:[%s1 + $0x8] sm:$0xff]
      %v193 = vld [vmem:[%s1 + $0x10] sm:$0xff]
      %v194 = vld [vmem:[%s1 + $0x18] sm:$0xff]
      %vm195 = vcmask 261120
      %v197 = vsel %vm195, %v190, 0
      %199 = vmatpush.msra.mxu0 0.0
      %200 = vmatpush.msra.mxu0 0.0
      %201 = vmatpush.msra.mxu0 0.0
      %202 = vmatpush.msra.mxu0 0.0
      %203 = vmatpush.msra.mxu0 0.0
      %204 = vmatpush.msra.mxu0 0.0
      %205 = vmatpush.msra.mxu0 0.0
      %206 = vmatpush.msra.mxu0 0.0
      %207 = vmatpush.msra.mxu0 0.0
      %208 = vmatpush.msra.mxu0 0.0
      %209 = vmatpush.msra.mxu0 0.0
      %210 = vmatpush.msra.mxu0 0.0
      %211 = vmatpush.msra.mxu0 %v194
      %212 = vmatpush.msra.mxu0 %v193
      %213 = vmatpush.msra.mxu0 %v192
      %214 = vmatpush.msra.mxu0 %v191
      %215 = vmatmul.f32.gmra.mxu0 %v197
      %v216 = vpop.f32.mrf.mxu0
      %v217 = vadd.f32 0.0, %v216
      %218 = vdwg.mxu0
      %v219 = vadd.f32 %v189, %v217
      %v220 = vxor.u32 %v219, 2147483648
      %v221 = vmul.f32 %v220, 1.442695
      %v222 = vpow.pop %v221
      %v223 = vadd.f32 %v222, 1.0
      %v224 = vrcp.pop %v223
      %v225 = vmul.f32 %v223, %v224
      %v226 = vsub.f32 1.0, %v225
      %v227 = vmul.f32 %v224, %v226
      %v228 = vadd.f32 %v224, %v227
      %vm229 = vweird.f32 %v223
      %vm230 = vweird.f32 %v224
      %vm231 = vmor %vm229, %vm230
      %v232 = vsel %vm231, %v224, %v228
      %v233 = vand.u32 2147483647, %v223
      %vm234 = vcmp.eq.f32.partialorder %v233, 8.507059e+37
      %v235 = vand.u32 %v223, 2147483648
      %v236 = vor.u32 1.1754944e-38, %v235
      %v237 = vsel %vm234, %v236, %v232
      %v238 = vmul.f32 1.0, %v237
      %v239 = vtanh.pop %v219
      %v240 = vld [vmem:[#allocation3] sm:$0x3]
      %242 = vrot.lane.b32.xlu0 %v240, 32
      %v243 = vpop.permute.xlu0 %242
      %v245 = vmul.f32 %v238, %v243
      %247 = vrot.lane.b32.xlu0 %v239, 64
      %v248 = vpop.permute.xlu0 %247
      %v250 = vmul.f32 %v238, %v248
      %252 = vrot.lane.b32.xlu0 %v250, 32
      %v253 = vpop.permute.xlu0 %252
      %v255 = vadd.f32 %v245, %v253
      %v256 = vtanh.pop %v255
      %258 = vrot.lane.b32.xlu0 %v256, 64
      %v259 = vpop.permute.xlu0 %258
      %v261 = vmul.f32 %v238, %v259
      %263 = vrot.lane.b32.xlu0 %v255, 96
      %v264 = vpop.permute.xlu0 %263
      %vm266 = vcmask 254976
      %267 = vst.msk [vmem:[#allocation3] sm:$0x3] %vm266, %v264
      %269 = vrot.lane.b32.xlu0 %v261, 32
      %v270 = vpop.permute.xlu0 %269
      %272 = vst.msk [vmem:[#allocation2] sm:$0x3] %vm266, %v270
      %s273 = smul.u32 %s17, 2
      %s274 = scalar_lea.vmem [#allocation4], %s273
      %275 = vst.msk [vmem:[%s274] sm:$0x3] %vm266, %v270
      %p276 = scmp.eq.s32.totalorder %s17, 7
      // Predicated region
      $region41: #{forward.3} parent=35 // pred_check
        %p277 = pneg %p276
      $region42: #{forward.3} parent=35 // pred_check_branch
        %279 = sbr.rel (%p277) target = $region44
      $region43: #{forward.3} parent=35 // pred_region
        %v280 = vld [vmem:[#allocation4] sm:$0x3]
        %v281 = vld [vmem:[#allocation4 + $0x2] sm:$0x3]
        %v282 = vld [vmem:[#allocation4 + $0x4] sm:$0x3]
        %v283 = vld [vmem:[#allocation4 + $0x6] sm:$0x3]
        %v284 = vld [vmem:[#allocation4 + $0x8] sm:$0x3]
        %v285 = vld [vmem:[#allocation4 + $0xa] sm:$0x3]
        %v286 = vld [vmem:[#allocation4 + $0xc] sm:$0x3]
        %v287 = vld [vmem:[#allocation4 + $0xe] sm:$0x3]
        %v288 = vld [vmem:[%s2] sm:$0x1]
        %v290 = vperm.slane %v288, 0
        %v292 = vmul.f32 %v280, %v290
        %v293 = vmul.f32 %v281, %v290
        %v294 = vmul.f32 %v282, %v290
        %v295 = vmul.f32 %v283, %v290
        %v296 = vmul.f32 %v284, %v290
        %v297 = vmul.f32 %v285, %v290
        %v298 = vmul.f32 %v286, %v290
        %v299 = vmul.f32 %v287, %v290
        %v300 = vsel %vm266, %v292, 0.0
        %301 = vadd.xlane.f32.xlu0 %v300
        %v302 = vpop.xlane.xlu0 %301
        %v303 = vsel %vm266, %v293, 0.0
        %304 = vadd.xlane.f32.xlu0 %v303
        %v305 = vpop.xlane.xlu0 %304
        %v306 = vsel %vm266, %v294, 0.0
        %307 = vadd.xlane.f32.xlu0 %v306
        %v308 = vpop.xlane.xlu0 %307
        %v309 = vsel %vm266, %v295, 0.0
        %310 = vadd.xlane.f32.xlu0 %v309
        %v311 = vpop.xlane.xlu0 %310
        %v312 = vsel %vm266, %v296, 0.0
        %313 = vadd.xlane.f32.xlu0 %v312
        %v314 = vpop.xlane.xlu0 %313
        %v315 = vsel %vm266, %v297, 0.0
        %316 = vadd.xlane.f32.xlu0 %v315
        %v317 = vpop.xlane.xlu0 %316
        %v318 = vsel %vm266, %v298, 0.0
        %319 = vadd.xlane.f32.xlu0 %v318
        %v320 = vpop.xlane.xlu0 %319
        %v321 = vsel %vm266, %v299, 0.0
        %322 = vadd.xlane.f32.xlu0 %v321
        %v323 = vpop.xlane.xlu0 %322
        %v324 = vld [vmem:[#allocation5] sm:$0x1]
        %v326 = vperm.slane %v324, 0
        %v328 = vadd.f32 %v302, %v326
        %v329 = vadd.f32 %v305, %v326
        %v330 = vadd.f32 %v308, %v326
        %v331 = vadd.f32 %v311, %v326
        %v332 = vadd.f32 %v314, %v326
        %v333 = vadd.f32 %v317, %v326
        %v334 = vadd.f32 %v320, %v326
        %v335 = vadd.f32 %v323, %v326
        %vm336 = vcmask 1024
        %337 = vst.msk [vmem:[%s4] sm:$0x3] %vm336, %v328
        %338 = vst.msk [vmem:[%s4 + $0x2] sm:$0x3] %vm336, %v329
        %339 = vst.msk [vmem:[%s4 + $0x4] sm:$0x3] %vm336, %v330
        %340 = vst.msk [vmem:[%s4 + $0x6] sm:$0x3] %vm336, %v331
        %341 = vst.msk [vmem:[%s4 + $0x8] sm:$0x3] %vm336, %v332
        %342 = vst.msk [vmem:[%s4 + $0xa] sm:$0x3] %vm336, %v333
        %343 = vst.msk [vmem:[%s4 + $0xc] sm:$0x3] %vm336, %v334
        %344 = vst.msk [vmem:[%s4 + $0xe] sm:$0x3] %vm336, %v335
      $region44: #{forward.3} parent=35 // pred_fallthru
        _
      // Predicated region
      $region45: #{forward.3} parent=35 // pred_check
        %p345 = pneg %p119
      $region46: #{forward.3} parent=35 // pred_check_branch
        %347 = sbr.rel (%p345) target = $region48
      $region47: #{forward.3} parent=35 // pred_region
        _
      $region48: #{forward.3} parent=35 // pred_fallthru
        _
      // Predicated region
      $region49: #{forward.3} parent=35 // pred_check
        %p348 = pneg %p119
      $region50: #{forward.3} parent=35 // pred_check_branch
        %350 = sbr.rel (%p348) target = $region52
      $region51: #{forward.3} parent=35 // pred_region
        _
      $region52: #{forward.3} parent=35 // pred_fallthru
        _
    $region36: #{forward.3} parent=5 // pred_fallthru
      _
    %p351 = scmp.le.s32.totalorder 2, %s12
    // Predicated region
    $region53: #{forward.3} parent=5 // pred_check
      %p352 = pneg %p351
    $region54: #{forward.3} parent=5 // pred_check_branch
      %354 = sbr.rel (%p352) target = $region56
    $region55: #{forward.3} parent=5 // pred_region
      %s355 = ssub.s32 %s12, 2
    $region56: #{forward.3} parent=5 // pred_fallthru
      _
  $region6: #{forward.3} parent=0 // loop_footer
    %s16 = sadd.s32 1, %s12
  $region7: #{forward.3} parent=0 // loop_footer_branch
    %11 = sbr.rel target = $region3
  $region8: #{forward.3} parent=0 // loop_exit
    _

// kernel: forward.2
$region0: #{forward.2}
  #allocation0 [shape = 'u32[]', space=smem, size = 0x4, offset = 0x4, fixed_abs, tag = 'smem constant byte address 0x4 - core index']
  #allocation1 [shape = 'u32[72,128]{1,0:T(1,128)}', space=vmem, size = 0x9000, scoped, tag = 'internal scratch']
  %s0 = inlined_call_operand.vmem [shape: f32[16,256,27], index: 0, kind: input, shape index: {}]
  %s1 = inlined_call_operand.vmem [shape: f32[16,1], index: 1, kind: input, shape index: {}]
  %s2 = inlined_call_operand.vmem [shape: f32[27,8], index: 2, kind: input, shape index: {}]
  %s3 = inlined_call_operand.vmem [shape: f32[1,8], index: 3, kind: input, shape index: {}]
  %s4 = inlined_call_operand.vmem [shape: f32[8,512], index: 4, kind: input, shape index: {}]
  %s5 = inlined_call_operand.vmem [shape: f32[1,512], index: 5, kind: input, shape index: {}]
  %s6 = inlined_call_operand.vmem [shape: f32[1,32], index: 6, kind: input, shape index: {}]
  %s7 = inlined_call_operand.vmem [shape: f32[1,32], index: 7, kind: input, shape index: {}]
  %s8 = inlined_call_operand.vmem [shape: f32[512,128], index: 8, kind: input, shape index: {}]
  %s9 = inlined_call_operand.vmem [shape: f32[32,128], index: 9, kind: input, shape index: {}]
  %s10 = inlined_call_operand.vmem [shape: f32[1,128], index: 10, kind: input, shape index: {}]
  %s11 = inlined_call_operand.vmem [shape: f32[16,128], index: 11, kind: output, shape index: {}]
  %s12 = sld [smem:[#allocation0]]
  $region77: #{forward.2} parent=0
    _
  %s14 = ssub.s32 1, %s12
  %s15 = scalar_select 0, %s14, %s12
  loop: start=0, step=1, limit=4
  $region2: #{forward.2} parent=0 // loop_pre_header
    _
  $region3: #{forward.2} parent=0 // loop_header
    %s17 = sphi 0, %s21
    %p18 = scmp.ge.s32.totalorder %s17, 4
    %s27 = sphi 0, %s29
    %s30 = sphi 0, %s27
    %s31 = sphi 0, %s30
    %s47 = sphi 0, %s31
    %s53 = sphi 0, %s55
    %s56 = sphi 0, %s53
    %s57 = sphi 0, %s56
    %s73 = sphi 0, %s57
    %s77 = sphi 0, %s77
    %s79 = sphi 0, %s77
    %s80 = sphi 0, %s79
    %s94 = sphi 0, %s80
    %s98 = sphi 0, %s98
    %s100 = sphi 0, %s98
    %s101 = sphi 0, %s100
    %s115 = sphi 0, %s101
    %s119 = sphi 0, %s119
    %s121 = sphi 0, %s119
    %s122 = sphi 0, %s121
    %s136 = sphi 0, %s122
    %s140 = sphi 0, %s140
    %s142 = sphi 0, %s140
    %s143 = sphi 0, %s142
    %s157 = sphi 0, %s143
    %s161 = sphi 0, %s161
    %s163 = sphi 0, %s161
    %s164 = sphi 0, %s163
    %s178 = sphi 0, %s164
    %s182 = sphi 0, %s182
    %s184 = sphi 0, %s182
    %s185 = sphi 0, %s184
    %s199 = sphi 0, %s185
    %s203 = sphi 0, %s203
    %s205 = sphi 0, %s203
    %s206 = sphi 0, %s205
    %s220 = sphi 0, %s206
    %s224 = sphi 0, %s224
    %s226 = sphi 0, %s224
    %s227 = sphi 0, %s226
    %s241 = sphi 0, %s227
    %s245 = sphi 0, %s245
    %s247 = sphi 0, %s245
    %s248 = sphi 0, %s247
    %s262 = sphi 0, %s248
    %s268 = sphi 0, %s270
    %s271 = sphi 0, %s268
    %s272 = sphi 0, %s271
    %s288 = sphi 0, %s272
  $region4: #{forward.2} parent=0 // loop_header_branch
    %20 = sbr.rel (%p18) target = $region8
  $region5: #{forward.2} parent=0 // loop_body
    %s22 = ssub.s32 %s17, 1
    %s23 = ssub.s32 %s17, 2
    %s24 = sadd.s32 %s17, 1
    %s25 = ssub.s32 %s17, %s24
    %p26 = scmp.eq.s32.totalorder %s25, 0
    %s28 = sadd.s32 %s27, 1
    %s29 = scalar_select %p26, %s27, %s28
    %p32 = pneg %p26
    %p33 = scmp.eq.s32.totalorder %s17, 1
    %p34 = por %p32, %p33
    %p35 = scmp.ne.s32.totalorder %s27, %s30
    %p36 = scmp.eq.s32.totalorder %s17, 0
    %p37 = por %p35, %p36
    %p38 = scmp.ne.s32.totalorder %s27, %s30
    %p39 = scmp.eq.s32.totalorder %s22, 1
    %p40 = por %p38, %p39
    %p41 = scmp.ne.s32.totalorder %s30, %s31
    %p42 = scmp.eq.s32.totalorder %s22, 0
    %p43 = por %p41, %p42
    %p44 = scmp.ne.s32.totalorder %s30, %s31
    %p45 = scmp.eq.s32.totalorder %s23, 1
    %p46 = por %p44, %p45
    %p48 = scmp.ne.s32.totalorder %s31, %s47
    %p49 = scmp.eq.s32.totalorder %s23, 0
    %p50 = por %p48, %p49
    %s51 = ssub.s32 %s17, %s24
    %p52 = scmp.eq.s32.totalorder %s51, 0
    %s54 = sadd.s32 %s53, 1
    %s55 = scalar_select %p52, %s53, %s54
    %p58 = pneg %p52
    %p59 = scmp.eq.s32.totalorder %s17, 1
    %p60 = por %p58, %p59
    %p61 = scmp.ne.s32.totalorder %s53, %s56
    %p62 = scmp.eq.s32.totalorder %s17, 0
    %p63 = por %p61, %p62
    %p64 = scmp.ne.s32.totalorder %s53, %s56
    %p65 = scmp.eq.s32.totalorder %s22, 1
    %p66 = por %p64, %p65
    %p67 = scmp.ne.s32.totalorder %s56, %s57
    %p68 = scmp.eq.s32.totalorder %s22, 0
    %p69 = por %p67, %p68
    %p70 = scmp.ne.s32.totalorder %s56, %s57
    %p71 = scmp.eq.s32.totalorder %s23, 1
    %p72 = por %p70, %p71
    %p74 = scmp.ne.s32.totalorder %s57, %s73
    %p75 = scmp.eq.s32.totalorder %s23, 0
    %p76 = por %p74, %p75
    %s78 = sadd.s32 %s77, 1
    %p81 = scmp.eq.s32.totalorder %s17, 1
    %p82 = scmp.ne.s32.totalorder %s77, %s79
    %p83 = scmp.eq.s32.totalorder %s17, 0
    %p84 = por %p82, %p83
    %p85 = scmp.ne.s32.totalorder %s77, %s79
    %p86 = scmp.eq.s32.totalorder %s22, 1
    %p87 = por %p85, %p86
    %p88 = scmp.ne.s32.totalorder %s79, %s80
    %p89 = scmp.eq.s32.totalorder %s22, 0
    %p90 = por %p88, %p89
    %p91 = scmp.ne.s32.totalorder %s79, %s80
    %p92 = scmp.eq.s32.totalorder %s23, 1
    %p93 = por %p91, %p92
    %p95 = scmp.ne.s32.totalorder %s80, %s94
    %p96 = scmp.eq.s32.totalorder %s23, 0
    %p97 = por %p95, %p96
    %s99 = sadd.s32 %s98, 1
    %p102 = scmp.eq.s32.totalorder %s17, 1
    %p103 = scmp.ne.s32.totalorder %s98, %s100
    %p104 = scmp.eq.s32.totalorder %s17, 0
    %p105 = por %p103, %p104
    %p106 = scmp.ne.s32.totalorder %s98, %s100
    %p107 = scmp.eq.s32.totalorder %s22, 1
    %p108 = por %p106, %p107
    %p109 = scmp.ne.s32.totalorder %s100, %s101
    %p110 = scmp.eq.s32.totalorder %s22, 0
    %p111 = por %p109, %p110
    %p112 = scmp.ne.s32.totalorder %s100, %s101
    %p113 = scmp.eq.s32.totalorder %s23, 1
    %p114 = por %p112, %p113
    %p116 = scmp.ne.s32.totalorder %s101, %s115
    %p117 = scmp.eq.s32.totalorder %s23, 0
    %p118 = por %p116, %p117
    %s120 = sadd.s32 %s119, 1
    %p123 = scmp.eq.s32.totalorder %s17, 1
    %p124 = scmp.ne.s32.totalorder %s119, %s121
    %p125 = scmp.eq.s32.totalorder %s17, 0
    %p126 = por %p124, %p125
    %p127 = scmp.ne.s32.totalorder %s119, %s121
    %p128 = scmp.eq.s32.totalorder %s22, 1
    %p129 = por %p127, %p128
    %p130 = scmp.ne.s32.totalorder %s121, %s122
    %p131 = scmp.eq.s32.totalorder %s22, 0
    %p132 = por %p130, %p131
    %p133 = scmp.ne.s32.totalorder %s121, %s122
    %p134 = scmp.eq.s32.totalorder %s23, 1
    %p135 = por %p133, %p134
    %p137 = scmp.ne.s32.totalorder %s122, %s136
    %p138 = scmp.eq.s32.totalorder %s23, 0
    %p139 = por %p137, %p138
    %s141 = sadd.s32 %s140, 1
    %p144 = scmp.eq.s32.totalorder %s17, 1
    %p145 = scmp.ne.s32.totalorder %s140, %s142
    %p146 = scmp.eq.s32.totalorder %s17, 0
    %p147 = por %p145, %p146
    %p148 = scmp.ne.s32.totalorder %s140, %s142
    %p149 = scmp.eq.s32.totalorder %s22, 1
    %p150 = por %p148, %p149
    %p151 = scmp.ne.s32.totalorder %s142, %s143
    %p152 = scmp.eq.s32.totalorder %s22, 0
    %p153 = por %p151, %p152
    %p154 = scmp.ne.s32.totalorder %s142, %s143
    %p155 = scmp.eq.s32.totalorder %s23, 1
    %p156 = por %p154, %p155
    %p158 = scmp.ne.s32.totalorder %s143, %s157
    %p159 = scmp.eq.s32.totalorder %s23, 0
    %p160 = por %p158, %p159
    %s162 = sadd.s32 %s161, 1
    %p165 = scmp.eq.s32.totalorder %s17, 1
    %p166 = scmp.ne.s32.totalorder %s161, %s163
    %p167 = scmp.eq.s32.totalorder %s17, 0
    %p168 = por %p166, %p167
    %p169 = scmp.ne.s32.totalorder %s161, %s163
    %p170 = scmp.eq.s32.totalorder %s22, 1
    %p171 = por %p169, %p170
    %p172 = scmp.ne.s32.totalorder %s163, %s164
    %p173 = scmp.eq.s32.totalorder %s22, 0
    %p174 = por %p172, %p173
    %p175 = scmp.ne.s32.totalorder %s163, %s164
    %p176 = scmp.eq.s32.totalorder %s23, 1
    %p177 = por %p175, %p176
    %p179 = scmp.ne.s32.totalorder %s164, %s178
    %p180 = scmp.eq.s32.totalorder %s23, 0
    %p181 = por %p179, %p180
    %s183 = sadd.s32 %s182, 1
    %p186 = scmp.eq.s32.totalorder %s17, 1
    %p187 = scmp.ne.s32.totalorder %s182, %s184
    %p188 = scmp.eq.s32.totalorder %s17, 0
    %p189 = por %p187, %p188
    %p190 = scmp.ne.s32.totalorder %s182, %s184
    %p191 = scmp.eq.s32.totalorder %s22, 1
    %p192 = por %p190, %p191
    %p193 = scmp.ne.s32.totalorder %s184, %s185
    %p194 = scmp.eq.s32.totalorder %s22, 0
    %p195 = por %p193, %p194
    %p196 = scmp.ne.s32.totalorder %s184, %s185
    %p197 = scmp.eq.s32.totalorder %s23, 1
    %p198 = por %p196, %p197
    %p200 = scmp.ne.s32.totalorder %s185, %s199
    %p201 = scmp.eq.s32.totalorder %s23, 0
    %p202 = por %p200, %p201
    %s204 = sadd.s32 %s203, 1
    %p207 = scmp.eq.s32.totalorder %s17, 1
    %p208 = scmp.ne.s32.totalorder %s203, %s205
    %p209 = scmp.eq.s32.totalorder %s17, 0
    %p210 = por %p208, %p209
    %p211 = scmp.ne.s32.totalorder %s203, %s205
    %p212 = scmp.eq.s32.totalorder %s22, 1
    %p213 = por %p211, %p212
    %p214 = scmp.ne.s32.totalorder %s205, %s206
    %p215 = scmp.eq.s32.totalorder %s22, 0
    %p216 = por %p214, %p215
    %p217 = scmp.ne.s32.totalorder %s205, %s206
    %p218 = scmp.eq.s32.totalorder %s23, 1
    %p219 = por %p217, %p218
    %p221 = scmp.ne.s32.totalorder %s206, %s220
    %p222 = scmp.eq.s32.totalorder %s23, 0
    %p223 = por %p221, %p222
    %s225 = sadd.s32 %s224, 1
    %p228 = scmp.eq.s32.totalorder %s17, 1
    %p229 = scmp.ne.s32.totalorder %s224, %s226
    %p230 = scmp.eq.s32.totalorder %s17, 0
    %p231 = por %p229, %p230
    %p232 = scmp.ne.s32.totalorder %s224, %s226
    %p233 = scmp.eq.s32.totalorder %s22, 1
    %p234 = por %p232, %p233
    %p235 = scmp.ne.s32.totalorder %s226, %s227
    %p236 = scmp.eq.s32.totalorder %s22, 0
    %p237 = por %p235, %p236
    %p238 = scmp.ne.s32.totalorder %s226, %s227
    %p239 = scmp.eq.s32.totalorder %s23, 1
    %p240 = por %p238, %p239
    %p242 = scmp.ne.s32.totalorder %s227, %s241
    %p243 = scmp.eq.s32.totalorder %s23, 0
    %p244 = por %p242, %p243
    %s246 = sadd.s32 %s245, 1
    %p249 = scmp.eq.s32.totalorder %s17, 1
    %p250 = scmp.ne.s32.totalorder %s245, %s247
    %p251 = scmp.eq.s32.totalorder %s17, 0
    %p252 = por %p250, %p251
    %p253 = scmp.ne.s32.totalorder %s245, %s247
    %p254 = scmp.eq.s32.totalorder %s22, 1
    %p255 = por %p253, %p254
    %p256 = scmp.ne.s32.totalorder %s247, %s248
    %p257 = scmp.eq.s32.totalorder %s22, 0
    %p258 = por %p256, %p257
    %p259 = scmp.ne.s32.totalorder %s247, %s248
    %p260 = scmp.eq.s32.totalorder %s23, 1
    %p261 = por %p259, %p260
    %p263 = scmp.ne.s32.totalorder %s248, %s262
    %p264 = scmp.eq.s32.totalorder %s23, 0
    %p265 = por %p263, %p264
    %s266 = ssub.s32 %s17, %s24
    %p267 = scmp.eq.s32.totalorder %s266, 0
    %s269 = sadd.s32 %s268, 1
    %s270 = scalar_select %p267, %s268, %s269
    %p273 = pneg %p267
    %p274 = scmp.eq.s32.totalorder %s17, 1
    %p275 = por %p273, %p274
    %p276 = scmp.ne.s32.totalorder %s268, %s271
    %p277 = scmp.eq.s32.totalorder %s17, 0
    %p278 = por %p276, %p277
    %p279 = scmp.ne.s32.totalorder %s268, %s271
    %p280 = scmp.eq.s32.totalorder %s22, 1
    %p281 = por %p279, %p280
    %p282 = scmp.ne.s32.totalorder %s271, %s272
    %p283 = scmp.eq.s32.totalorder %s22, 0
    %p284 = por %p282, %p283
    %p285 = scmp.ne.s32.totalorder %s271, %s272
    %p286 = scmp.eq.s32.totalorder %s23, 1
    %p287 = por %p285, %p286
    %p289 = scmp.ne.s32.totalorder %s272, %s288
    %p290 = scmp.eq.s32.totalorder %s23, 0
    %p291 = por %p289, %p290
    %p292 = scmp.le.s32.totalorder 1, %s17
    %p293 = scmp.lt.s32.totalorder %s17, 3
    %p294 = pnand %p292, %p293
    %p295 = pneg %p294
    // Predicated region
    $region9: #{forward.2} parent=5 // pred_check
      _
    $region10: #{forward.2} parent=5 // pred_check_branch
      %297 = sbr.rel (%p294) target = $region12
    $region11: #{forward.2} parent=5 // pred_region
      %s298 = ssub.s32 %s17, 1
      // Predicated region
      $region13: #{forward.2} parent=11 // pred_check
        %p299 = pneg %p90
      $region14: #{forward.2} parent=11 // pred_check_branch
        %301 = sbr.rel (%p299) target = $region16
      $region15: #{forward.2} parent=11 // pred_region
        _
      $region16: #{forward.2} parent=11 // pred_fallthru
        _
      // Predicated region
      $region17: #{forward.2} parent=11 // pred_check
        %p302 = pneg %p111
      $region18: #{forward.2} parent=11 // pred_check_branch
        %304 = sbr.rel (%p302) target = $region20
      $region19: #{forward.2} parent=11 // pred_region
        _
      $region20: #{forward.2} parent=11 // pred_fallthru
        _
      // Predicated region
      $region21: #{forward.2} parent=11 // pred_check
        %p305 = pneg %p132
      $region22: #{forward.2} parent=11 // pred_check_branch
        %307 = sbr.rel (%p305) target = $region24
      $region23: #{forward.2} parent=11 // pred_region
        _
      $region24: #{forward.2} parent=11 // pred_fallthru
        _
      // Predicated region
      $region25: #{forward.2} parent=11 // pred_check
        %p308 = pneg %p153
      $region26: #{forward.2} parent=11 // pred_check_branch
        %310 = sbr.rel (%p308) target = $region28
      $region27: #{forward.2} parent=11 // pred_region
        _
      $region28: #{forward.2} parent=11 // pred_fallthru
        _
      // Predicated region
      $region29: #{forward.2} parent=11 // pred_check
        %p311 = pneg %p174
      $region30: #{forward.2} parent=11 // pred_check_branch
        %313 = sbr.rel (%p311) target = $region32
      $region31: #{forward.2} parent=11 // pred_region
        _
      $region32: #{forward.2} parent=11 // pred_fallthru
        _
      // Predicated region
      $region33: #{forward.2} parent=11 // pred_check
        %p314 = pneg %p195
      $region34: #{forward.2} parent=11 // pred_check_branch
        %316 = sbr.rel (%p314) target = $region36
      $region35: #{forward.2} parent=11 // pred_region
        _
      $region36: #{forward.2} parent=11 // pred_fallthru
        _
      // Predicated region
      $region37: #{forward.2} parent=11 // pred_check
        %p317 = pneg %p216
      $region38: #{forward.2} parent=11 // pred_check_branch
        %319 = sbr.rel (%p317) target = $region40
      $region39: #{forward.2} parent=11 // pred_region
        _
      $region40: #{forward.2} parent=11 // pred_fallthru
        _
      // Predicated region
      $region41: #{forward.2} parent=11 // pred_check
        %p320 = pneg %p237
      $region42: #{forward.2} parent=11 // pred_check_branch
        %322 = sbr.rel (%p320) target = $region44
      $region43: #{forward.2} parent=11 // pred_region
        _
      $region44: #{forward.2} parent=11 // pred_fallthru
        _
      // Predicated region
      $region45: #{forward.2} parent=11 // pred_check
        %p323 = pneg %p258
      $region46: #{forward.2} parent=11 // pred_check_branch
        %325 = sbr.rel (%p323) target = $region48
      $region47: #{forward.2} parent=11 // pred_region
        _
      $region48: #{forward.2} parent=11 // pred_fallthru
        _
    $region12: #{forward.2} parent=5 // pred_fallthru
      _
    %p326 = scmp.lt.s32.totalorder %s17, 2
    // Predicated region
    $region49: #{forward.2} parent=5 // pred_check
      %p327 = pneg %p326
    $region50: #{forward.2} parent=5 // pred_check_branch
      %329 = sbr.rel (%p327) target = $region52
    $region51: #{forward.2} parent=5 // pred_region
      // Predicated region
      $region53: #{forward.2} parent=51 // pred_check
        %p330 = pneg %p37
      $region54: #{forward.2} parent=51 // pred_check_branch
        %332 = sbr.rel (%p330) target = $region56
      $region55: #{forward.2} parent=51 // pred_region
        %s333 = smul.u32 8, %s17
        %p334 = scmp.lt.s32.totalorder %s333, 15
        %s335 = scalar_select %p334, %s333, 15
        %s336 = smul.addr %s335, 32
        %s337 = smul.addr %s336, 8
        %s338 = scalar_lea.vmem %s0, %s337
        %s339 = smul.u32 8, %s17
      $region56: #{forward.2} parent=51 // pred_fallthru
        _
      // Predicated region
      $region57: #{forward.2} parent=51 // pred_check
        %p340 = pneg %p63
      $region58: #{forward.2} parent=51 // pred_check_branch
        %342 = sbr.rel (%p340) target = $region60
      $region59: #{forward.2} parent=51 // pred_region
        %p343 = scmp.lt.s32.totalorder %s17, 1
        %s344 = scalar_select %p343, %s17, 1
        %s345 = smul.addr %s344, 8
        %s346 = scalar_lea.vmem %s1, %s345
      $region60: #{forward.2} parent=51 // pred_fallthru
        _
    $region52: #{forward.2} parent=5 // pred_fallthru
      _
    %p347 = scmp.le.s32.totalorder 1, %s17
    %p348 = scmp.lt.s32.totalorder %s17, 3
    %p349 = pnand %p347, %p348
    %p350 = pneg %p349
    // Predicated region
    $region61: #{forward.2} parent=5 // pred_check
      _
    $region62: #{forward.2} parent=5 // pred_check_branch
      %352 = sbr.rel (%p349) target = $region64
    $region63: #{forward.2} parent=5 // pred_region
      %s353 = ssub.s32 %s17, 1
      %s354 = smul.u32 8, %s22
      %p355 = scmp.lt.s32.totalorder %s354, 15
      %s356 = scalar_select %p355, %s354, 15
      %s357 = smul.addr %s356, 32
      %s358 = smul.addr %s357, 8
      %s359 = scalar_lea.vmem %s0, %s358
      %p360 = pneg %p43
      %p361 = pneg %p40
      %p362 = scmp.lt.s32.totalorder %s22, 1
      %s363 = scalar_select %p362, %s22, 1
      %s364 = smul.addr %s363, 8
      %s365 = scalar_lea.vmem %s1, %s364
      %p366 = pneg %p69
      %p367 = pneg %p66
      %p368 = pneg %p90
      %p369 = pneg %p87
      %p370 = pneg %p111
      %p371 = pneg %p108
      %p372 = pneg %p132
      %p373 = pneg %p129
      %p374 = pneg %p153
      %p375 = pneg %p150
      %p376 = pneg %p174
      %p377 = pneg %p171
      %p378 = pneg %p195
      %p379 = pneg %p192
      %p380 = pneg %p216
      %p381 = pneg %p213
      %p382 = pneg %p237
      %p383 = pneg %p234
      %p384 = pneg %p258
      %p385 = pneg %p255
      %p386 = pneg %p284
      %p387 = pneg %p281
      %p388 = scmp.lt.s32.totalorder %s22, 1
      %s389 = scalar_select %p388, %s22, 1
      %s390 = smul.addr %s389, 8
      %s391 = scalar_lea.vmem %s11, %s390
      %s392 = smul.u32 8, %s22
      %p393 = scmp.lt.s32.totalorder %s392, 15
      %s394 = scalar_select %p393, %s392, 15
      %s395 = smul.addr %s394, 32
      %s396 = smul.addr %s395, 8
      %s397 = scalar_lea.vmem %s0, %s396
      %s398 = smul.u32 8, %s22
      %p399 = scmp.lt.s32.totalorder %s22, 1
      %s400 = scalar_select %p399, %s22, 1
      %s401 = smul.addr %s400, 8
      %s402 = scalar_lea.vmem %s1, %s401
      %p403 = scmp.lt.s32.totalorder %s22, 1
      %s404 = scalar_select %p403, %s22, 1
      %s405 = smul.addr %s404, 8
      %s406 = scalar_lea.vmem %s11, %s405
      %v407 = vld [vmem:[%s397] sm:$0xff]
      %v408 = vld [vmem:[%s397 + $0x8] sm:$0xff]
      %v409 = vld [vmem:[%s397 + $0x10] sm:$0xff]
      %v410 = vld [vmem:[%s397 + $0x18] sm:$0xff]
      %v411 = vld [vmem:[%s397 + $0x20] sm:$0xff]
      %v412 = vld [vmem:[%s397 + $0x28] sm:$0xff]
      %v413 = vld [vmem:[%s397 + $0x30] sm:$0xff]
      %v414 = vld [vmem:[%s397 + $0x38] sm:$0xff]
      %v415 = vld [vmem:[%s397 + $0x40] sm:$0xff]
      %v416 = vld [vmem:[%s397 + $0x48] sm:$0xff]
      %v417 = vld [vmem:[%s397 + $0x50] sm:$0xff]
      %v418 = vld [vmem:[%s397 + $0x58] sm:$0xff]
      %v419 = vld [vmem:[%s397 + $0x60] sm:$0xff]
      %v420 = vld [vmem:[%s397 + $0x68] sm:$0xff]
      %v421 = vld [vmem:[%s397 + $0x70] sm:$0xff]
      %v422 = vld [vmem:[%s397 + $0x78] sm:$0xff]
      %v423 = vld [vmem:[%s397 + $0x80] sm:$0xff]
      %v424 = vld [vmem:[%s397 + $0x88] sm:$0xff]
      %v425 = vld [vmem:[%s397 + $0x90] sm:$0xff]
      %v426 = vld [vmem:[%s397 + $0x98] sm:$0xff]
      %v427 = vld [vmem:[%s397 + $0xa0] sm:$0xff]
      %v428 = vld [vmem:[%s397 + $0xa8] sm:$0xff]
      %v429 = vld [vmem:[%s397 + $0xb0] sm:$0xff]
      %v430 = vld [vmem:[%s397 + $0xb8] sm:$0xff]
      %v431 = vld [vmem:[%s397 + $0xc0] sm:$0xff]
      %v432 = vld [vmem:[%s397 + $0xc8] sm:$0xff]
      %v433 = vld [vmem:[%s397 + $0xd0] sm:$0xff]
      %v434 = vld [vmem:[%s397 + $0xd8] sm:$0xff]
      %v435 = vld [vmem:[%s397 + $0xe0] sm:$0xff]
      %v436 = vld [vmem:[%s397 + $0xe8] sm:$0xff]
      %v437 = vld [vmem:[%s397 + $0xf0] sm:$0xff]
      %v438 = vld [vmem:[%s397 + $0xf8] sm:$0xff]
      %v439 = vld [vmem:[%s397 + $0x100] sm:$0xff]
      %v440 = vld [vmem:[%s397 + $0x108] sm:$0xff]
      %v441 = vld [vmem:[%s397 + $0x110] sm:$0xff]
      %v442 = vld [vmem:[%s397 + $0x118] sm:$0xff]
      %v443 = vld [vmem:[%s397 + $0x120] sm:$0xff]
      %v444 = vld [vmem:[%s397 + $0x128] sm:$0xff]
      %v445 = vld [vmem:[%s397 + $0x130] sm:$0xff]
      %v446 = vld [vmem:[%s397 + $0x138] sm:$0xff]
      %v447 = vld [vmem:[%s397 + $0x140] sm:$0xff]
      %v448 = vld [vmem:[%s397 + $0x148] sm:$0xff]
      %v449 = vld [vmem:[%s397 + $0x150] sm:$0xff]
      %v450 = vld [vmem:[%s397 + $0x158] sm:$0xff]
      %v451 = vld [vmem:[%s397 + $0x160] sm:$0xff]
      %v452 = vld [vmem:[%s397 + $0x168] sm:$0xff]
      %v453 = vld [vmem:[%s397 + $0x170] sm:$0xff]
      %v454 = vld [vmem:[%s397 + $0x178] sm:$0xff]
      %v455 = vld [vmem:[%s397 + $0x180] sm:$0xff]
      %v456 = vld [vmem:[%s397 + $0x188] sm:$0xff]
      %v457 = vld [vmem:[%s397 + $0x190] sm:$0xff]
      %v458 = vld [vmem:[%s397 + $0x198] sm:$0xff]
      %v459 = vld [vmem:[%s397 + $0x1a0] sm:$0xff]
      %v460 = vld [vmem:[%s397 + $0x1a8] sm:$0xff]
      %v461 = vld [vmem:[%s397 + $0x1b0] sm:$0xff]
      %v462 = vld [vmem:[%s397 + $0x1b8] sm:$0xff]
      %v463 = vld [vmem:[%s397 + $0x1c0] sm:$0xff]
      %v464 = vld [vmem:[%s397 + $0x1c8] sm:$0xff]
      %v465 = vld [vmem:[%s397 + $0x1d0] sm:$0xff]
      %v466 = vld [vmem:[%s397 + $0x1d8] sm:$0xff]
      %v467 = vld [vmem:[%s397 + $0x1e0] sm:$0xff]
      %v468 = vld [vmem:[%s397 + $0x1e8] sm:$0xff]
      %v469 = vld [vmem:[%s397 + $0x1f0] sm:$0xff]
      %v470 = vld [vmem:[%s397 + $0x1f8] sm:$0xff]
      %v471 = vld [vmem:[%s397 + $0x200] sm:$0xff]
      %v472 = vld [vmem:[%s397 + $0x208] sm:$0xff]
      %v473 = vld [vmem:[%s397 + $0x210] sm:$0xff]
      %v474 = vld [vmem:[%s397 + $0x218] sm:$0xff]
      %v475 = vld [vmem:[%s397 + $0x220] sm:$0xff]
      %v476 = vld [vmem:[%s397 + $0x228] sm:$0xff]
      %v477 = vld [vmem:[%s397 + $0x230] sm:$0xff]
      %v478 = vld [vmem:[%s397 + $0x238] sm:$0xff]
      %v479 = vld [vmem:[%s397 + $0x240] sm:$0xff]
      %v480 = vld [vmem:[%s397 + $0x248] sm:$0xff]
      %v481 = vld [vmem:[%s397 + $0x250] sm:$0xff]
      %v482 = vld [vmem:[%s397 + $0x258] sm:$0xff]
      %v483 = vld [vmem:[%s397 + $0x260] sm:$0xff]
      %v484 = vld [vmem:[%s397 + $0x268] sm:$0xff]
      %v485 = vld [vmem:[%s397 + $0x270] sm:$0xff]
      %v486 = vld [vmem:[%s397 + $0x278] sm:$0xff]
      %v487 = vld [vmem:[%s397 + $0x280] sm:$0xff]
      %v488 = vld [vmem:[%s397 + $0x288] sm:$0xff]
      %v489 = vld [vmem:[%s397 + $0x290] sm:$0xff]
      %v490 = vld [vmem:[%s397 + $0x298] sm:$0xff]
      %v491 = vld [vmem:[%s397 + $0x2a0] sm:$0xff]
      %v492 = vld [vmem:[%s397 + $0x2a8] sm:$0xff]
      %v493 = vld [vmem:[%s397 + $0x2b0] sm:$0xff]
      %v494 = vld [vmem:[%s397 + $0x2b8] sm:$0xff]
      %v495 = vld [vmem:[%s397 + $0x2c0] sm:$0xff]
      %v496 = vld [vmem:[%s397 + $0x2c8] sm:$0xff]
      %v497 = vld [vmem:[%s397 + $0x2d0] sm:$0xff]
      %v498 = vld [vmem:[%s397 + $0x2d8] sm:$0xff]
      %v499 = vld [vmem:[%s397 + $0x2e0] sm:$0xff]
      %v500 = vld [vmem:[%s397 + $0x2e8] sm:$0xff]
      %v501 = vld [vmem:[%s397 + $0x2f0] sm:$0xff]
      %v502 = vld [vmem:[%s397 + $0x2f8] sm:$0xff]
      %v503 = vld [vmem:[%s397 + $0x300] sm:$0xff]
      %v504 = vld [vmem:[%s397 + $0x308] sm:$0xff]
      %v505 = vld [vmem:[%s397 + $0x310] sm:$0xff]
      %v506 = vld [vmem:[%s397 + $0x318] sm:$0xff]
      %v507 = vld [vmem:[%s397 + $0x320] sm:$0xff]
      %v508 = vld [vmem:[%s397 + $0x328] sm:$0xff]
      %v509 = vld [vmem:[%s397 + $0x330] sm:$0xff]
      %v510 = vld [vmem:[%s397 + $0x338] sm:$0xff]
      %v511 = vld [vmem:[%s397 + $0x340] sm:$0xff]
      %v512 = vld [vmem:[%s397 + $0x348] sm:$0xff]
      %v513 = vld [vmem:[%s397 + $0x350] sm:$0xff]
      %v514 = vld [vmem:[%s397 + $0x358] sm:$0xff]
      %v515 = vld [vmem:[%s397 + $0x360] sm:$0xff]
      %v516 = vld [vmem:[%s397 + $0x368] sm:$0xff]
      %v517 = vld [vmem:[%s397 + $0x370] sm:$0xff]
      %v518 = vld [vmem:[%s397 + $0x378] sm:$0xff]
      %v519 = vld [vmem:[%s397 + $0x380] sm:$0xff]
      %v520 = vld [vmem:[%s397 + $0x388] sm:$0xff]
      %v521 = vld [vmem:[%s397 + $0x390] sm:$0xff]
      %v522 = vld [vmem:[%s397 + $0x398] sm:$0xff]
      %v523 = vld [vmem:[%s397 + $0x3a0] sm:$0xff]
      %v524 = vld [vmem:[%s397 + $0x3a8] sm:$0xff]
      %v525 = vld [vmem:[%s397 + $0x3b0] sm:$0xff]
      %v526 = vld [vmem:[%s397 + $0x3b8] sm:$0xff]
      %v527 = vld [vmem:[%s397 + $0x3c0] sm:$0xff]
      %v528 = vld [vmem:[%s397 + $0x3c8] sm:$0xff]
      %v529 = vld [vmem:[%s397 + $0x3d0] sm:$0xff]
      %v530 = vld [vmem:[%s397 + $0x3d8] sm:$0xff]
      %v531 = vld [vmem:[%s397 + $0x3e0] sm:$0xff]
      %v532 = vld [vmem:[%s397 + $0x3e8] sm:$0xff]
      %v533 = vld [vmem:[%s397 + $0x3f0] sm:$0xff]
      %v534 = vld [vmem:[%s397 + $0x3f8] sm:$0xff]
      %v535 = vld [vmem:[%s397 + $0x400] sm:$0xff]
      %v536 = vld [vmem:[%s397 + $0x408] sm:$0xff]
      %v537 = vld [vmem:[%s397 + $0x410] sm:$0xff]
      %v538 = vld [vmem:[%s397 + $0x418] sm:$0xff]
      %v539 = vld [vmem:[%s397 + $0x420] sm:$0xff]
      %v540 = vld [vmem:[%s397 + $0x428] sm:$0xff]
      %v541 = vld [vmem:[%s397 + $0x430] sm:$0xff]
      %v542 = vld [vmem:[%s397 + $0x438] sm:$0xff]
      %v543 = vld [vmem:[%s397 + $0x440] sm:$0xff]
      %v544 = vld [vmem:[%s397 + $0x448] sm:$0xff]
      %v545 = vld [vmem:[%s397 + $0x450] sm:$0xff]
      %v546 = vld [vmem:[%s397 + $0x458] sm:$0xff]
      %v547 = vld [vmem:[%s397 + $0x460] sm:$0xff]
      %v548 = vld [vmem:[%s397 + $0x468] sm:$0xff]
      %v549 = vld [vmem:[%s397 + $0x470] sm:$0xff]
      %v550 = vld [vmem:[%s397 + $0x478] sm:$0xff]
      %v551 = vld [vmem:[%s397 + $0x480] sm:$0xff]
      %v552 = vld [vmem:[%s397 + $0x488] sm:$0xff]
      %v553 = vld [vmem:[%s397 + $0x490] sm:$0xff]
      %v554 = vld [vmem:[%s397 + $0x498] sm:$0xff]
      %v555 = vld [vmem:[%s397 + $0x4a0] sm:$0xff]
      %v556 = vld [vmem:[%s397 + $0x4a8] sm:$0xff]
      %v557 = vld [vmem:[%s397 + $0x4b0] sm:$0xff]
      %v558 = vld [vmem:[%s397 + $0x4b8] sm:$0xff]
      %v559 = vld [vmem:[%s397 + $0x4c0] sm:$0xff]
      %v560 = vld [vmem:[%s397 + $0x4c8] sm:$0xff]
      %v561 = vld [vmem:[%s397 + $0x4d0] sm:$0xff]
      %v562 = vld [vmem:[%s397 + $0x4d8] sm:$0xff]
      %v563 = vld [vmem:[%s397 + $0x4e0] sm:$0xff]
      %v564 = vld [vmem:[%s397 + $0x4e8] sm:$0xff]
      %v565 = vld [vmem:[%s397 + $0x4f0] sm:$0xff]
      %v566 = vld [vmem:[%s397 + $0x4f8] sm:$0xff]
      %v567 = vld [vmem:[%s397 + $0x500] sm:$0xff]
      %v568 = vld [vmem:[%s397 + $0x508] sm:$0xff]
      %v569 = vld [vmem:[%s397 + $0x510] sm:$0xff]
      %v570 = vld [vmem:[%s397 + $0x518] sm:$0xff]
      %v571 = vld [vmem:[%s397 + $0x520] sm:$0xff]
      %v572 = vld [vmem:[%s397 + $0x528] sm:$0xff]
      %v573 = vld [vmem:[%s397 + $0x530] sm:$0xff]
      %v574 = vld [vmem:[%s397 + $0x538] sm:$0xff]
      %v575 = vld [vmem:[%s397 + $0x540] sm:$0xff]
      %v576 = vld [vmem:[%s397 + $0x548] sm:$0xff]
      %v577 = vld [vmem:[%s397 + $0x550] sm:$0xff]
      %v578 = vld [vmem:[%s397 + $0x558] sm:$0xff]
      %v579 = vld [vmem:[%s397 + $0x560] sm:$0xff]
      %v580 = vld [vmem:[%s397 + $0x568] sm:$0xff]
      %v581 = vld [vmem:[%s397 + $0x570] sm:$0xff]
      %v582 = vld [vmem:[%s397 + $0x578] sm:$0xff]
      %v583 = vld [vmem:[%s397 + $0x580] sm:$0xff]
      %v584 = vld [vmem:[%s397 + $0x588] sm:$0xff]
      %v585 = vld [vmem:[%s397 + $0x590] sm:$0xff]
      %v586 = vld [vmem:[%s397 + $0x598] sm:$0xff]
      %v587 = vld [vmem:[%s397 + $0x5a0] sm:$0xff]
      %v588 = vld [vmem:[%s397 + $0x5a8] sm:$0xff]
      %v589 = vld [vmem:[%s397 + $0x5b0] sm:$0xff]
      %v590 = vld [vmem:[%s397 + $0x5b8] sm:$0xff]
      %v591 = vld [vmem:[%s397 + $0x5c0] sm:$0xff]
      %v592 = vld [vmem:[%s397 + $0x5c8] sm:$0xff]
      %v593 = vld [vmem:[%s397 + $0x5d0] sm:$0xff]
      %v594 = vld [vmem:[%s397 + $0x5d8] sm:$0xff]
      %v595 = vld [vmem:[%s397 + $0x5e0] sm:$0xff]
      %v596 = vld [vmem:[%s397 + $0x5e8] sm:$0xff]
      %v597 = vld [vmem:[%s397 + $0x5f0] sm:$0xff]
      %v598 = vld [vmem:[%s397 + $0x5f8] sm:$0xff]
      %v599 = vld [vmem:[%s397 + $0x600] sm:$0xff]
      %v600 = vld [vmem:[%s397 + $0x608] sm:$0xff]
      %v601 = vld [vmem:[%s397 + $0x610] sm:$0xff]
      %v602 = vld [vmem:[%s397 + $0x618] sm:$0xff]
      %v603 = vld [vmem:[%s397 + $0x620] sm:$0xff]
      %v604 = vld [vmem:[%s397 + $0x628] sm:$0xff]
      %v605 = vld [vmem:[%s397 + $0x630] sm:$0xff]
      %v606 = vld [vmem:[%s397 + $0x638] sm:$0xff]
      %v607 = vld [vmem:[%s397 + $0x640] sm:$0xff]
      %v608 = vld [vmem:[%s397 + $0x648] sm:$0xff]
      %v609 = vld [vmem:[%s397 + $0x650] sm:$0xff]
      %v610 = vld [vmem:[%s397 + $0x658] sm:$0xff]
      %v611 = vld [vmem:[%s397 + $0x660] sm:$0xff]
      %v612 = vld [vmem:[%s397 + $0x668] sm:$0xff]
      %v613 = vld [vmem:[%s397 + $0x670] sm:$0xff]
      %v614 = vld [vmem:[%s397 + $0x678] sm:$0xff]
      %v615 = vld [vmem:[%s397 + $0x680] sm:$0xff]
      %v616 = vld [vmem:[%s397 + $0x688] sm:$0xff]
      %v617 = vld [vmem:[%s397 + $0x690] sm:$0xff]
      %v618 = vld [vmem:[%s397 + $0x698] sm:$0xff]
      %v619 = vld [vmem:[%s397 + $0x6a0] sm:$0xff]
      %v620 = vld [vmem:[%s397 + $0x6a8] sm:$0xff]
      %v621 = vld [vmem:[%s397 + $0x6b0] sm:$0xff]
      %v622 = vld [vmem:[%s397 + $0x6b8] sm:$0xff]
      %v623 = vld [vmem:[%s397 + $0x6c0] sm:$0xff]
      %v624 = vld [vmem:[%s397 + $0x6c8] sm:$0xff]
      %v625 = vld [vmem:[%s397 + $0x6d0] sm:$0xff]
      %v626 = vld [vmem:[%s397 + $0x6d8] sm:$0xff]
      %v627 = vld [vmem:[%s397 + $0x6e0] sm:$0xff]
      %v628 = vld [vmem:[%s397 + $0x6e8] sm:$0xff]
      %v629 = vld [vmem:[%s397 + $0x6f0] sm:$0xff]
      %v630 = vld [vmem:[%s397 + $0x6f8] sm:$0xff]
      %v631 = vld [vmem:[%s397 + $0x700] sm:$0xff]
      %v632 = vld [vmem:[%s397 + $0x708] sm:$0xff]
      %v633 = vld [vmem:[%s397 + $0x710] sm:$0xff]
      %v634 = vld [vmem:[%s397 + $0x718] sm:$0xff]
      %v635 = vld [vmem:[%s397 + $0x720] sm:$0xff]
      %v636 = vld [vmem:[%s397 + $0x728] sm:$0xff]
      %v637 = vld [vmem:[%s397 + $0x730] sm:$0xff]
      %v638 = vld [vmem:[%s397 + $0x738] sm:$0xff]
      %v639 = vld [vmem:[%s397 + $0x740] sm:$0xff]
      %v640 = vld [vmem:[%s397 + $0x748] sm:$0xff]
      %v641 = vld [vmem:[%s397 + $0x750] sm:$0xff]
      %v642 = vld [vmem:[%s397 + $0x758] sm:$0xff]
      %v643 = vld [vmem:[%s397 + $0x760] sm:$0xff]
      %v644 = vld [vmem:[%s397 + $0x768] sm:$0xff]
      %v645 = vld [vmem:[%s397 + $0x770] sm:$0xff]
      %v646 = vld [vmem:[%s397 + $0x778] sm:$0xff]
      %v647 = vld [vmem:[%s397 + $0x780] sm:$0xff]
      %v648 = vld [vmem:[%s397 + $0x788] sm:$0xff]
      %v649 = vld [vmem:[%s397 + $0x790] sm:$0xff]
      %v650 = vld [vmem:[%s397 + $0x798] sm:$0xff]
      %v651 = vld [vmem:[%s397 + $0x7a0] sm:$0xff]
      %v652 = vld [vmem:[%s397 + $0x7a8] sm:$0xff]
      %v653 = vld [vmem:[%s397 + $0x7b0] sm:$0xff]
      %v654 = vld [vmem:[%s397 + $0x7b8] sm:$0xff]
      %v655 = vld [vmem:[%s397 + $0x7c0] sm:$0xff]
      %v656 = vld [vmem:[%s397 + $0x7c8] sm:$0xff]
      %v657 = vld [vmem:[%s397 + $0x7d0] sm:$0xff]
      %v658 = vld [vmem:[%s397 + $0x7d8] sm:$0xff]
      %v659 = vld [vmem:[%s397 + $0x7e0] sm:$0xff]
      %v660 = vld [vmem:[%s397 + $0x7e8] sm:$0xff]
      %v661 = vld [vmem:[%s397 + $0x7f0] sm:$0xff]
      %v662 = vld [vmem:[%s397 + $0x7f8] sm:$0xff]
      %v663 = vld [vmem:[%s2] sm:$0xff]
      %v664 = vld [vmem:[%s2 + $0x8] sm:$0xff]
      %v665 = vld [vmem:[%s2 + $0x10] sm:$0xff]
      %v666 = vld [vmem:[%s2 + $0x18] sm:$0x7]
      %v667 = vld [vmem:[%s3] sm:$0x1]
      %v669 = vperm.slane %v667, 0
      %vm671 = vcmask 220160
      %v673 = vsel %vm671, %v407, 0
      %v676 = vsel %vm671, %v408, 0
      %v679 = vsel %vm671, %v409, 0
      %v682 = vsel %vm671, %v410, 0
      %v685 = vsel %vm671, %v411, 0
      %v688 = vsel %vm671, %v412, 0
      %v691 = vsel %vm671, %v413, 0
      %v694 = vsel %vm671, %v414, 0
      %v697 = vsel %vm671, %v415, 0
      %v700 = vsel %vm671, %v416, 0
      %v703 = vsel %vm671, %v417, 0
      %v706 = vsel %vm671, %v418, 0
      %v709 = vsel %vm671, %v419, 0
      %v712 = vsel %vm671, %v420, 0
      %v715 = vsel %vm671, %v421, 0
      %v718 = vsel %vm671, %v422, 0
      %v721 = vsel %vm671, %v423, 0
      %v724 = vsel %vm671, %v424, 0
      %v727 = vsel %vm671, %v425, 0
      %v730 = vsel %vm671, %v426, 0
      %v733 = vsel %vm671, %v427, 0
      %v736 = vsel %vm671, %v428, 0
      %v739 = vsel %vm671, %v429, 0
      %v742 = vsel %vm671, %v430, 0
      %v745 = vsel %vm671, %v431, 0
      %v748 = vsel %vm671, %v432, 0
      %v751 = vsel %vm671, %v433, 0
      %v754 = vsel %vm671, %v434, 0
      %v757 = vsel %vm671, %v435, 0
      %v760 = vsel %vm671, %v436, 0
      %v763 = vsel %vm671, %v437, 0
      %v766 = vsel %vm671, %v438, 0
      %v769 = vsel %vm671, %v439, 0
      %v772 = vsel %vm671, %v440, 0
      %v775 = vsel %vm671, %v441, 0
      %v778 = vsel %vm671, %v442, 0
      %v781 = vsel %vm671, %v443, 0
      %v784 = vsel %vm671, %v444, 0
      %v787 = vsel %vm671, %v445, 0
      %v790 = vsel %vm671, %v446, 0
      %v793 = vsel %vm671, %v447, 0
      %v796 = vsel %vm671, %v448, 0
      %v799 = vsel %vm671, %v449, 0
      %v802 = vsel %vm671, %v450, 0
      %v805 = vsel %vm671, %v451, 0
      %v808 = vsel %vm671, %v452, 0
      %v811 = vsel %vm671, %v453, 0
      %v814 = vsel %vm671, %v454, 0
      %v817 = vsel %vm671, %v455, 0
      %v820 = vsel %vm671, %v456, 0
      %v823 = vsel %vm671, %v457, 0
      %v826 = vsel %vm671, %v458, 0
      %v829 = vsel %vm671, %v459, 0
      %v832 = vsel %vm671, %v460, 0
      %v835 = vsel %vm671, %v461, 0
      %v838 = vsel %vm671, %v462, 0
      %v841 = vsel %vm671, %v463, 0
      %v844 = vsel %vm671, %v464, 0
      %v847 = vsel %vm671, %v465, 0
      %v850 = vsel %vm671, %v466, 0
      %v853 = vsel %vm671, %v467, 0
      %v856 = vsel %vm671, %v468, 0
      %v859 = vsel %vm671, %v469, 0
      %v862 = vsel %vm671, %v470, 0
      %v865 = vsel %vm671, %v471, 0
      %v868 = vsel %vm671, %v472, 0
      %v871 = vsel %vm671, %v473, 0
      %v874 = vsel %vm671, %v474, 0
      %v877 = vsel %vm671, %v475, 0
      %v880 = vsel %vm671, %v476, 0
      %v883 = vsel %vm671, %v477, 0
      %v886 = vsel %vm671, %v478, 0
      %v889 = vsel %vm671, %v479, 0
      %v892 = vsel %vm671, %v480, 0
      %v895 = vsel %vm671, %v481, 0
      %v898 = vsel %vm671, %v482, 0
      %v901 = vsel %vm671, %v483, 0
      %v904 = vsel %vm671, %v484, 0
      %v907 = vsel %vm671, %v485, 0
      %v910 = vsel %vm671, %v486, 0
      %v913 = vsel %vm671, %v487, 0
      %v916 = vsel %vm671, %v488, 0
      %v919 = vsel %vm671, %v489, 0
      %v922 = vsel %vm671, %v490, 0
      %v925 = vsel %vm671, %v491, 0
      %v928 = vsel %vm671, %v492, 0
      %v931 = vsel %vm671, %v493, 0
      %v934 = vsel %vm671, %v494, 0
      %v937 = vsel %vm671, %v495, 0
      %v940 = vsel %vm671, %v496, 0
      %v943 = vsel %vm671, %v497, 0
      %v946 = vsel %vm671, %v498, 0
      %v949 = vsel %vm671, %v499, 0
      %v952 = vsel %vm671, %v500, 0
      %v955 = vsel %vm671, %v501, 0
      %v958 = vsel %vm671, %v502, 0
      %v961 = vsel %vm671, %v503, 0
      %v964 = vsel %vm671, %v504, 0
      %v967 = vsel %vm671, %v505, 0
      %v970 = vsel %vm671, %v506, 0
      %v973 = vsel %vm671, %v507, 0
      %v976 = vsel %vm671, %v508, 0
      %v979 = vsel %vm671, %v509, 0
      %v982 = vsel %vm671, %v510, 0
      %v985 = vsel %vm671, %v511, 0
      %v988 = vsel %vm671, %v512, 0
      %v991 = vsel %vm671, %v513, 0
      %v994 = vsel %vm671, %v514, 0
      %v997 = vsel %vm671, %v515, 0
      %v1000 = vsel %vm671, %v516, 0
      %v1003 = vsel %vm671, %v517, 0
      %v1006 = vsel %vm671, %v518, 0
      %v1009 = vsel %vm671, %v519, 0
      %v1012 = vsel %vm671, %v520, 0
      %v1015 = vsel %vm671, %v521, 0
      %v1018 = vsel %vm671, %v522, 0
      %v1021 = vsel %vm671, %v523, 0
      %v1024 = vsel %vm671, %v524, 0
      %v1027 = vsel %vm671, %v525, 0
      %v1030 = vsel %vm671, %v526, 0
      %v1033 = vsel %vm671, %v527, 0
      %v1036 = vsel %vm671, %v528, 0
      %v1039 = vsel %vm671, %v529, 0
      %v1042 = vsel %vm671, %v530, 0
      %v1045 = vsel %vm671, %v531, 0
      %v1048 = vsel %vm671, %v532, 0
      %v1051 = vsel %vm671, %v533, 0
      %v1054 = vsel %vm671, %v534, 0
      %v1057 = vsel %vm671, %v535, 0
      %v1060 = vsel %vm671, %v536, 0
      %v1063 = vsel %vm671, %v537, 0
      %v1066 = vsel %vm671, %v538, 0
      %v1069 = vsel %vm671, %v539, 0
      %v1072 = vsel %vm671, %v540, 0
      %v1075 = vsel %vm671, %v541, 0
      %v1078 = vsel %vm671, %v542, 0
      %v1081 = vsel %vm671, %v543, 0
      %v1084 = vsel %vm671, %v544, 0
      %v1087 = vsel %vm671, %v545, 0
      %v1090 = vsel %vm671, %v546, 0
      %v1093 = vsel %vm671, %v547, 0
      %v1096 = vsel %vm671, %v548, 0
      %v1099 = vsel %vm671, %v549, 0
      %v1102 = vsel %vm671, %v550, 0
      %v1105 = vsel %vm671, %v551, 0
      %v1108 = vsel %vm671, %v552, 0
      %v1111 = vsel %vm671, %v553, 0
      %v1114 = vsel %vm671, %v554, 0
      %v1117 = vsel %vm671, %v555, 0
      %v1120 = vsel %vm671, %v556, 0
      %v1123 = vsel %vm671, %v557, 0
      %v1126 = vsel %vm671, %v558, 0
      %v1129 = vsel %vm671, %v559, 0
      %v1132 = vsel %vm671, %v560, 0
      %v1135 = vsel %vm671, %v561, 0
      %v1138 = vsel %vm671, %v562, 0
      %v1141 = vsel %vm671, %v563, 0
      %v1144 = vsel %vm671, %v564, 0
      %v1147 = vsel %vm671, %v565, 0
      %v1150 = vsel %vm671, %v566, 0
      %v1153 = vsel %vm671, %v567, 0
      %v1156 = vsel %vm671, %v568, 0
      %v1159 = vsel %vm671, %v569, 0
      %v1162 = vsel %vm671, %v570, 0
      %v1165 = vsel %vm671, %v571, 0
      %v1168 = vsel %vm671, %v572, 0
      %v1171 = vsel %vm671, %v573, 0
      %v1174 = vsel %vm671, %v574, 0
      %v1177 = vsel %vm671, %v575, 0
      %v1180 = vsel %vm671, %v576, 0
      %v1183 = vsel %vm671, %v577, 0
      %v1186 = vsel %vm671, %v578, 0
      %v1189 = vsel %vm671, %v579, 0
      %v1192 = vsel %vm671, %v580, 0
      %v1195 = vsel %vm671, %v581, 0
      %v1198 = vsel %vm671, %v582, 0
      %v1201 = vsel %vm671, %v583, 0
      %v1204 = vsel %vm671, %v584, 0
      %v1207 = vsel %vm671, %v585, 0
      %v1210 = vsel %vm671, %v586, 0
      %v1213 = vsel %vm671, %v587, 0
      %v1216 = vsel %vm671, %v588, 0
      %v1219 = vsel %vm671, %v589, 0
      %v1222 = vsel %vm671, %v590, 0
      %v1225 = vsel %vm671, %v591, 0
      %v1228 = vsel %vm671, %v592, 0
      %v1231 = vsel %vm671, %v593, 0
      %v1234 = vsel %vm671, %v594, 0
      %v1237 = vsel %vm671, %v595, 0
      %v1240 = vsel %vm671, %v596, 0
      %v1243 = vsel %vm671, %v597, 0
      %v1246 = vsel %vm671, %v598, 0
      %v1249 = vsel %vm671, %v599, 0
      %v1252 = vsel %vm671, %v600, 0
      %v1255 = vsel %vm671, %v601, 0
      %v1258 = vsel %vm671, %v602, 0
      %v1261 = vsel %vm671, %v603, 0
      %v1264 = vsel %vm671, %v604, 0
      %v1267 = vsel %vm671, %v605, 0
      %v1270 = vsel %vm671, %v606, 0
      %v1273 = vsel %vm671, %v607, 0
      %v1276 = vsel %vm671, %v608, 0
      %v1279 = vsel %vm671, %v609, 0
      %v1282 = vsel %vm671, %v610, 0
      %v1285 = vsel %vm671, %v611, 0
      %v1288 = vsel %vm671, %v612, 0
      %v1291 = vsel %vm671, %v613, 0
      %v1294 = vsel %vm671, %v614, 0
      %v1297 = vsel %vm671, %v615, 0
      %v1300 = vsel %vm671, %v616, 0
      %v1303 = vsel %vm671, %v617, 0
      %v1306 = vsel %vm671, %v618, 0
      %v1309 = vsel %vm671, %v619, 0
      %v1312 = vsel %vm671, %v620, 0
      %v1315 = vsel %vm671, %v621, 0
      %v1318 = vsel %vm671, %v622, 0
      %v1321 = vsel %vm671, %v623, 0
      %v1324 = vsel %vm671, %v624, 0
      %v1327 = vsel %vm671, %v625, 0
      %v1330 = vsel %vm671, %v626, 0
      %v1333 = vsel %vm671, %v627, 0
      %v1336 = vsel %vm671, %v628, 0
      %v1339 = vsel %vm671, %v629, 0
      %v1342 = vsel %vm671, %v630, 0
      %v1345 = vsel %vm671, %v631, 0
      %v1348 = vsel %vm671, %v632, 0
      %v1351 = vsel %vm671, %v633, 0
      %v1354 = vsel %vm671, %v634, 0
      %v1357 = vsel %vm671, %v635, 0
      %v1360 = vsel %vm671, %v636, 0
      %v1363 = vsel %vm671, %v637, 0
      %v1366 = vsel %vm671, %v638, 0
      %v1369 = vsel %vm671, %v639, 0
      %v1372 = vsel %vm671, %v640, 0
      %v1375 = vsel %vm671, %v641, 0
      %v1378 = vsel %vm671, %v642, 0
      %v1381 = vsel %vm671, %v643, 0
      %v1384 = vsel %vm671, %v644, 0
      %v1387 = vsel %vm671, %v645, 0
      %v1390 = vsel %vm671, %v646, 0
      %v1393 = vsel %vm671, %v647, 0
      %v1396 = vsel %vm671, %v648, 0
      %v1399 = vsel %vm671, %v649, 0
      %v1402 = vsel %vm671, %v650, 0
      %v1405 = vsel %vm671, %v651, 0
      %v1408 = vsel %vm671, %v652, 0
      %v1411 = vsel %vm671, %v653, 0
      %v1414 = vsel %vm671, %v654, 0
      %v1417 = vsel %vm671, %v655, 0
      %v1420 = vsel %vm671, %v656, 0
      %v1423 = vsel %vm671, %v657, 0
      %v1426 = vsel %vm671, %v658, 0
      %v1429 = vsel %vm671, %v659, 0
      %v1432 = vsel %vm671, %v660, 0
      %v1435 = vsel %vm671, %v661, 0
      %v1438 = vsel %vm671, %v662, 0
      %vm1440 = vcmask 1042432
      %v1442 = vsel %vm1440, %v666, 0
      %1444 = vmatpush.msra.mxu0 0.0
      %1445 = vmatpush.msra.mxu0 0.0
      %1446 = vmatpush.msra.mxu0 0.0
      %1447 = vmatpush.msra.mxu0 0.0
      %1448 = vmatpush.msra.mxu0 0.0
      %1449 = vmatpush.msra.mxu0 0.0
      %1450 = vmatpush.msra.mxu0 0.0
      %1451 = vmatpush.msra.mxu0 0.0
      %1452 = vmatpush.msra.mxu0 0.0
      %1453 = vmatpush.msra.mxu0 0.0
      %1454 = vmatpush.msra.mxu0 0.0
      %1455 = vmatpush.msra.mxu0 0.0
      %1456 = vmatpush.msra.mxu0 %v1442
      %1457 = vmatpush.msra.mxu0 %v665
      %1458 = vmatpush.msra.mxu0 %v664
      %1459 = vmatpush.msra.mxu0 %v663
      %1460 = vmatmul.f32.gmra.mxu0 %v673
      %v1461 = vpop.f32.mrf.mxu0
      %v1462 = vadd.f32 %v669, %v1461
      %1463 = vmatmul.f32.gmra.mxu0 %v676
      %v1464 = vpop.f32.mrf.mxu0
      %v1465 = vadd.f32 %v669, %v1464
      %1466 = vmatmul.f32.gmra.mxu0 %v679
      %v1467 = vpop.f32.mrf.mxu0
      %v1468 = vadd.f32 %v669, %v1467
      %1469 = vmatmul.f32.gmra.mxu0 %v682
      %v1470 = vpop.f32.mrf.mxu0
      %v1471 = vadd.f32 %v669, %v1470
      %1472 = vmatmul.f32.gmra.mxu0 %v685
      %v1473 = vpop.f32.mrf.mxu0
      %v1474 = vadd.f32 %v669, %v1473
      %1475 = vmatmul.f32.gmra.mxu0 %v688
      %v1476 = vpop.f32.mrf.mxu0
      %v1477 = vadd.f32 %v669, %v1476
      %1478 = vmatmul.f32.gmra.mxu0 %v691
      %v1479 = vpop.f32.mrf.mxu0
      %v1480 = vadd.f32 %v669, %v1479
      %1481 = vmatmul.f32.gmra.mxu0 %v694
      %v1482 = vpop.f32.mrf.mxu0
      %v1483 = vadd.f32 %v669, %v1482
      %1484 = vmatmul.f32.gmra.mxu0 %v697
      %v1485 = vpop.f32.mrf.mxu0
      %v1486 = vadd.f32 %v669, %v1485
      %1487 = vmatmul.f32.gmra.mxu0 %v700
      %v1488 = vpop.f32.mrf.mxu0
      %v1489 = vadd.f32 %v669, %v1488
      %1490 = vmatmul.f32.gmra.mxu0 %v703
      %v1491 = vpop.f32.mrf.mxu0
      %v1492 = vadd.f32 %v669, %v1491
      %1493 = vmatmul.f32.gmra.mxu0 %v706
      %v1494 = vpop.f32.mrf.mxu0
      %v1495 = vadd.f32 %v669, %v1494
      %1496 = vmatmul.f32.gmra.mxu0 %v709
      %v1497 = vpop.f32.mrf.mxu0
      %v1498 = vadd.f32 %v669, %v1497
      %1499 = vmatmul.f32.gmra.mxu0 %v712
      %v1500 = vpop.f32.mrf.mxu0
      %v1501 = vadd.f32 %v669, %v1500
      %1502 = vmatmul.f32.gmra.mxu0 %v715
      %v1503 = vpop.f32.mrf.mxu0
      %v1504 = vadd.f32 %v669, %v1503
      %1505 = vmatmul.f32.gmra.mxu0 %v718
      %v1506 = vpop.f32.mrf.mxu0
      %v1507 = vadd.f32 %v669, %v1506
      %1508 = vmatmul.f32.gmra.mxu0 %v721
      %v1509 = vpop.f32.mrf.mxu0
      %v1510 = vadd.f32 %v669, %v1509
      %1511 = vmatmul.f32.gmra.mxu0 %v724
      %v1512 = vpop.f32.mrf.mxu0
      %v1513 = vadd.f32 %v669, %v1512
      %1514 = vmatmul.f32.gmra.mxu0 %v727
      %v1515 = vpop.f32.mrf.mxu0
      %v1516 = vadd.f32 %v669, %v1515
      %1517 = vmatmul.f32.gmra.mxu0 %v730
      %v1518 = vpop.f32.mrf.mxu0
      %v1519 = vadd.f32 %v669, %v1518
      %1520 = vmatmul.f32.gmra.mxu0 %v733
      %v1521 = vpop.f32.mrf.mxu0
      %v1522 = vadd.f32 %v669, %v1521
      %1523 = vmatmul.f32.gmra.mxu0 %v736
      %v1524 = vpop.f32.mrf.mxu0
      %v1525 = vadd.f32 %v669, %v1524
      %1526 = vmatmul.f32.gmra.mxu0 %v739
      %v1527 = vpop.f32.mrf.mxu0
      %v1528 = vadd.f32 %v669, %v1527
      %1529 = vmatmul.f32.gmra.mxu0 %v742
      %v1530 = vpop.f32.mrf.mxu0
      %v1531 = vadd.f32 %v669, %v1530
      %1532 = vmatmul.f32.gmra.mxu0 %v745
      %v1533 = vpop.f32.mrf.mxu0
      %v1534 = vadd.f32 %v669, %v1533
      %1535 = vmatmul.f32.gmra.mxu0 %v748
      %v1536 = vpop.f32.mrf.mxu0
      %v1537 = vadd.f32 %v669, %v1536
      %1538 = vmatmul.f32.gmra.mxu0 %v751
      %v1539 = vpop.f32.mrf.mxu0
      %v1540 = vadd.f32 %v669, %v1539
      %1541 = vmatmul.f32.gmra.mxu0 %v754
      %v1542 = vpop.f32.mrf.mxu0
      %v1543 = vadd.f32 %v669, %v1542
      %1544 = vmatmul.f32.gmra.mxu0 %v757
      %v1545 = vpop.f32.mrf.mxu0
      %v1546 = vadd.f32 %v669, %v1545
      %1547 = vmatmul.f32.gmra.mxu0 %v760
      %v1548 = vpop.f32.mrf.mxu0
      %v1549 = vadd.f32 %v669, %v1548
      %1550 = vmatmul.f32.gmra.mxu0 %v763
      %v1551 = vpop.f32.mrf.mxu0
      %v1552 = vadd.f32 %v669, %v1551
      %1553 = vmatmul.f32.gmra.mxu0 %v766
      %v1554 = vpop.f32.mrf.mxu0
      %v1555 = vadd.f32 %v669, %v1554
      %1556 = vmatmul.f32.gmra.mxu0 %v769
      %v1557 = vpop.f32.mrf.mxu0
      %v1558 = vadd.f32 %v669, %v1557
      %1559 = vmatmul.f32.gmra.mxu0 %v772
      %v1560 = vpop.f32.mrf.mxu0
      %v1561 = vadd.f32 %v669, %v1560
      %1562 = vmatmul.f32.gmra.mxu0 %v775
      %v1563 = vpop.f32.mrf.mxu0
      %v1564 = vadd.f32 %v669, %v1563
      %1565 = vmatmul.f32.gmra.mxu0 %v778
      %v1566 = vpop.f32.mrf.mxu0
      %v1567 = vadd.f32 %v669, %v1566
      %1568 = vmatmul.f32.gmra.mxu0 %v781
      %v1569 = vpop.f32.mrf.mxu0
      %v1570 = vadd.f32 %v669, %v1569
      %1571 = vmatmul.f32.gmra.mxu0 %v784
      %v1572 = vpop.f32.mrf.mxu0
      %v1573 = vadd.f32 %v669, %v1572
      %1574 = vmatmul.f32.gmra.mxu0 %v787
      %v1575 = vpop.f32.mrf.mxu0
      %v1576 = vadd.f32 %v669, %v1575
      %1577 = vmatmul.f32.gmra.mxu0 %v790
      %v1578 = vpop.f32.mrf.mxu0
      %v1579 = vadd.f32 %v669, %v1578
      %1580 = vmatmul.f32.gmra.mxu0 %v793
      %v1581 = vpop.f32.mrf.mxu0
      %v1582 = vadd.f32 %v669, %v1581
      %1583 = vmatmul.f32.gmra.mxu0 %v796
      %v1584 = vpop.f32.mrf.mxu0
      %v1585 = vadd.f32 %v669, %v1584
      %1586 = vmatmul.f32.gmra.mxu0 %v799
      %v1587 = vpop.f32.mrf.mxu0
      %v1588 = vadd.f32 %v669, %v1587
      %1589 = vmatmul.f32.gmra.mxu0 %v802
      %v1590 = vpop.f32.mrf.mxu0
      %v1591 = vadd.f32 %v669, %v1590
      %1592 = vmatmul.f32.gmra.mxu0 %v805
      %v1593 = vpop.f32.mrf.mxu0
      %v1594 = vadd.f32 %v669, %v1593
      %1595 = vmatmul.f32.gmra.mxu0 %v808
      %v1596 = vpop.f32.mrf.mxu0
      %v1597 = vadd.f32 %v669, %v1596
      %1598 = vmatmul.f32.gmra.mxu0 %v811
      %v1599 = vpop.f32.mrf.mxu0
      %v1600 = vadd.f32 %v669, %v1599
      %1601 = vmatmul.f32.gmra.mxu0 %v814
      %v1602 = vpop.f32.mrf.mxu0
      %v1603 = vadd.f32 %v669, %v1602
      %1604 = vmatmul.f32.gmra.mxu0 %v817
      %v1605 = vpop.f32.mrf.mxu0
      %v1606 = vadd.f32 %v669, %v1605
      %1607 = vmatmul.f32.gmra.mxu0 %v820
      %v1608 = vpop.f32.mrf.mxu0
      %v1609 = vadd.f32 %v669, %v1608
      %1610 = vmatmul.f32.gmra.mxu0 %v823
      %v1611 = vpop.f32.mrf.mxu0
      %v1612 = vadd.f32 %v669, %v1611
      %1613 = vmatmul.f32.gmra.mxu0 %v826
      %v1614 = vpop.f32.mrf.mxu0
      %v1615 = vadd.f32 %v669, %v1614
      %1616 = vmatmul.f32.gmra.mxu0 %v829
      %v1617 = vpop.f32.mrf.mxu0
      %v1618 = vadd.f32 %v669, %v1617
      %1619 = vmatmul.f32.gmra.mxu0 %v832
      %v1620 = vpop.f32.mrf.mxu0
      %v1621 = vadd.f32 %v669, %v1620
      %1622 = vmatmul.f32.gmra.mxu0 %v835
      %v1623 = vpop.f32.mrf.mxu0
      %v1624 = vadd.f32 %v669, %v1623
      %1625 = vmatmul.f32.gmra.mxu0 %v838
      %v1626 = vpop.f32.mrf.mxu0
      %v1627 = vadd.f32 %v669, %v1626
      %1628 = vmatmul.f32.gmra.mxu0 %v841
      %v1629 = vpop.f32.mrf.mxu0
      %v1630 = vadd.f32 %v669, %v1629
      %1631 = vmatmul.f32.gmra.mxu0 %v844
      %v1632 = vpop.f32.mrf.mxu0
      %v1633 = vadd.f32 %v669, %v1632
      %1634 = vmatmul.f32.gmra.mxu0 %v847
      %v1635 = vpop.f32.mrf.mxu0
      %v1636 = vadd.f32 %v669, %v1635
      %1637 = vmatmul.f32.gmra.mxu0 %v850
      %v1638 = vpop.f32.mrf.mxu0
      %v1639 = vadd.f32 %v669, %v1638
      %1640 = vmatmul.f32.gmra.mxu0 %v853
      %v1641 = vpop.f32.mrf.mxu0
      %v1642 = vadd.f32 %v669, %v1641
      %1643 = vmatmul.f32.gmra.mxu0 %v856
      %v1644 = vpop.f32.mrf.mxu0
      %v1645 = vadd.f32 %v669, %v1644
      %1646 = vmatmul.f32.gmra.mxu0 %v859
      %v1647 = vpop.f32.mrf.mxu0
      %v1648 = vadd.f32 %v669, %v1647
      %1649 = vmatmul.f32.gmra.mxu0 %v862
      %v1650 = vpop.f32.mrf.mxu0
      %v1651 = vadd.f32 %v669, %v1650
      %1652 = vmatmul.f32.gmra.mxu0 %v865
      %v1653 = vpop.f32.mrf.mxu0
      %v1654 = vadd.f32 %v669, %v1653
      %1655 = vmatmul.f32.gmra.mxu0 %v868
      %v1656 = vpop.f32.mrf.mxu0
      %v1657 = vadd.f32 %v669, %v1656
      %1658 = vmatmul.f32.gmra.mxu0 %v871
      %v1659 = vpop.f32.mrf.mxu0
      %v1660 = vadd.f32 %v669, %v1659
      %1661 = vmatmul.f32.gmra.mxu0 %v874
      %v1662 = vpop.f32.mrf.mxu0
      %v1663 = vadd.f32 %v669, %v1662
      %1664 = vmatmul.f32.gmra.mxu0 %v877
      %v1665 = vpop.f32.mrf.mxu0
      %v1666 = vadd.f32 %v669, %v1665
      %1667 = vmatmul.f32.gmra.mxu0 %v880
      %v1668 = vpop.f32.mrf.mxu0
      %v1669 = vadd.f32 %v669, %v1668
      %1670 = vmatmul.f32.gmra.mxu0 %v883
      %v1671 = vpop.f32.mrf.mxu0
      %v1672 = vadd.f32 %v669, %v1671
      %1673 = vmatmul.f32.gmra.mxu0 %v886
      %v1674 = vpop.f32.mrf.mxu0
      %v1675 = vadd.f32 %v669, %v1674
      %1676 = vmatmul.f32.gmra.mxu0 %v889
      %v1677 = vpop.f32.mrf.mxu0
      %v1678 = vadd.f32 %v669, %v1677
      %1679 = vmatmul.f32.gmra.mxu0 %v892
      %v1680 = vpop.f32.mrf.mxu0
      %v1681 = vadd.f32 %v669, %v1680
      %1682 = vmatmul.f32.gmra.mxu0 %v895
      %v1683 = vpop.f32.mrf.mxu0
      %v1684 = vadd.f32 %v669, %v1683
      %1685 = vmatmul.f32.gmra.mxu0 %v898
      %v1686 = vpop.f32.mrf.mxu0
      %v1687 = vadd.f32 %v669, %v1686
      %1688 = vmatmul.f32.gmra.mxu0 %v901
      %v1689 = vpop.f32.mrf.mxu0
      %v1690 = vadd.f32 %v669, %v1689
      %1691 = vmatmul.f32.gmra.mxu0 %v904
      %v1692 = vpop.f32.mrf.mxu0
      %v1693 = vadd.f32 %v669, %v1692
      %1694 = vmatmul.f32.gmra.mxu0 %v907
      %v1695 = vpop.f32.mrf.mxu0
      %v1696 = vadd.f32 %v669, %v1695
      %1697 = vmatmul.f32.gmra.mxu0 %v910
      %v1698 = vpop.f32.mrf.mxu0
      %v1699 = vadd.f32 %v669, %v1698
      %1700 = vmatmul.f32.gmra.mxu0 %v913
      %v1701 = vpop.f32.mrf.mxu0
      %v1702 = vadd.f32 %v669, %v1701
      %1703 = vmatmul.f32.gmra.mxu0 %v916
      %v1704 = vpop.f32.mrf.mxu0
      %v1705 = vadd.f32 %v669, %v1704
      %1706 = vmatmul.f32.gmra.mxu0 %v919
      %v1707 = vpop.f32.mrf.mxu0
      %v1708 = vadd.f32 %v669, %v1707
      %1709 = vmatmul.f32.gmra.mxu0 %v922
      %v1710 = vpop.f32.mrf.mxu0
      %v1711 = vadd.f32 %v669, %v1710
      %1712 = vmatmul.f32.gmra.mxu0 %v925
      %v1713 = vpop.f32.mrf.mxu0
      %v1714 = vadd.f32 %v669, %v1713
      %1715 = vmatmul.f32.gmra.mxu0 %v928
      %v1716 = vpop.f32.mrf.mxu0
      %v1717 = vadd.f32 %v669, %v1716
      %1718 = vmatmul.f32.gmra.mxu0 %v931
      %v1719 = vpop.f32.mrf.mxu0
      %v1720 = vadd.f32 %v669, %v1719
      %1721 = vmatmul.f32.gmra.mxu0 %v934
      %v1722 = vpop.f32.mrf.mxu0
      %v1723 = vadd.f32 %v669, %v1722
      %1724 = vmatmul.f32.gmra.mxu0 %v937
      %v1725 = vpop.f32.mrf.mxu0
      %v1726 = vadd.f32 %v669, %v1725
      %1727 = vmatmul.f32.gmra.mxu0 %v940
      %v1728 = vpop.f32.mrf.mxu0
      %v1729 = vadd.f32 %v669, %v1728
      %1730 = vmatmul.f32.gmra.mxu0 %v943
      %v1731 = vpop.f32.mrf.mxu0
      %v1732 = vadd.f32 %v669, %v1731
      %1733 = vmatmul.f32.gmra.mxu0 %v946
      %v1734 = vpop.f32.mrf.mxu0
      %v1735 = vadd.f32 %v669, %v1734
      %1736 = vmatmul.f32.gmra.mxu0 %v949
      %v1737 = vpop.f32.mrf.mxu0
      %v1738 = vadd.f32 %v669, %v1737
      %1739 = vmatmul.f32.gmra.mxu0 %v952
      %v1740 = vpop.f32.mrf.mxu0
      %v1741 = vadd.f32 %v669, %v1740
      %1742 = vmatmul.f32.gmra.mxu0 %v955
      %v1743 = vpop.f32.mrf.mxu0
      %v1744 = vadd.f32 %v669, %v1743
      %1745 = vmatmul.f32.gmra.mxu0 %v958
      %v1746 = vpop.f32.mrf.mxu0
      %v1747 = vadd.f32 %v669, %v1746
      %1748 = vmatmul.f32.gmra.mxu0 %v961
      %v1749 = vpop.f32.mrf.mxu0
      %v1750 = vadd.f32 %v669, %v1749
      %1751 = vmatmul.f32.gmra.mxu0 %v964
      %v1752 = vpop.f32.mrf.mxu0
      %v1753 = vadd.f32 %v669, %v1752
      %1754 = vmatmul.f32.gmra.mxu0 %v967
      %v1755 = vpop.f32.mrf.mxu0
      %v1756 = vadd.f32 %v669, %v1755
      %1757 = vmatmul.f32.gmra.mxu0 %v970
      %v1758 = vpop.f32.mrf.mxu0
      %v1759 = vadd.f32 %v669, %v1758
      %1760 = vmatmul.f32.gmra.mxu0 %v973
      %v1761 = vpop.f32.mrf.mxu0
      %v1762 = vadd.f32 %v669, %v1761
      %1763 = vmatmul.f32.gmra.mxu0 %v976
      %v1764 = vpop.f32.mrf.mxu0
      %v1765 = vadd.f32 %v669, %v1764
      %1766 = vmatmul.f32.gmra.mxu0 %v979
      %v1767 = vpop.f32.mrf.mxu0
      %v1768 = vadd.f32 %v669, %v1767
      %1769 = vmatmul.f32.gmra.mxu0 %v982
      %v1770 = vpop.f32.mrf.mxu0
      %v1771 = vadd.f32 %v669, %v1770
      %1772 = vmatmul.f32.gmra.mxu0 %v985
      %v1773 = vpop.f32.mrf.mxu0
      %v1774 = vadd.f32 %v669, %v1773
      %1775 = vmatmul.f32.gmra.mxu0 %v988
      %v1776 = vpop.f32.mrf.mxu0
      %v1777 = vadd.f32 %v669, %v1776
      %1778 = vmatmul.f32.gmra.mxu0 %v991
      %v1779 = vpop.f32.mrf.mxu0
      %v1780 = vadd.f32 %v669, %v1779
      %1781 = vmatmul.f32.gmra.mxu0 %v994
      %v1782 = vpop.f32.mrf.mxu0
      %v1783 = vadd.f32 %v669, %v1782
      %1784 = vmatmul.f32.gmra.mxu0 %v997
      %v1785 = vpop.f32.mrf.mxu0
      %v1786 = vadd.f32 %v669, %v1785
      %1787 = vmatmul.f32.gmra.mxu0 %v1000
      %v1788 = vpop.f32.mrf.mxu0
      %v1789 = vadd.f32 %v669, %v1788
      %1790 = vmatmul.f32.gmra.mxu0 %v1003
      %v1791 = vpop.f32.mrf.mxu0
      %v1792 = vadd.f32 %v669, %v1791
      %1793 = vmatmul.f32.gmra.mxu0 %v1006
      %v1794 = vpop.f32.mrf.mxu0
      %v1795 = vadd.f32 %v669, %v1794
      %1796 = vmatmul.f32.gmra.mxu0 %v1009
      %v1797 = vpop.f32.mrf.mxu0
      %v1798 = vadd.f32 %v669, %v1797
      %1799 = vmatmul.f32.gmra.mxu0 %v1012
      %v1800 = vpop.f32.mrf.mxu0
      %v1801 = vadd.f32 %v669, %v1800
      %1802 = vmatmul.f32.gmra.mxu0 %v1015
      %v1803 = vpop.f32.mrf.mxu0
      %v1804 = vadd.f32 %v669, %v1803
      %1805 = vmatmul.f32.gmra.mxu0 %v1018
      %v1806 = vpop.f32.mrf.mxu0
      %v1807 = vadd.f32 %v669, %v1806
      %1808 = vmatmul.f32.gmra.mxu0 %v1021
      %v1809 = vpop.f32.mrf.mxu0
      %v1810 = vadd.f32 %v669, %v1809
      %1811 = vmatmul.f32.gmra.mxu0 %v1024
      %v1812 = vpop.f32.mrf.mxu0
      %v1813 = vadd.f32 %v669, %v1812
      %1814 = vmatmul.f32.gmra.mxu0 %v1027
      %v1815 = vpop.f32.mrf.mxu0
      %v1816 = vadd.f32 %v669, %v1815
      %1817 = vmatmul.f32.gmra.mxu0 %v1030
      %v1818 = vpop.f32.mrf.mxu0
      %v1819 = vadd.f32 %v669, %v1818
      %1820 = vmatmul.f32.gmra.mxu0 %v1033
      %v1821 = vpop.f32.mrf.mxu0
      %v1822 = vadd.f32 %v669, %v1821
      %1823 = vmatmul.f32.gmra.mxu0 %v1036
      %v1824 = vpop.f32.mrf.mxu0
      %v1825 = vadd.f32 %v669, %v1824
      %1826 = vmatmul.f32.gmra.mxu0 %v1039
      %v1827 = vpop.f32.mrf.mxu0
      %v1828 = vadd.f32 %v669, %v1827
      %1829 = vmatmul.f32.gmra.mxu0 %v1042
      %v1830 = vpop.f32.mrf.mxu0
      %v1831 = vadd.f32 %v669, %v1830
      %1832 = vmatmul.f32.gmra.mxu0 %v1045
      %v1833 = vpop.f32.mrf.mxu0
      %v1834 = vadd.f32 %v669, %v1833
      %1835 = vmatmul.f32.gmra.mxu0 %v1048
      %v1836 = vpop.f32.mrf.mxu0
      %v1837 = vadd.f32 %v669, %v1836
      %1838 = vmatmul.f32.gmra.mxu0 %v1051
      %v1839 = vpop.f32.mrf.mxu0
      %v1840 = vadd.f32 %v669, %v1839
      %1841 = vmatmul.f32.gmra.mxu0 %v1054
      %v1842 = vpop.f32.mrf.mxu0
      %v1843 = vadd.f32 %v669, %v1842
      %1844 = vmatmul.f32.gmra.mxu0 %v1057
      %v1845 = vpop.f32.mrf.mxu0
      %v1846 = vadd.f32 %v669, %v1845
      %1847 = vmatmul.f32.gmra.mxu0 %v1060
      %v1848 = vpop.f32.mrf.mxu0
      %v1849 = vadd.f32 %v669, %v1848
      %1850 = vmatmul.f32.gmra.mxu0 %v1063
      %v1851 = vpop.f32.mrf.mxu0
      %v1852 = vadd.f32 %v669, %v1851
      %1853 = vmatmul.f32.gmra.mxu0 %v1066
      %v1854 = vpop.f32.mrf.mxu0
      %v1855 = vadd.f32 %v669, %v1854
      %1856 = vmatmul.f32.gmra.mxu0 %v1069
      %v1857 = vpop.f32.mrf.mxu0
      %v1858 = vadd.f32 %v669, %v1857
      %1859 = vmatmul.f32.gmra.mxu0 %v1072
      %v1860 = vpop.f32.mrf.mxu0
      %v1861 = vadd.f32 %v669, %v1860
      %1862 = vmatmul.f32.gmra.mxu0 %v1075
      %v1863 = vpop.f32.mrf.mxu0
      %v1864 = vadd.f32 %v669, %v1863
      %1865 = vmatmul.f32.gmra.mxu0 %v1078
      %v1866 = vpop.f32.mrf.mxu0
      %v1867 = vadd.f32 %v669, %v1866
      %1868 = vmatmul.f32.gmra.mxu0 %v1081
      %v1869 = vpop.f32.mrf.mxu0
      %v1870 = vadd.f32 %v669, %v1869
      %1871 = vmatmul.f32.gmra.mxu0 %v1084
      %v1872 = vpop.f32.mrf.mxu0
      %v1873 = vadd.f32 %v669, %v1872
      %1874 = vmatmul.f32.gmra.mxu0 %v1087
      %v1875 = vpop.f32.mrf.mxu0
      %v1876 = vadd.f32 %v669, %v1875
      %1877 = vmatmul.f32.gmra.mxu0 %v1090
      %v1878 = vpop.f32.mrf.mxu0
      %v1879 = vadd.f32 %v669, %v1878
      %1880 = vmatmul.f32.gmra.mxu0 %v1093
      %v1881 = vpop.f32.mrf.mxu0
      %v1882 = vadd.f32 %v669, %v1881
      %1883 = vmatmul.f32.gmra.mxu0 %v1096
      %v1884 = vpop.f32.mrf.mxu0
      %v1885 = vadd.f32 %v669, %v1884
      %1886 = vmatmul.f32.gmra.mxu0 %v1099
      %v1887 = vpop.f32.mrf.mxu0
      %v1888 = vadd.f32 %v669, %v1887
      %1889 = vmatmul.f32.gmra.mxu0 %v1102
      %v1890 = vpop.f32.mrf.mxu0
      %v1891 = vadd.f32 %v669, %v1890
      %1892 = vmatmul.f32.gmra.mxu0 %v1105
      %v1893 = vpop.f32.mrf.mxu0
      %v1894 = vadd.f32 %v669, %v1893
      %1895 = vmatmul.f32.gmra.mxu0 %v1108
      %v1896 = vpop.f32.mrf.mxu0
      %v1897 = vadd.f32 %v669, %v1896
      %1898 = vmatmul.f32.gmra.mxu0 %v1111
      %v1899 = vpop.f32.mrf.mxu0
      %v1900 = vadd.f32 %v669, %v1899
      %1901 = vmatmul.f32.gmra.mxu0 %v1114
      %v1902 = vpop.f32.mrf.mxu0
      %v1903 = vadd.f32 %v669, %v1902
      %1904 = vmatmul.f32.gmra.mxu0 %v1117
      %v1905 = vpop.f32.mrf.mxu0
      %v1906 = vadd.f32 %v669, %v1905
      %1907 = vmatmul.f32.gmra.mxu0 %v1120
      %v1908 = vpop.f32.mrf.mxu0
      %v1909 = vadd.f32 %v669, %v1908
      %1910 = vmatmul.f32.gmra.mxu0 %v1123
      %v1911 = vpop.f32.mrf.mxu0
      %v1912 = vadd.f32 %v669, %v1911
      %1913 = vmatmul.f32.gmra.mxu0 %v1126
      %v1914 = vpop.f32.mrf.mxu0
      %v1915 = vadd.f32 %v669, %v1914
      %1916 = vmatmul.f32.gmra.mxu0 %v1129
      %v1917 = vpop.f32.mrf.mxu0
      %v1918 = vadd.f32 %v669, %v1917
      %1919 = vmatmul.f32.gmra.mxu0 %v1132
      %v1920 = vpop.f32.mrf.mxu0
      %v1921 = vadd.f32 %v669, %v1920
      %1922 = vmatmul.f32.gmra.mxu0 %v1135
      %v1923 = vpop.f32.mrf.mxu0
      %v1924 = vadd.f32 %v669, %v1923
      %1925 = vmatmul.f32.gmra.mxu0 %v1138
      %v1926 = vpop.f32.mrf.mxu0
      %v1927 = vadd.f32 %v669, %v1926
      %1928 = vmatmul.f32.gmra.mxu0 %v1141
      %v1929 = vpop.f32.mrf.mxu0
      %v1930 = vadd.f32 %v669, %v1929
      %1931 = vmatmul.f32.gmra.mxu0 %v1144
      %v1932 = vpop.f32.mrf.mxu0
      %v1933 = vadd.f32 %v669, %v1932
      %1934 = vmatmul.f32.gmra.mxu0 %v1147
      %v1935 = vpop.f32.mrf.mxu0
      %v1936 = vadd.f32 %v669, %v1935
      %1937 = vmatmul.f32.gmra.mxu0 %v1150
      %v1938 = vpop.f32.mrf.mxu0
      %v1939 = vadd.f32 %v669, %v1938
      %1940 = vmatmul.f32.gmra.mxu0 %v1153
      %v1941 = vpop.f32.mrf.mxu0
      %v1942 = vadd.f32 %v669, %v1941
      %1943 = vmatmul.f32.gmra.mxu0 %v1156
      %v1944 = vpop.f32.mrf.mxu0
      %v1945 = vadd.f32 %v669, %v1944
      %1946 = vmatmul.f32.gmra.mxu0 %v1159
      %v1947 = vpop.f32.mrf.mxu0
      %v1948 = vadd.f32 %v669, %v1947
      %1949 = vmatmul.f32.gmra.mxu0 %v1162
      %v1950 = vpop.f32.mrf.mxu0
      %v1951 = vadd.f32 %v669, %v1950
      %1952 = vmatmul.f32.gmra.mxu0 %v1165
      %v1953 = vpop.f32.mrf.mxu0
      %v1954 = vadd.f32 %v669, %v1953
      %1955 = vmatmul.f32.gmra.mxu0 %v1168
      %v1956 = vpop.f32.mrf.mxu0
      %v1957 = vadd.f32 %v669, %v1956
      %1958 = vmatmul.f32.gmra.mxu0 %v1171
      %v1959 = vpop.f32.mrf.mxu0
      %v1960 = vadd.f32 %v669, %v1959
      %1961 = vmatmul.f32.gmra.mxu0 %v1174
      %v1962 = vpop.f32.mrf.mxu0
      %v1963 = vadd.f32 %v669, %v1962
      %1964 = vmatmul.f32.gmra.mxu0 %v1177
      %v1965 = vpop.f32.mrf.mxu0
      %v1966 = vadd.f32 %v669, %v1965
      %1967 = vmatmul.f32.gmra.mxu0 %v1180
      %v1968 = vpop.f32.mrf.mxu0
      %v1969 = vadd.f32 %v669, %v1968
      %1970 = vmatmul.f32.gmra.mxu0 %v1183
      %v1971 = vpop.f32.mrf.mxu0
      %v1972 = vadd.f32 %v669, %v1971
      %1973 = vmatmul.f32.gmra.mxu0 %v1186
      %v1974 = vpop.f32.mrf.mxu0
      %v1975 = vadd.f32 %v669, %v1974
      %1976 = vmatmul.f32.gmra.mxu0 %v1189
      %v1977 = vpop.f32.mrf.mxu0
      %v1978 = vadd.f32 %v669, %v1977
      %1979 = vmatmul.f32.gmra.mxu0 %v1192
      %v1980 = vpop.f32.mrf.mxu0
      %v1981 = vadd.f32 %v669, %v1980
      %1982 = vmatmul.f32.gmra.mxu0 %v1195
      %v1983 = vpop.f32.mrf.mxu0
      %v1984 = vadd.f32 %v669, %v1983
      %1985 = vmatmul.f32.gmra.mxu0 %v1198
      %v1986 = vpop.f32.mrf.mxu0
      %v1987 = vadd.f32 %v669, %v1986
      %1988 = vmatmul.f32.gmra.mxu0 %v1201
      %v1989 = vpop.f32.mrf.mxu0
      %v1990 = vadd.f32 %v669, %v1989
      %1991 = vmatmul.f32.gmra.mxu0 %v1204
      %v1992 = vpop.f32.mrf.mxu0
      %v1993 = vadd.f32 %v669, %v1992
      %1994 = vmatmul.f32.gmra.mxu0 %v1207
      %v1995 = vpop.f32.mrf.mxu0
      %v1996 = vadd.f32 %v669, %v1995
      %1997 = vmatmul.f32.gmra.mxu0 %v1210
      %v1998 = vpop.f32.mrf.mxu0
      %v1999 = vadd.f32 %v669, %v1998
      %2000 = vmatmul.f32.gmra.mxu0 %v1213
      %v2001 = vpop.f32.mrf.mxu0
      %v2002 = vadd.f32 %v669, %v2001
      %2003 = vmatmul.f32.gmra.mxu0 %v1216
      %v2004 = vpop.f32.mrf.mxu0
      %v2005 = vadd.f32 %v669, %v2004
      %2006 = vmatmul.f32.gmra.mxu0 %v1219
      %v2007 = vpop.f32.mrf.mxu0
      %v2008 = vadd.f32 %v669, %v2007
      %2009 = vmatmul.f32.gmra.mxu0 %v1222
      %v2010 = vpop.f32.mrf.mxu0
      %v2011 = vadd.f32 %v669, %v2010
      %2012 = vmatmul.f32.gmra.mxu0 %v1225
      %v2013 = vpop.f32.mrf.mxu0
      %v2014 = vadd.f32 %v669, %v2013
      %2015 = vmatmul.f32.gmra.mxu0 %v1228
      %v2016 = vpop.f32.mrf.mxu0
      %v2017 = vadd.f32 %v669, %v2016
      %2018 = vmatmul.f32.gmra.mxu0 %v1231
      %v2019 = vpop.f32.mrf.mxu0
      %v2020 = vadd.f32 %v669, %v2019
      %2021 = vmatmul.f32.gmra.mxu0 %v1234
      %v2022 = vpop.f32.mrf.mxu0
      %v2023 = vadd.f32 %v669, %v2022
      %2024 = vmatmul.f32.gmra.mxu0 %v1237
      %v2025 = vpop.f32.mrf.mxu0
      %v2026 = vadd.f32 %v669, %v2025
      %2027 = vmatmul.f32.gmra.mxu0 %v1240
      %v2028 = vpop.f32.mrf.mxu0
      %v2029 = vadd.f32 %v669, %v2028
      %2030 = vmatmul.f32.gmra.mxu0 %v1243
      %v2031 = vpop.f32.mrf.mxu0
      %v2032 = vadd.f32 %v669, %v2031
      %2033 = vmatmul.f32.gmra.mxu0 %v1246
      %v2034 = vpop.f32.mrf.mxu0
      %v2035 = vadd.f32 %v669, %v2034
      %2036 = vmatmul.f32.gmra.mxu0 %v1249
      %v2037 = vpop.f32.mrf.mxu0
      %v2038 = vadd.f32 %v669, %v2037
      %2039 = vmatmul.f32.gmra.mxu0 %v1252
      %v2040 = vpop.f32.mrf.mxu0
      %v2041 = vadd.f32 %v669, %v2040
      %2042 = vmatmul.f32.gmra.mxu0 %v1255
      %v2043 = vpop.f32.mrf.mxu0
      %v2044 = vadd.f32 %v669, %v2043
      %2045 = vmatmul.f32.gmra.mxu0 %v1258
      %v2046 = vpop.f32.mrf.mxu0
      %v2047 = vadd.f32 %v669, %v2046
      %2048 = vmatmul.f32.gmra.mxu0 %v1261
      %v2049 = vpop.f32.mrf.mxu0
      %v2050 = vadd.f32 %v669, %v2049
      %2051 = vmatmul.f32.gmra.mxu0 %v1264
      %v2052 = vpop.f32.mrf.mxu0
      %v2053 = vadd.f32 %v669, %v2052
      %2054 = vmatmul.f32.gmra.mxu0 %v1267
      %v2055 = vpop.f32.mrf.mxu0
      %v2056 = vadd.f32 %v669, %v2055
      %2057 = vmatmul.f32.gmra.mxu0 %v1270
      %v2058 = vpop.f32.mrf.mxu0
      %v2059 = vadd.f32 %v669, %v2058
      %2060 = vmatmul.f32.gmra.mxu0 %v1273
      %v2061 = vpop.f32.mrf.mxu0
      %v2062 = vadd.f32 %v669, %v2061
      %2063 = vmatmul.f32.gmra.mxu0 %v1276
      %v2064 = vpop.f32.mrf.mxu0
      %v2065 = vadd.f32 %v669, %v2064
      %2066 = vmatmul.f32.gmra.mxu0 %v1279
      %v2067 = vpop.f32.mrf.mxu0
      %v2068 = vadd.f32 %v669, %v2067
      %2069 = vmatmul.f32.gmra.mxu0 %v1282
      %v2070 = vpop.f32.mrf.mxu0
      %v2071 = vadd.f32 %v669, %v2070
      %2072 = vmatmul.f32.gmra.mxu0 %v1285
      %v2073 = vpop.f32.mrf.mxu0
      %v2074 = vadd.f32 %v669, %v2073
      %2075 = vmatmul.f32.gmra.mxu0 %v1288
      %v2076 = vpop.f32.mrf.mxu0
      %v2077 = vadd.f32 %v669, %v2076
      %2078 = vmatmul.f32.gmra.mxu0 %v1291
      %v2079 = vpop.f32.mrf.mxu0
      %v2080 = vadd.f32 %v669, %v2079
      %2081 = vmatmul.f32.gmra.mxu0 %v1294
      %v2082 = vpop.f32.mrf.mxu0
      %v2083 = vadd.f32 %v669, %v2082
      %2084 = vmatmul.f32.gmra.mxu0 %v1297
      %v2085 = vpop.f32.mrf.mxu0
      %v2086 = vadd.f32 %v669, %v2085
      %2087 = vmatmul.f32.gmra.mxu0 %v1300
      %v2088 = vpop.f32.mrf.mxu0
      %v2089 = vadd.f32 %v669, %v2088
      %2090 = vmatmul.f32.gmra.mxu0 %v1303
      %v2091 = vpop.f32.mrf.mxu0
      %v2092 = vadd.f32 %v669, %v2091
      %2093 = vmatmul.f32.gmra.mxu0 %v1306
      %v2094 = vpop.f32.mrf.mxu0
      %v2095 = vadd.f32 %v669, %v2094
      %2096 = vmatmul.f32.gmra.mxu0 %v1309
      %v2097 = vpop.f32.mrf.mxu0
      %v2098 = vadd.f32 %v669, %v2097
      %2099 = vmatmul.f32.gmra.mxu0 %v1312
      %v2100 = vpop.f32.mrf.mxu0
      %v2101 = vadd.f32 %v669, %v2100
      %2102 = vmatmul.f32.gmra.mxu0 %v1315
      %v2103 = vpop.f32.mrf.mxu0
      %v2104 = vadd.f32 %v669, %v2103
      %2105 = vmatmul.f32.gmra.mxu0 %v1318
      %v2106 = vpop.f32.mrf.mxu0
      %v2107 = vadd.f32 %v669, %v2106
      %2108 = vmatmul.f32.gmra.mxu0 %v1321
      %v2109 = vpop.f32.mrf.mxu0
      %v2110 = vadd.f32 %v669, %v2109
      %2111 = vmatmul.f32.gmra.mxu0 %v1324
      %v2112 = vpop.f32.mrf.mxu0
      %v2113 = vadd.f32 %v669, %v2112
      %2114 = vmatmul.f32.gmra.mxu0 %v1327
      %v2115 = vpop.f32.mrf.mxu0
      %v2116 = vadd.f32 %v669, %v2115
      %2117 = vmatmul.f32.gmra.mxu0 %v1330
      %v2118 = vpop.f32.mrf.mxu0
      %v2119 = vadd.f32 %v669, %v2118
      %2120 = vmatmul.f32.gmra.mxu0 %v1333
      %v2121 = vpop.f32.mrf.mxu0
      %v2122 = vadd.f32 %v669, %v2121
      %2123 = vmatmul.f32.gmra.mxu0 %v1336
      %v2124 = vpop.f32.mrf.mxu0
      %v2125 = vadd.f32 %v669, %v2124
      %2126 = vmatmul.f32.gmra.mxu0 %v1339
      %v2127 = vpop.f32.mrf.mxu0
      %v2128 = vadd.f32 %v669, %v2127
      %2129 = vmatmul.f32.gmra.mxu0 %v1342
      %v2130 = vpop.f32.mrf.mxu0
      %v2131 = vadd.f32 %v669, %v2130
      %2132 = vmatmul.f32.gmra.mxu0 %v1345
      %v2133 = vpop.f32.mrf.mxu0
      %v2134 = vadd.f32 %v669, %v2133
      %2135 = vmatmul.f32.gmra.mxu0 %v1348
      %v2136 = vpop.f32.mrf.mxu0
      %v2137 = vadd.f32 %v669, %v2136
      %2138 = vmatmul.f32.gmra.mxu0 %v1351
      %v2139 = vpop.f32.mrf.mxu0
      %v2140 = vadd.f32 %v669, %v2139
      %2141 = vmatmul.f32.gmra.mxu0 %v1354
      %v2142 = vpop.f32.mrf.mxu0
      %v2143 = vadd.f32 %v669, %v2142
      %2144 = vmatmul.f32.gmra.mxu0 %v1357
      %v2145 = vpop.f32.mrf.mxu0
      %v2146 = vadd.f32 %v669, %v2145
      %2147 = vmatmul.f32.gmra.mxu0 %v1360
      %v2148 = vpop.f32.mrf.mxu0
      %v2149 = vadd.f32 %v669, %v2148
      %2150 = vmatmul.f32.gmra.mxu0 %v1363
      %v2151 = vpop.f32.mrf.mxu0
      %v2152 = vadd.f32 %v669, %v2151
      %2153 = vmatmul.f32.gmra.mxu0 %v1366
      %v2154 = vpop.f32.mrf.mxu0
      %v2155 = vadd.f32 %v669, %v2154
      %2156 = vmatmul.f32.gmra.mxu0 %v1369
      %v2157 = vpop.f32.mrf.mxu0
      %v2158 = vadd.f32 %v669, %v2157
      %2159 = vmatmul.f32.gmra.mxu0 %v1372
      %v2160 = vpop.f32.mrf.mxu0
      %v2161 = vadd.f32 %v669, %v2160
      %2162 = vmatmul.f32.gmra.mxu0 %v1375
      %v2163 = vpop.f32.mrf.mxu0
      %v2164 = vadd.f32 %v669, %v2163
      %2165 = vmatmul.f32.gmra.mxu0 %v1378
      %v2166 = vpop.f32.mrf.mxu0
      %v2167 = vadd.f32 %v669, %v2166
      %2168 = vmatmul.f32.gmra.mxu0 %v1381
      %v2169 = vpop.f32.mrf.mxu0
      %v2170 = vadd.f32 %v669, %v2169
      %2171 = vmatmul.f32.gmra.mxu0 %v1384
      %v2172 = vpop.f32.mrf.mxu0
      %v2173 = vadd.f32 %v669, %v2172
      %2174 = vmatmul.f32.gmra.mxu0 %v1387
      %v2175 = vpop.f32.mrf.mxu0
      %v2176 = vadd.f32 %v669, %v2175
      %2177 = vmatmul.f32.gmra.mxu0 %v1390
      %v2178 = vpop.f32.mrf.mxu0
      %v2179 = vadd.f32 %v669, %v2178
      %2180 = vmatmul.f32.gmra.mxu0 %v1393
      %v2181 = vpop.f32.mrf.mxu0
      %v2182 = vadd.f32 %v669, %v2181
      %2183 = vmatmul.f32.gmra.mxu0 %v1396
      %v2184 = vpop.f32.mrf.mxu0
      %v2185 = vadd.f32 %v669, %v2184
      %2186 = vmatmul.f32.gmra.mxu0 %v1399
      %v2187 = vpop.f32.mrf.mxu0
      %v2188 = vadd.f32 %v669, %v2187
      %2189 = vmatmul.f32.gmra.mxu0 %v1402
      %v2190 = vpop.f32.mrf.mxu0
      %v2191 = vadd.f32 %v669, %v2190
      %2192 = vmatmul.f32.gmra.mxu0 %v1405
      %v2193 = vpop.f32.mrf.mxu0
      %v2194 = vadd.f32 %v669, %v2193
      %2195 = vmatmul.f32.gmra.mxu0 %v1408
      %v2196 = vpop.f32.mrf.mxu0
      %v2197 = vadd.f32 %v669, %v2196
      %2198 = vmatmul.f32.gmra.mxu0 %v1411
      %v2199 = vpop.f32.mrf.mxu0
      %v2200 = vadd.f32 %v669, %v2199
      %2201 = vmatmul.f32.gmra.mxu0 %v1414
      %v2202 = vpop.f32.mrf.mxu0
      %v2203 = vadd.f32 %v669, %v2202
      %2204 = vmatmul.f32.gmra.mxu0 %v1417
      %v2205 = vpop.f32.mrf.mxu0
      %v2206 = vadd.f32 %v669, %v2205
      %2207 = vmatmul.f32.gmra.mxu0 %v1420
      %v2208 = vpop.f32.mrf.mxu0
      %v2209 = vadd.f32 %v669, %v2208
      %2210 = vmatmul.f32.gmra.mxu0 %v1423
      %v2211 = vpop.f32.mrf.mxu0
      %v2212 = vadd.f32 %v669, %v2211
      %2213 = vmatmul.f32.gmra.mxu0 %v1426
      %v2214 = vpop.f32.mrf.mxu0
      %v2215 = vadd.f32 %v669, %v2214
      %2216 = vmatmul.f32.gmra.mxu0 %v1429
      %v2217 = vpop.f32.mrf.mxu0
      %v2218 = vadd.f32 %v669, %v2217
      %2219 = vmatmul.f32.gmra.mxu0 %v1432
      %v2220 = vpop.f32.mrf.mxu0
      %v2221 = vadd.f32 %v669, %v2220
      %2222 = vmatmul.f32.gmra.mxu0 %v1435
      %v2223 = vpop.f32.mrf.mxu0
      %v2224 = vadd.f32 %v669, %v2223
      %2225 = vmatmul.f32.gmra.mxu0 %v1438
      %v2226 = vpop.f32.mrf.mxu0
      %v2227 = vadd.f32 %v669, %v2226
      %2228 = vdwg.mxu0
      %v2229 = vmax.f32 %v1462, 0.0
      %v2230 = vmax.f32 %v1465, 0.0
      %v2231 = vmax.f32 %v1468, 0.0
      %v2232 = vmax.f32 %v1471, 0.0
      %v2233 = vmax.f32 %v1474, 0.0
      %v2234 = vmax.f32 %v1477, 0.0
      %v2235 = vmax.f32 %v1480, 0.0
      %v2236 = vmax.f32 %v1483, 0.0
      %v2237 = vmax.f32 %v1486, 0.0
      %v2238 = vmax.f32 %v1489, 0.0
      %v2239 = vmax.f32 %v1492, 0.0
      %v2240 = vmax.f32 %v1495, 0.0
      %v2241 = vmax.f32 %v1498, 0.0
      %v2242 = vmax.f32 %v1501, 0.0
      %v2243 = vmax.f32 %v1504, 0.0
      %v2244 = vmax.f32 %v1507, 0.0
      %v2245 = vmax.f32 %v1510, 0.0
      %v2246 = vmax.f32 %v1513, 0.0
      %v2247 = vmax.f32 %v1516, 0.0
      %v2248 = vmax.f32 %v1519, 0.0
      %v2249 = vmax.f32 %v1522, 0.0
      %v2250 = vmax.f32 %v1525, 0.0
      %v2251 = vmax.f32 %v1528, 0.0
      %v2252 = vmax.f32 %v1531, 0.0
      %v2253 = vmax.f32 %v1534, 0.0
      %v2254 = vmax.f32 %v1537, 0.0
      %v2255 = vmax.f32 %v1540, 0.0
      %v2256 = vmax.f32 %v1543, 0.0
      %v2257 = vmax.f32 %v1546, 0.0
      %v2258 = vmax.f32 %v1549, 0.0
      %v2259 = vmax.f32 %v1552, 0.0
      %v2260 = vmax.f32 %v1555, 0.0
      %v2261 = vmax.f32 %v1558, 0.0
      %v2262 = vmax.f32 %v1561, 0.0
      %v2263 = vmax.f32 %v1564, 0.0
      %v2264 = vmax.f32 %v1567, 0.0
      %v2265 = vmax.f32 %v1570, 0.0
      %v2266 = vmax.f32 %v1573, 0.0
      %v2267 = vmax.f32 %v1576, 0.0
      %v2268 = vmax.f32 %v1579, 0.0
      %v2269 = vmax.f32 %v1582, 0.0
      %v2270 = vmax.f32 %v1585, 0.0
      %v2271 = vmax.f32 %v1588, 0.0
      %v2272 = vmax.f32 %v1591, 0.0
      %v2273 = vmax.f32 %v1594, 0.0
      %v2274 = vmax.f32 %v1597, 0.0
      %v2275 = vmax.f32 %v1600, 0.0
      %v2276 = vmax.f32 %v1603, 0.0
      %v2277 = vmax.f32 %v1606, 0.0
      %v2278 = vmax.f32 %v1609, 0.0
      %v2279 = vmax.f32 %v1612, 0.0
      %v2280 = vmax.f32 %v1615, 0.0
      %v2281 = vmax.f32 %v1618, 0.0
      %v2282 = vmax.f32 %v1621, 0.0
      %v2283 = vmax.f32 %v1624, 0.0
      %v2284 = vmax.f32 %v1627, 0.0
      %v2285 = vmax.f32 %v1630, 0.0
      %v2286 = vmax.f32 %v1633, 0.0
      %v2287 = vmax.f32 %v1636, 0.0
      %v2288 = vmax.f32 %v1639, 0.0
      %v2289 = vmax.f32 %v1642, 0.0
      %v2290 = vmax.f32 %v1645, 0.0
      %v2291 = vmax.f32 %v1648, 0.0
      %v2292 = vmax.f32 %v1651, 0.0
      %v2293 = vmax.f32 %v1654, 0.0
      %v2294 = vmax.f32 %v1657, 0.0
      %v2295 = vmax.f32 %v1660, 0.0
      %v2296 = vmax.f32 %v1663, 0.0
      %v2297 = vmax.f32 %v1666, 0.0
      %v2298 = vmax.f32 %v1669, 0.0
      %v2299 = vmax.f32 %v1672, 0.0
      %v2300 = vmax.f32 %v1675, 0.0
      %v2301 = vmax.f32 %v1678, 0.0
      %v2302 = vmax.f32 %v1681, 0.0
      %v2303 = vmax.f32 %v1684, 0.0
      %v2304 = vmax.f32 %v1687, 0.0
      %v2305 = vmax.f32 %v1690, 0.0
      %v2306 = vmax.f32 %v1693, 0.0
      %v2307 = vmax.f32 %v1696, 0.0
      %v2308 = vmax.f32 %v1699, 0.0
      %v2309 = vmax.f32 %v1702, 0.0
      %v2310 = vmax.f32 %v1705, 0.0
      %v2311 = vmax.f32 %v1708, 0.0
      %v2312 = vmax.f32 %v1711, 0.0
      %v2313 = vmax.f32 %v1714, 0.0
      %v2314 = vmax.f32 %v1717, 0.0
      %v2315 = vmax.f32 %v1720, 0.0
      %v2316 = vmax.f32 %v1723, 0.0
      %v2317 = vmax.f32 %v1726, 0.0
      %v2318 = vmax.f32 %v1729, 0.0
      %v2319 = vmax.f32 %v1732, 0.0
      %v2320 = vmax.f32 %v1735, 0.0
      %v2321 = vmax.f32 %v1738, 0.0
      %v2322 = vmax.f32 %v1741, 0.0
      %v2323 = vmax.f32 %v1744, 0.0
      %v2324 = vmax.f32 %v1747, 0.0
      %v2325 = vmax.f32 %v1750, 0.0
      %v2326 = vmax.f32 %v1753, 0.0
      %v2327 = vmax.f32 %v1756, 0.0
      %v2328 = vmax.f32 %v1759, 0.0
      %v2329 = vmax.f32 %v1762, 0.0
      %v2330 = vmax.f32 %v1765, 0.0
      %v2331 = vmax.f32 %v1768, 0.0
      %v2332 = vmax.f32 %v1771, 0.0
      %v2333 = vmax.f32 %v1774, 0.0
      %v2334 = vmax.f32 %v1777, 0.0
      %v2335 = vmax.f32 %v1780, 0.0
      %v2336 = vmax.f32 %v1783, 0.0
      %v2337 = vmax.f32 %v1786, 0.0
      %v2338 = vmax.f32 %v1789, 0.0
      %v2339 = vmax.f32 %v1792, 0.0
      %v2340 = vmax.f32 %v1795, 0.0
      %v2341 = vmax.f32 %v1798, 0.0
      %v2342 = vmax.f32 %v1801, 0.0
      %v2343 = vmax.f32 %v1804, 0.0
      %v2344 = vmax.f32 %v1807, 0.0
      %v2345 = vmax.f32 %v1810, 0.0
      %v2346 = vmax.f32 %v1813, 0.0
      %v2347 = vmax.f32 %v1816, 0.0
      %v2348 = vmax.f32 %v1819, 0.0
      %v2349 = vmax.f32 %v1822, 0.0
      %v2350 = vmax.f32 %v1825, 0.0
      %v2351 = vmax.f32 %v1828, 0.0
      %v2352 = vmax.f32 %v1831, 0.0
      %v2353 = vmax.f32 %v1834, 0.0
      %v2354 = vmax.f32 %v1837, 0.0
      %v2355 = vmax.f32 %v1840, 0.0
      %v2356 = vmax.f32 %v1843, 0.0
      %v2357 = vmax.f32 %v1846, 0.0
      %v2358 = vmax.f32 %v1849, 0.0
      %v2359 = vmax.f32 %v1852, 0.0
      %v2360 = vmax.f32 %v1855, 0.0
      %v2361 = vmax.f32 %v1858, 0.0
      %v2362 = vmax.f32 %v1861, 0.0
      %v2363 = vmax.f32 %v1864, 0.0
      %v2364 = vmax.f32 %v1867, 0.0
      %v2365 = vmax.f32 %v1870, 0.0
      %v2366 = vmax.f32 %v1873, 0.0
      %v2367 = vmax.f32 %v1876, 0.0
      %v2368 = vmax.f32 %v1879, 0.0
      %v2369 = vmax.f32 %v1882, 0.0
      %v2370 = vmax.f32 %v1885, 0.0
      %v2371 = vmax.f32 %v1888, 0.0
      %v2372 = vmax.f32 %v1891, 0.0
      %v2373 = vmax.f32 %v1894, 0.0
      %v2374 = vmax.f32 %v1897, 0.0
      %v2375 = vmax.f32 %v1900, 0.0
      %v2376 = vmax.f32 %v1903, 0.0
      %v2377 = vmax.f32 %v1906, 0.0
      %v2378 = vmax.f32 %v1909, 0.0
      %v2379 = vmax.f32 %v1912, 0.0
      %v2380 = vmax.f32 %v1915, 0.0
      %v2381 = vmax.f32 %v1918, 0.0
      %v2382 = vmax.f32 %v1921, 0.0
      %v2383 = vmax.f32 %v1924, 0.0
      %v2384 = vmax.f32 %v1927, 0.0
      %v2385 = vmax.f32 %v1930, 0.0
      %v2386 = vmax.f32 %v1933, 0.0
      %v2387 = vmax.f32 %v1936, 0.0
      %v2388 = vmax.f32 %v1939, 0.0
      %v2389 = vmax.f32 %v1942, 0.0
      %v2390 = vmax.f32 %v1945, 0.0
      %v2391 = vmax.f32 %v1948, 0.0
      %v2392 = vmax.f32 %v1951, 0.0
      %v2393 = vmax.f32 %v1954, 0.0
      %v2394 = vmax.f32 %v1957, 0.0
      %v2395 = vmax.f32 %v1960, 0.0
      %v2396 = vmax.f32 %v1963, 0.0
      %v2397 = vmax.f32 %v1966, 0.0
      %v2398 = vmax.f32 %v1969, 0.0
      %v2399 = vmax.f32 %v1972, 0.0
      %v2400 = vmax.f32 %v1975, 0.0
      %v2401 = vmax.f32 %v1978, 0.0
      %v2402 = vmax.f32 %v1981, 0.0
      %v2403 = vmax.f32 %v1984, 0.0
      %v2404 = vmax.f32 %v1987, 0.0
      %v2405 = vmax.f32 %v1990, 0.0
      %v2406 = vmax.f32 %v1993, 0.0
      %v2407 = vmax.f32 %v1996, 0.0
      %v2408 = vmax.f32 %v1999, 0.0
      %v2409 = vmax.f32 %v2002, 0.0
      %v2410 = vmax.f32 %v2005, 0.0
      %v2411 = vmax.f32 %v2008, 0.0
      %v2412 = vmax.f32 %v2011, 0.0
      %v2413 = vmax.f32 %v2014, 0.0
      %v2414 = vmax.f32 %v2017, 0.0
      %v2415 = vmax.f32 %v2020, 0.0
      %v2416 = vmax.f32 %v2023, 0.0
      %v2417 = vmax.f32 %v2026, 0.0
      %v2418 = vmax.f32 %v2029, 0.0
      %v2419 = vmax.f32 %v2032, 0.0
      %v2420 = vmax.f32 %v2035, 0.0
      %v2421 = vmax.f32 %v2038, 0.0
      %v2422 = vmax.f32 %v2041, 0.0
      %v2423 = vmax.f32 %v2044, 0.0
      %v2424 = vmax.f32 %v2047, 0.0
      %v2425 = vmax.f32 %v2050, 0.0
      %v2426 = vmax.f32 %v2053, 0.0
      %v2427 = vmax.f32 %v2056, 0.0
      %v2428 = vmax.f32 %v2059, 0.0
      %v2429 = vmax.f32 %v2062, 0.0
      %v2430 = vmax.f32 %v2065, 0.0
      %v2431 = vmax.f32 %v2068, 0.0
      %v2432 = vmax.f32 %v2071, 0.0
      %v2433 = vmax.f32 %v2074, 0.0
      %v2434 = vmax.f32 %v2077, 0.0
      %v2435 = vmax.f32 %v2080, 0.0
      %v2436 = vmax.f32 %v2083, 0.0
      %v2437 = vmax.f32 %v2086, 0.0
      %v2438 = vmax.f32 %v2089, 0.0
      %v2439 = vmax.f32 %v2092, 0.0
      %v2440 = vmax.f32 %v2095, 0.0
      %v2441 = vmax.f32 %v2098, 0.0
      %v2442 = vmax.f32 %v2101, 0.0
      %v2443 = vmax.f32 %v2104, 0.0
      %v2444 = vmax.f32 %v2107, 0.0
      %v2445 = vmax.f32 %v2110, 0.0
      %v2446 = vmax.f32 %v2113, 0.0
      %v2447 = vmax.f32 %v2116, 0.0
      %v2448 = vmax.f32 %v2119, 0.0
      %v2449 = vmax.f32 %v2122, 0.0
      %v2450 = vmax.f32 %v2125, 0.0
      %v2451 = vmax.f32 %v2128, 0.0
      %v2452 = vmax.f32 %v2131, 0.0
      %v2453 = vmax.f32 %v2134, 0.0
      %v2454 = vmax.f32 %v2137, 0.0
      %v2455 = vmax.f32 %v2140, 0.0
      %v2456 = vmax.f32 %v2143, 0.0
      %v2457 = vmax.f32 %v2146, 0.0
      %v2458 = vmax.f32 %v2149, 0.0
      %v2459 = vmax.f32 %v2152, 0.0
      %v2460 = vmax.f32 %v2155, 0.0
      %v2461 = vmax.f32 %v2158, 0.0
      %v2462 = vmax.f32 %v2161, 0.0
      %v2463 = vmax.f32 %v2164, 0.0
      %v2464 = vmax.f32 %v2167, 0.0
      %v2465 = vmax.f32 %v2170, 0.0
      %v2466 = vmax.f32 %v2173, 0.0
      %v2467 = vmax.f32 %v2176, 0.0
      %v2468 = vmax.f32 %v2179, 0.0
      %v2469 = vmax.f32 %v2182, 0.0
      %v2470 = vmax.f32 %v2185, 0.0
      %v2471 = vmax.f32 %v2188, 0.0
      %v2472 = vmax.f32 %v2191, 0.0
      %v2473 = vmax.f32 %v2194, 0.0
      %v2474 = vmax.f32 %v2197, 0.0
      %v2475 = vmax.f32 %v2200, 0.0
      %v2476 = vmax.f32 %v2203, 0.0
      %v2477 = vmax.f32 %v2206, 0.0
      %v2478 = vmax.f32 %v2209, 0.0
      %v2479 = vmax.f32 %v2212, 0.0
      %v2480 = vmax.f32 %v2215, 0.0
      %v2481 = vmax.f32 %v2218, 0.0
      %v2482 = vmax.f32 %v2221, 0.0
      %v2483 = vmax.f32 %v2224, 0.0
      %v2484 = vmax.f32 %v2227, 0.0
      %vm2485 = vcmask 64512
      %v2486 = vsel %vm2485, %v2229, 0.0
      %v2487 = vsel %vm2485, %v2230, 0.0
      %v2488 = vadd.f32 %v2486, %v2487
      %v2489 = vsel %vm2485, %v2231, 0.0
      %v2490 = vadd.f32 %v2488, %v2489
      %v2491 = vsel %vm2485, %v2232, 0.0
      %v2492 = vadd.f32 %v2490, %v2491
      %v2493 = vsel %vm2485, %v2233, 0.0
      %v2494 = vadd.f32 %v2492, %v2493
      %v2495 = vsel %vm2485, %v2234, 0.0
      %v2496 = vadd.f32 %v2494, %v2495
      %v2497 = vsel %vm2485, %v2235, 0.0
      %v2498 = vadd.f32 %v2496, %v2497
      %v2499 = vsel %vm2485, %v2236, 0.0
      %v2500 = vadd.f32 %v2498, %v2499
      %v2501 = vsel %vm2485, %v2237, 0.0
      %v2502 = vadd.f32 %v2500, %v2501
      %v2503 = vsel %vm2485, %v2238, 0.0
      %v2504 = vadd.f32 %v2502, %v2503
      %v2505 = vsel %vm2485, %v2239, 0.0
      %v2506 = vadd.f32 %v2504, %v2505
      %v2507 = vsel %vm2485, %v2240, 0.0
      %v2508 = vadd.f32 %v2506, %v2507
      %v2509 = vsel %vm2485, %v2241, 0.0
      %v2510 = vadd.f32 %v2508, %v2509
      %v2511 = vsel %vm2485, %v2242, 0.0
      %v2512 = vadd.f32 %v2510, %v2511
      %v2513 = vsel %vm2485, %v2243, 0.0
      %v2514 = vadd.f32 %v2512, %v2513
      %v2515 = vsel %vm2485, %v2244, 0.0
      %v2516 = vadd.f32 %v2514, %v2515
      %v2517 = vsel %vm2485, %v2245, 0.0
      %v2518 = vadd.f32 %v2516, %v2517
      %v2519 = vsel %vm2485, %v2246, 0.0
      %v2520 = vadd.f32 %v2518, %v2519
      %v2521 = vsel %vm2485, %v2247, 0.0
      %v2522 = vadd.f32 %v2520, %v2521
      %v2523 = vsel %vm2485, %v2248, 0.0
      %v2524 = vadd.f32 %v2522, %v2523
      %v2525 = vsel %vm2485, %v2249, 0.0
      %v2526 = vadd.f32 %v2524, %v2525
      %v2527 = vsel %vm2485, %v2250, 0.0
      %v2528 = vadd.f32 %v2526, %v2527
      %v2529 = vsel %vm2485, %v2251, 0.0
      %v2530 = vadd.f32 %v2528, %v2529
      %v2531 = vsel %vm2485, %v2252, 0.0
      %v2532 = vadd.f32 %v2530, %v2531
      %v2533 = vsel %vm2485, %v2253, 0.0
      %v2534 = vadd.f32 %v2532, %v2533
      %v2535 = vsel %vm2485, %v2254, 0.0
      %v2536 = vadd.f32 %v2534, %v2535
      %v2537 = vsel %vm2485, %v2255, 0.0
      %v2538 = vadd.f32 %v2536, %v2537
      %v2539 = vsel %vm2485, %v2256, 0.0
      %v2540 = vadd.f32 %v2538, %v2539
      %v2541 = vsel %vm2485, %v2257, 0.0
      %v2542 = vadd.f32 %v2540, %v2541
      %v2543 = vsel %vm2485, %v2258, 0.0
      %v2544 = vadd.f32 %v2542, %v2543
      %v2545 = vsel %vm2485, %v2259, 0.0
      %v2546 = vadd.f32 %v2544, %v2545
      %v2547 = vsel %vm2485, %v2260, 0.0
      %v2548 = vadd.f32 %v2546, %v2547
      %v2549 = vrot.slane %v2548, 4
      %v2550 = vadd.f32 %v2548, %v2549
      %v2551 = vrot.slane %v2550, 2
      %v2552 = vadd.f32 %v2550, %v2551
      %v2553 = vrot.slane %v2552, 1
      %v2554 = vadd.f32 %v2552, %v2553
      %v2555 = vsel %vm2485, %v2261, 0.0
      %v2556 = vsel %vm2485, %v2262, 0.0
      %v2557 = vadd.f32 %v2555, %v2556
      %v2558 = vsel %vm2485, %v2263, 0.0
      %v2559 = vadd.f32 %v2557, %v2558
      %v2560 = vsel %vm2485, %v2264, 0.0
      %v2561 = vadd.f32 %v2559, %v2560
      %v2562 = vsel %vm2485, %v2265, 0.0
      %v2563 = vadd.f32 %v2561, %v2562
      %v2564 = vsel %vm2485, %v2266, 0.0
      %v2565 = vadd.f32 %v2563, %v2564
      %v2566 = vsel %vm2485, %v2267, 0.0
      %v2567 = vadd.f32 %v2565, %v2566
      %v2568 = vsel %vm2485, %v2268, 0.0
      %v2569 = vadd.f32 %v2567, %v2568
      %v2570 = vsel %vm2485, %v2269, 0.0
      %v2571 = vadd.f32 %v2569, %v2570
      %v2572 = vsel %vm2485, %v2270, 0.0
      %v2573 = vadd.f32 %v2571, %v2572
      %v2574 = vsel %vm2485, %v2271, 0.0
      %v2575 = vadd.f32 %v2573, %v2574
      %v2576 = vsel %vm2485, %v2272, 0.0
      %v2577 = vadd.f32 %v2575, %v2576
      %v2578 = vsel %vm2485, %v2273, 0.0
      %v2579 = vadd.f32 %v2577, %v2578
      %v2580 = vsel %vm2485, %v2274, 0.0
      %v2581 = vadd.f32 %v2579, %v2580
      %v2582 = vsel %vm2485, %v2275, 0.0
      %v2583 = vadd.f32 %v2581, %v2582
      %v2584 = vsel %vm2485, %v2276, 0.0
      %v2585 = vadd.f32 %v2583, %v2584
      %v2586 = vsel %vm2485, %v2277, 0.0
      %v2587 = vadd.f32 %v2585, %v2586
      %v2588 = vsel %vm2485, %v2278, 0.0
      %v2589 = vadd.f32 %v2587, %v2588
      %v2590 = vsel %vm2485, %v2279, 0.0
      %v2591 = vadd.f32 %v2589, %v2590
      %v2592 = vsel %vm2485, %v2280, 0.0
      %v2593 = vadd.f32 %v2591, %v2592
      %v2594 = vsel %vm2485, %v2281, 0.0
      %v2595 = vadd.f32 %v2593, %v2594
      %v2596 = vsel %vm2485, %v2282, 0.0
      %v2597 = vadd.f32 %v2595, %v2596
      %v2598 = vsel %vm2485, %v2283, 0.0
      %v2599 = vadd.f32 %v2597, %v2598
      %v2600 = vsel %vm2485, %v2284, 0.0
      %v2601 = vadd.f32 %v2599, %v2600
      %v2602 = vsel %vm2485, %v2285, 0.0
      %v2603 = vadd.f32 %v2601, %v2602
      %v2604 = vsel %vm2485, %v2286, 0.0
      %v2605 = vadd.f32 %v2603, %v2604
      %v2606 = vsel %vm2485, %v2287, 0.0
      %v2607 = vadd.f32 %v2605, %v2606
      %v2608 = vsel %vm2485, %v2288, 0.0
      %v2609 = vadd.f32 %v2607, %v2608
      %v2610 = vsel %vm2485, %v2289, 0.0
      %v2611 = vadd.f32 %v2609, %v2610
      %v2612 = vsel %vm2485, %v2290, 0.0
      %v2613 = vadd.f32 %v2611, %v2612
      %v2614 = vsel %vm2485, %v2291, 0.0
      %v2615 = vadd.f32 %v2613, %v2614
      %v2616 = vsel %vm2485, %v2292, 0.0
      %v2617 = vadd.f32 %v2615, %v2616
      %v2618 = vrot.slane %v2617, 4
      %v2619 = vadd.f32 %v2617, %v2618
      %v2620 = vrot.slane %v2619, 2
      %v2621 = vadd.f32 %v2619, %v2620
      %v2622 = vrot.slane %v2621, 1
      %v2623 = vadd.f32 %v2621, %v2622
      %v2624 = vsel %vm2485, %v2293, 0.0
      %v2625 = vsel %vm2485, %v2294, 0.0
      %v2626 = vadd.f32 %v2624, %v2625
      %v2627 = vsel %vm2485, %v2295, 0.0
      %v2628 = vadd.f32 %v2626, %v2627
      %v2629 = vsel %vm2485, %v2296, 0.0
      %v2630 = vadd.f32 %v2628, %v2629
      %v2631 = vsel %vm2485, %v2297, 0.0
      %v2632 = vadd.f32 %v2630, %v2631
      %v2633 = vsel %vm2485, %v2298, 0.0
      %v2634 = vadd.f32 %v2632, %v2633
      %v2635 = vsel %vm2485, %v2299, 0.0
      %v2636 = vadd.f32 %v2634, %v2635
      %v2637 = vsel %vm2485, %v2300, 0.0
      %v2638 = vadd.f32 %v2636, %v2637
      %v2639 = vsel %vm2485, %v2301, 0.0
      %v2640 = vadd.f32 %v2638, %v2639
      %v2641 = vsel %vm2485, %v2302, 0.0
      %v2642 = vadd.f32 %v2640, %v2641
      %v2643 = vsel %vm2485, %v2303, 0.0
      %v2644 = vadd.f32 %v2642, %v2643
      %v2645 = vsel %vm2485, %v2304, 0.0
      %v2646 = vadd.f32 %v2644, %v2645
      %v2647 = vsel %vm2485, %v2305, 0.0
      %v2648 = vadd.f32 %v2646, %v2647
      %v2649 = vsel %vm2485, %v2306, 0.0
      %v2650 = vadd.f32 %v2648, %v2649
      %v2651 = vsel %vm2485, %v2307, 0.0
      %v2652 = vadd.f32 %v2650, %v2651
      %v2653 = vsel %vm2485, %v2308, 0.0
      %v2654 = vadd.f32 %v2652, %v2653
      %v2655 = vsel %vm2485, %v2309, 0.0
      %v2656 = vadd.f32 %v2654, %v2655
      %v2657 = vsel %vm2485, %v2310, 0.0
      %v2658 = vadd.f32 %v2656, %v2657
      %v2659 = vsel %vm2485, %v2311, 0.0
      %v2660 = vadd.f32 %v2658, %v2659
      %v2661 = vsel %vm2485, %v2312, 0.0
      %v2662 = vadd.f32 %v2660, %v2661
      %v2663 = vsel %vm2485, %v2313, 0.0
      %v2664 = vadd.f32 %v2662, %v2663
      %v2665 = vsel %vm2485, %v2314, 0.0
      %v2666 = vadd.f32 %v2664, %v2665
      %v2667 = vsel %vm2485, %v2315, 0.0
      %v2668 = vadd.f32 %v2666, %v2667
      %v2669 = vsel %vm2485, %v2316, 0.0
      %v2670 = vadd.f32 %v2668, %v2669
      %v2671 = vsel %vm2485, %v2317, 0.0
      %v2672 = vadd.f32 %v2670, %v2671
      %v2673 = vsel %vm2485, %v2318, 0.0
      %v2674 = vadd.f32 %v2672, %v2673
      %v2675 = vsel %vm2485, %v2319, 0.0
      %v2676 = vadd.f32 %v2674, %v2675
      %v2677 = vsel %vm2485, %v2320, 0.0
      %v2678 = vadd.f32 %v2676, %v2677
      %v2679 = vsel %vm2485, %v2321, 0.0
      %v2680 = vadd.f32 %v2678, %v2679
      %v2681 = vsel %vm2485, %v2322, 0.0
      %v2682 = vadd.f32 %v2680, %v2681
      %v2683 = vsel %vm2485, %v2323, 0.0
      %v2684 = vadd.f32 %v2682, %v2683
      %v2685 = vsel %vm2485, %v2324, 0.0
      %v2686 = vadd.f32 %v2684, %v2685
      %v2687 = vrot.slane %v2686, 4
      %v2688 = vadd.f32 %v2686, %v2687
      %v2689 = vrot.slane %v2688, 2
      %v2690 = vadd.f32 %v2688, %v2689
      %v2691 = vrot.slane %v2690, 1
      %v2692 = vadd.f32 %v2690, %v2691
      %v2693 = vsel %vm2485, %v2325, 0.0
      %v2694 = vsel %vm2485, %v2326, 0.0
      %v2695 = vadd.f32 %v2693, %v2694
      %v2696 = vsel %vm2485, %v2327, 0.0
      %v2697 = vadd.f32 %v2695, %v2696
      %v2698 = vsel %vm2485, %v2328, 0.0
      %v2699 = vadd.f32 %v2697, %v2698
      %v2700 = vsel %vm2485, %v2329, 0.0
      %v2701 = vadd.f32 %v2699, %v2700
      %v2702 = vsel %vm2485, %v2330, 0.0
      %v2703 = vadd.f32 %v2701, %v2702
      %v2704 = vsel %vm2485, %v2331, 0.0
      %v2705 = vadd.f32 %v2703, %v2704
      %v2706 = vsel %vm2485, %v2332, 0.0
      %v2707 = vadd.f32 %v2705, %v2706
      %v2708 = vsel %vm2485, %v2333, 0.0
      %v2709 = vadd.f32 %v2707, %v2708
      %v2710 = vsel %vm2485, %v2334, 0.0
      %v2711 = vadd.f32 %v2709, %v2710
      %v2712 = vsel %vm2485, %v2335, 0.0
      %v2713 = vadd.f32 %v2711, %v2712
      %v2714 = vsel %vm2485, %v2336, 0.0
      %v2715 = vadd.f32 %v2713, %v2714
      %v2716 = vsel %vm2485, %v2337, 0.0
      %v2717 = vadd.f32 %v2715, %v2716
      %v2718 = vsel %vm2485, %v2338, 0.0
      %v2719 = vadd.f32 %v2717, %v2718
      %v2720 = vsel %vm2485, %v2339, 0.0
      %v2721 = vadd.f32 %v2719, %v2720
      %v2722 = vsel %vm2485, %v2340, 0.0
      %v2723 = vadd.f32 %v2721, %v2722
      %v2724 = vsel %vm2485, %v2341, 0.0
      %v2725 = vadd.f32 %v2723, %v2724
      %v2726 = vsel %vm2485, %v2342, 0.0
      %v2727 = vadd.f32 %v2725, %v2726
      %v2728 = vsel %vm2485, %v2343, 0.0
      %v2729 = vadd.f32 %v2727, %v2728
      %v2730 = vsel %vm2485, %v2344, 0.0
      %v2731 = vadd.f32 %v2729, %v2730
      %v2732 = vsel %vm2485, %v2345, 0.0
      %v2733 = vadd.f32 %v2731, %v2732
      %v2734 = vsel %vm2485, %v2346, 0.0
      %v2735 = vadd.f32 %v2733, %v2734
      %v2736 = vsel %vm2485, %v2347, 0.0
      %v2737 = vadd.f32 %v2735, %v2736
      %v2738 = vsel %vm2485, %v2348, 0.0
      %v2739 = vadd.f32 %v2737, %v2738
      %v2740 = vsel %vm2485, %v2349, 0.0
      %v2741 = vadd.f32 %v2739, %v2740
      %v2742 = vsel %vm2485, %v2350, 0.0
      %v2743 = vadd.f32 %v2741, %v2742
      %v2744 = vsel %vm2485, %v2351, 0.0
      %v2745 = vadd.f32 %v2743, %v2744
      %v2746 = vsel %vm2485, %v2352, 0.0
      %v2747 = vadd.f32 %v2745, %v2746
      %v2748 = vsel %vm2485, %v2353, 0.0
      %v2749 = vadd.f32 %v2747, %v2748
      %v2750 = vsel %vm2485, %v2354, 0.0
      %v2751 = vadd.f32 %v2749, %v2750
      %v2752 = vsel %vm2485, %v2355, 0.0
      %v2753 = vadd.f32 %v2751, %v2752
      %v2754 = vsel %vm2485, %v2356, 0.0
      %v2755 = vadd.f32 %v2753, %v2754
      %v2756 = vrot.slane %v2755, 4
      %v2757 = vadd.f32 %v2755, %v2756
      %v2758 = vrot.slane %v2757, 2
      %v2759 = vadd.f32 %v2757, %v2758
      %v2760 = vrot.slane %v2759, 1
      %v2761 = vadd.f32 %v2759, %v2760
      %v2762 = vsel %vm2485, %v2357, 0.0
      %v2763 = vsel %vm2485, %v2358, 0.0
      %v2764 = vadd.f32 %v2762, %v2763
      %v2765 = vsel %vm2485, %v2359, 0.0
      %v2766 = vadd.f32 %v2764, %v2765
      %v2767 = vsel %vm2485, %v2360, 0.0
      %v2768 = vadd.f32 %v2766, %v2767
      %v2769 = vsel %vm2485, %v2361, 0.0
      %v2770 = vadd.f32 %v2768, %v2769
      %v2771 = vsel %vm2485, %v2362, 0.0
      %v2772 = vadd.f32 %v2770, %v2771
      %v2773 = vsel %vm2485, %v2363, 0.0
      %v2774 = vadd.f32 %v2772, %v2773
      %v2775 = vsel %vm2485, %v2364, 0.0
      %v2776 = vadd.f32 %v2774, %v2775
      %v2777 = vsel %vm2485, %v2365, 0.0
      %v2778 = vadd.f32 %v2776, %v2777
      %v2779 = vsel %vm2485, %v2366, 0.0
      %v2780 = vadd.f32 %v2778, %v2779
      %v2781 = vsel %vm2485, %v2367, 0.0
      %v2782 = vadd.f32 %v2780, %v2781
      %v2783 = vsel %vm2485, %v2368, 0.0
      %v2784 = vadd.f32 %v2782, %v2783
      %v2785 = vsel %vm2485, %v2369, 0.0
      %v2786 = vadd.f32 %v2784, %v2785
      %v2787 = vsel %vm2485, %v2370, 0.0
      %v2788 = vadd.f32 %v2786, %v2787
      %v2789 = vsel %vm2485, %v2371, 0.0
      %v2790 = vadd.f32 %v2788, %v2789
      %v2791 = vsel %vm2485, %v2372, 0.0
      %v2792 = vadd.f32 %v2790, %v2791
      %v2793 = vsel %vm2485, %v2373, 0.0
      %v2794 = vadd.f32 %v2792, %v2793
      %v2795 = vsel %vm2485, %v2374, 0.0
      %v2796 = vadd.f32 %v2794, %v2795
      %v2797 = vsel %vm2485, %v2375, 0.0
      %v2798 = vadd.f32 %v2796, %v2797
      %v2799 = vsel %vm2485, %v2376, 0.0
      %v2800 = vadd.f32 %v2798, %v2799
      %v2801 = vsel %vm2485, %v2377, 0.0
      %v2802 = vadd.f32 %v2800, %v2801
      %v2803 = vsel %vm2485, %v2378, 0.0
      %v2804 = vadd.f32 %v2802, %v2803
      %v2805 = vsel %vm2485, %v2379, 0.0
      %v2806 = vadd.f32 %v2804, %v2805
      %v2807 = vsel %vm2485, %v2380, 0.0
      %v2808 = vadd.f32 %v2806, %v2807
      %v2809 = vsel %vm2485, %v2381, 0.0
      %v2810 = vadd.f32 %v2808, %v2809
      %v2811 = vsel %vm2485, %v2382, 0.0
      %v2812 = vadd.f32 %v2810, %v2811
      %v2813 = vsel %vm2485, %v2383, 0.0
      %v2814 = vadd.f32 %v2812, %v2813
      %v2815 = vsel %vm2485, %v2384, 0.0
      %v2816 = vadd.f32 %v2814, %v2815
      %v2817 = vsel %vm2485, %v2385, 0.0
      %v2818 = vadd.f32 %v2816, %v2817
      %v2819 = vsel %vm2485, %v2386, 0.0
      %v2820 = vadd.f32 %v2818, %v2819
      %v2821 = vsel %vm2485, %v2387, 0.0
      %v2822 = vadd.f32 %v2820, %v2821
      %v2823 = vsel %vm2485, %v2388, 0.0
      %v2824 = vadd.f32 %v2822, %v2823
      %v2825 = vrot.slane %v2824, 4
      %v2826 = vadd.f32 %v2824, %v2825
      %v2827 = vrot.slane %v2826, 2
      %v2828 = vadd.f32 %v2826, %v2827
      %v2829 = vrot.slane %v2828, 1
      %v2830 = vadd.f32 %v2828, %v2829
      %v2831 = vsel %vm2485, %v2389, 0.0
      %v2832 = vsel %vm2485, %v2390, 0.0
      %v2833 = vadd.f32 %v2831, %v2832
      %v2834 = vsel %vm2485, %v2391, 0.0
      %v2835 = vadd.f32 %v2833, %v2834
      %v2836 = vsel %vm2485, %v2392, 0.0
      %v2837 = vadd.f32 %v2835, %v2836
      %v2838 = vsel %vm2485, %v2393, 0.0
      %v2839 = vadd.f32 %v2837, %v2838
      %v2840 = vsel %vm2485, %v2394, 0.0
      %v2841 = vadd.f32 %v2839, %v2840
      %v2842 = vsel %vm2485, %v2395, 0.0
      %v2843 = vadd.f32 %v2841, %v2842
      %v2844 = vsel %vm2485, %v2396, 0.0
      %v2845 = vadd.f32 %v2843, %v2844
      %v2846 = vsel %vm2485, %v2397, 0.0
      %v2847 = vadd.f32 %v2845, %v2846
      %v2848 = vsel %vm2485, %v2398, 0.0
      %v2849 = vadd.f32 %v2847, %v2848
      %v2850 = vsel %vm2485, %v2399, 0.0
      %v2851 = vadd.f32 %v2849, %v2850
      %v2852 = vsel %vm2485, %v2400, 0.0
      %v2853 = vadd.f32 %v2851, %v2852
      %v2854 = vsel %vm2485, %v2401, 0.0
      %v2855 = vadd.f32 %v2853, %v2854
      %v2856 = vsel %vm2485, %v2402, 0.0
      %v2857 = vadd.f32 %v2855, %v2856
      %v2858 = vsel %vm2485, %v2403, 0.0
      %v2859 = vadd.f32 %v2857, %v2858
      %v2860 = vsel %vm2485, %v2404, 0.0
      %v2861 = vadd.f32 %v2859, %v2860
      %v2862 = vsel %vm2485, %v2405, 0.0
      %v2863 = vadd.f32 %v2861, %v2862
      %v2864 = vsel %vm2485, %v2406, 0.0
      %v2865 = vadd.f32 %v2863, %v2864
      %v2866 = vsel %vm2485, %v2407, 0.0
      %v2867 = vadd.f32 %v2865, %v2866
      %v2868 = vsel %vm2485, %v2408, 0.0
      %v2869 = vadd.f32 %v2867, %v2868
      %v2870 = vsel %vm2485, %v2409, 0.0
      %v2871 = vadd.f32 %v2869, %v2870
      %v2872 = vsel %vm2485, %v2410, 0.0
      %v2873 = vadd.f32 %v2871, %v2872
      %v2874 = vsel %vm2485, %v2411, 0.0
      %v2875 = vadd.f32 %v2873, %v2874
      %v2876 = vsel %vm2485, %v2412, 0.0
      %v2877 = vadd.f32 %v2875, %v2876
      %v2878 = vsel %vm2485, %v2413, 0.0
      %v2879 = vadd.f32 %v2877, %v2878
      %v2880 = vsel %vm2485, %v2414, 0.0
      %v2881 = vadd.f32 %v2879, %v2880
      %v2882 = vsel %vm2485, %v2415, 0.0
      %v2883 = vadd.f32 %v2881, %v2882
      %v2884 = vsel %vm2485, %v2416, 0.0
      %v2885 = vadd.f32 %v2883, %v2884
      %v2886 = vsel %vm2485, %v2417, 0.0
      %v2887 = vadd.f32 %v2885, %v2886
      %v2888 = vsel %vm2485, %v2418, 0.0
      %v2889 = vadd.f32 %v2887, %v2888
      %v2890 = vsel %vm2485, %v2419, 0.0
      %v2891 = vadd.f32 %v2889, %v2890
      %v2892 = vsel %vm2485, %v2420, 0.0
      %v2893 = vadd.f32 %v2891, %v2892
      %v2894 = vrot.slane %v2893, 4
      %v2895 = vadd.f32 %v2893, %v2894
      %v2896 = vrot.slane %v2895, 2
      %v2897 = vadd.f32 %v2895, %v2896
      %v2898 = vrot.slane %v2897, 1
      %v2899 = vadd.f32 %v2897, %v2898
      %v2900 = vsel %vm2485, %v2421, 0.0
      %v2901 = vsel %vm2485, %v2422, 0.0
      %v2902 = vadd.f32 %v2900, %v2901
      %v2903 = vsel %vm2485, %v2423, 0.0
      %v2904 = vadd.f32 %v2902, %v2903
      %v2905 = vsel %vm2485, %v2424, 0.0
      %v2906 = vadd.f32 %v2904, %v2905
      %v2907 = vsel %vm2485, %v2425, 0.0
      %v2908 = vadd.f32 %v2906, %v2907
      %v2909 = vsel %vm2485, %v2426, 0.0
      %v2910 = vadd.f32 %v2908, %v2909
      %v2911 = vsel %vm2485, %v2427, 0.0
      %v2912 = vadd.f32 %v2910, %v2911
      %v2913 = vsel %vm2485, %v2428, 0.0
      %v2914 = vadd.f32 %v2912, %v2913
      %v2915 = vsel %vm2485, %v2429, 0.0
      %v2916 = vadd.f32 %v2914, %v2915
      %v2917 = vsel %vm2485, %v2430, 0.0
      %v2918 = vadd.f32 %v2916, %v2917
      %v2919 = vsel %vm2485, %v2431, 0.0
      %v2920 = vadd.f32 %v2918, %v2919
      %v2921 = vsel %vm2485, %v2432, 0.0
      %v2922 = vadd.f32 %v2920, %v2921
      %v2923 = vsel %vm2485, %v2433, 0.0
      %v2924 = vadd.f32 %v2922, %v2923
      %v2925 = vsel %vm2485, %v2434, 0.0
      %v2926 = vadd.f32 %v2924, %v2925
      %v2927 = vsel %vm2485, %v2435, 0.0
      %v2928 = vadd.f32 %v2926, %v2927
      %v2929 = vsel %vm2485, %v2436, 0.0
      %v2930 = vadd.f32 %v2928, %v2929
      %v2931 = vsel %vm2485, %v2437, 0.0
      %v2932 = vadd.f32 %v2930, %v2931
      %v2933 = vsel %vm2485, %v2438, 0.0
      %v2934 = vadd.f32 %v2932, %v2933
      %v2935 = vsel %vm2485, %v2439, 0.0
      %v2936 = vadd.f32 %v2934, %v2935
      %v2937 = vsel %vm2485, %v2440, 0.0
      %v2938 = vadd.f32 %v2936, %v2937
      %v2939 = vsel %vm2485, %v2441, 0.0
      %v2940 = vadd.f32 %v2938, %v2939
      %v2941 = vsel %vm2485, %v2442, 0.0
      %v2942 = vadd.f32 %v2940, %v2941
      %v2943 = vsel %vm2485, %v2443, 0.0
      %v2944 = vadd.f32 %v2942, %v2943
      %v2945 = vsel %vm2485, %v2444, 0.0
      %v2946 = vadd.f32 %v2944, %v2945
      %v2947 = vsel %vm2485, %v2445, 0.0
      %v2948 = vadd.f32 %v2946, %v2947
      %v2949 = vsel %vm2485, %v2446, 0.0
      %v2950 = vadd.f32 %v2948, %v2949
      %v2951 = vsel %vm2485, %v2447, 0.0
      %v2952 = vadd.f32 %v2950, %v2951
      %v2953 = vsel %vm2485, %v2448, 0.0
      %v2954 = vadd.f32 %v2952, %v2953
      %v2955 = vsel %vm2485, %v2449, 0.0
      %v2956 = vadd.f32 %v2954, %v2955
      %v2957 = vsel %vm2485, %v2450, 0.0
      %v2958 = vadd.f32 %v2956, %v2957
      %v2959 = vsel %vm2485, %v2451, 0.0
      %v2960 = vadd.f32 %v2958, %v2959
      %v2961 = vsel %vm2485, %v2452, 0.0
      %v2962 = vadd.f32 %v2960, %v2961
      %v2963 = vrot.slane %v2962, 4
      %v2964 = vadd.f32 %v2962, %v2963
      %v2965 = vrot.slane %v2964, 2
      %v2966 = vadd.f32 %v2964, %v2965
      %v2967 = vrot.slane %v2966, 1
      %v2968 = vadd.f32 %v2966, %v2967
      %v2969 = vsel %vm2485, %v2453, 0.0
      %v2970 = vsel %vm2485, %v2454, 0.0
      %v2971 = vadd.f32 %v2969, %v2970
      %v2972 = vsel %vm2485, %v2455, 0.0
      %v2973 = vadd.f32 %v2971, %v2972
      %v2974 = vsel %vm2485, %v2456, 0.0
      %v2975 = vadd.f32 %v2973, %v2974
      %v2976 = vsel %vm2485, %v2457, 0.0
      %v2977 = vadd.f32 %v2975, %v2976
      %v2978 = vsel %vm2485, %v2458, 0.0
      %v2979 = vadd.f32 %v2977, %v2978
      %v2980 = vsel %vm2485, %v2459, 0.0
      %v2981 = vadd.f32 %v2979, %v2980
      %v2982 = vsel %vm2485, %v2460, 0.0
      %v2983 = vadd.f32 %v2981, %v2982
      %v2984 = vsel %vm2485, %v2461, 0.0
      %v2985 = vadd.f32 %v2983, %v2984
      %v2986 = vsel %vm2485, %v2462, 0.0
      %v2987 = vadd.f32 %v2985, %v2986
      %v2988 = vsel %vm2485, %v2463, 0.0
      %v2989 = vadd.f32 %v2987, %v2988
      %v2990 = vsel %vm2485, %v2464, 0.0
      %v2991 = vadd.f32 %v2989, %v2990
      %v2992 = vsel %vm2485, %v2465, 0.0
      %v2993 = vadd.f32 %v2991, %v2992
      %v2994 = vsel %vm2485, %v2466, 0.0
      %v2995 = vadd.f32 %v2993, %v2994
      %v2996 = vsel %vm2485, %v2467, 0.0
      %v2997 = vadd.f32 %v2995, %v2996
      %v2998 = vsel %vm2485, %v2468, 0.0
      %v2999 = vadd.f32 %v2997, %v2998
      %v3000 = vsel %vm2485, %v2469, 0.0
      %v3001 = vadd.f32 %v2999, %v3000
      %v3002 = vsel %vm2485, %v2470, 0.0
      %v3003 = vadd.f32 %v3001, %v3002
      %v3004 = vsel %vm2485, %v2471, 0.0
      %v3005 = vadd.f32 %v3003, %v3004
      %v3006 = vsel %vm2485, %v2472, 0.0
      %v3007 = vadd.f32 %v3005, %v3006
      %v3008 = vsel %vm2485, %v2473, 0.0
      %v3009 = vadd.f32 %v3007, %v3008
      %v3010 = vsel %vm2485, %v2474, 0.0
      %v3011 = vadd.f32 %v3009, %v3010
      %v3012 = vsel %vm2485, %v2475, 0.0
      %v3013 = vadd.f32 %v3011, %v3012
      %v3014 = vsel %vm2485, %v2476, 0.0
      %v3015 = vadd.f32 %v3013, %v3014
      %v3016 = vsel %vm2485, %v2477, 0.0
      %v3017 = vadd.f32 %v3015, %v3016
      %v3018 = vsel %vm2485, %v2478, 0.0
      %v3019 = vadd.f32 %v3017, %v3018
      %v3020 = vsel %vm2485, %v2479, 0.0
      %v3021 = vadd.f32 %v3019, %v3020
      %v3022 = vsel %vm2485, %v2480, 0.0
      %v3023 = vadd.f32 %v3021, %v3022
      %v3024 = vsel %vm2485, %v2481, 0.0
      %v3025 = vadd.f32 %v3023, %v3024
      %v3026 = vsel %vm2485, %v2482, 0.0
      %v3027 = vadd.f32 %v3025, %v3026
      %v3028 = vsel %vm2485, %v2483, 0.0
      %v3029 = vadd.f32 %v3027, %v3028
      %v3030 = vsel %vm2485, %v2484, 0.0
      %v3031 = vadd.f32 %v3029, %v3030
      %v3032 = vrot.slane %v3031, 4
      %v3033 = vadd.f32 %v3031, %v3032
      %v3034 = vrot.slane %v3033, 2
      %v3035 = vadd.f32 %v3033, %v3034
      %v3036 = vrot.slane %v3035, 1
      %v3037 = vadd.f32 %v3035, %v3036
      %v3038 = vrcp.pop 256.0
      %v3039 = vmul.f32 256.0, %v3038
      %v3040 = vsub.f32 1.0, %v3039
      %v3041 = vmul.f32 %v3038, %v3040
      %v3042 = vadd.f32 %v3038, %v3041
      %vm3043 = vweird.f32 %v3038
      %v3044 = vsel %vm3043, %v3038, %v3042
      %v3045 = vmul.f32 %v2554, %v3044
      %v3046 = vmul.f32 %v2623, %v3044
      %v3047 = vmul.f32 %v2692, %v3044
      %v3048 = vmul.f32 %v2761, %v3044
      %v3049 = vmul.f32 %v2830, %v3044
      %v3050 = vmul.f32 %v2899, %v3044
      %v3051 = vmul.f32 %v2968, %v3044
      %v3052 = vmul.f32 %v3037, %v3044
      %v3053 = vld [vmem:[%s4] sm:$0xff]
      %v3054 = vld [vmem:[%s4 + $0x8] sm:$0xff]
      %v3055 = vld [vmem:[%s4 + $0x10] sm:$0xff]
      %v3056 = vld [vmem:[%s4 + $0x18] sm:$0xff]
      %v3057 = vld [vmem:[%s5] sm:$0xf]
      %v3059 = vperm.slane %v3057, 0
      %v3060 = vperm.slane %v3057, 1
      %v3061 = vperm.slane %v3057, 2
      %v3062 = vperm.slane %v3057, 3
      %vm3075 = vcmask 1041409
      %v3076 = vsel %vm3075, %v3046, %v3045
      %vm3077 = vcmask 1042434
      %v3078 = vsel %vm3077, %v3047, %v3076
      %vm3079 = vcmask 1043459
      %v3080 = vsel %vm3079, %v3048, %v3078
      %vm3081 = vcmask 1044484
      %v3082 = vsel %vm3081, %v3049, %v3080
      %vm3083 = vcmask 1045509
      %v3084 = vsel %vm3083, %v3050, %v3082
      %vm3085 = vcmask 1046534
      %v3086 = vsel %vm3085, %v3051, %v3084
      %vm3087 = vcmask 1047559
      %v3088 = vsel %vm3087, %v3052, %v3086
      %v3089 = vsel %vm2485, %v3088, 0
      %3091 = vmatpush.msra.mxu0 0.0
      %3092 = vmatpush.msra.mxu0 0.0
      %3093 = vmatpush.msra.mxu0 0.0
      %3094 = vmatpush.msra.mxu0 0.0
      %3095 = vmatpush.msra.mxu0 0.0
      %3096 = vmatpush.msra.mxu0 0.0
      %3097 = vmatpush.msra.mxu0 0.0
      %3098 = vmatpush.msra.mxu0 0.0
      %3099 = vmatpush.msra.mxu0 0.0
      %3100 = vmatpush.msra.mxu0 0.0
      %3101 = vmatpush.msra.mxu0 0.0
      %3102 = vmatpush.msra.mxu0 0.0
      %3103 = vmatpush.msra.mxu0 0.0
      %3104 = vmatpush.msra.mxu0 0.0
      %3105 = vmatpush.msra.mxu0 0.0
      %3106 = vmatpush.msra.mxu0 %v3053
      %3107 = vmatmul.f32.gmra.mxu0 %v3089
      %v3108 = vpop.f32.mrf.mxu0
      %v3109 = vadd.f32 %v3059, %v3108
      %3110 = vdwg.mxu0
      %3111 = vmatpush.msra.mxu0 0.0
      %3112 = vmatpush.msra.mxu0 0.0
      %3113 = vmatpush.msra.mxu0 0.0
      %3114 = vmatpush.msra.mxu0 0.0
      %3115 = vmatpush.msra.mxu0 0.0
      %3116 = vmatpush.msra.mxu0 0.0
      %3117 = vmatpush.msra.mxu0 0.0
      %3118 = vmatpush.msra.mxu0 0.0
      %3119 = vmatpush.msra.mxu0 0.0
      %3120 = vmatpush.msra.mxu0 0.0
      %3121 = vmatpush.msra.mxu0 0.0
      %3122 = vmatpush.msra.mxu0 0.0
      %3123 = vmatpush.msra.mxu0 0.0
      %3124 = vmatpush.msra.mxu0 0.0
      %3125 = vmatpush.msra.mxu0 0.0
      %3126 = vmatpush.msra.mxu0 %v3054
      %3127 = vmatmul.f32.gmra.mxu0 %v3089
      %v3128 = vpop.f32.mrf.mxu0
      %v3129 = vadd.f32 %v3060, %v3128
      %3130 = vdwg.mxu0
      %3131 = vmatpush.msra.mxu0 0.0
      %3132 = vmatpush.msra.mxu0 0.0
      %3133 = vmatpush.msra.mxu0 0.0
      %3134 = vmatpush.msra.mxu0 0.0
      %3135 = vmatpush.msra.mxu0 0.0
      %3136 = vmatpush.msra.mxu0 0.0
      %3137 = vmatpush.msra.mxu0 0.0
      %3138 = vmatpush.msra.mxu0 0.0
      %3139 = vmatpush.msra.mxu0 0.0
      %3140 = vmatpush.msra.mxu0 0.0
      %3141 = vmatpush.msra.mxu0 0.0
      %3142 = vmatpush.msra.mxu0 0.0
      %3143 = vmatpush.msra.mxu0 0.0
      %3144 = vmatpush.msra.mxu0 0.0
      %3145 = vmatpush.msra.mxu0 0.0
      %3146 = vmatpush.msra.mxu0 %v3055
      %3147 = vmatmul.f32.gmra.mxu0 %v3089
      %v3148 = vpop.f32.mrf.mxu0
      %v3149 = vadd.f32 %v3061, %v3148
      %3150 = vdwg.mxu0
      %3151 = vmatpush.msra.mxu0 0.0
      %3152 = vmatpush.msra.mxu0 0.0
      %3153 = vmatpush.msra.mxu0 0.0
      %3154 = vmatpush.msra.mxu0 0.0
      %3155 = vmatpush.msra.mxu0 0.0
      %3156 = vmatpush.msra.mxu0 0.0
      %3157 = vmatpush.msra.mxu0 0.0
      %3158 = vmatpush.msra.mxu0 0.0
      %3159 = vmatpush.msra.mxu0 0.0
      %3160 = vmatpush.msra.mxu0 0.0
      %3161 = vmatpush.msra.mxu0 0.0
      %3162 = vmatpush.msra.mxu0 0.0
      %3163 = vmatpush.msra.mxu0 0.0
      %3164 = vmatpush.msra.mxu0 0.0
      %3165 = vmatpush.msra.mxu0 0.0
      %3166 = vmatpush.msra.mxu0 %v3056
      %3167 = vmatmul.f32.gmra.mxu0 %v3089
      %v3168 = vpop.f32.mrf.mxu0
      %v3169 = vadd.f32 %v3062, %v3168
      %3170 = vdwg.mxu0
      %v3171 = vmax.f32 %v3109, 0.0
      %v3172 = vmax.f32 %v3129, 0.0
      %v3173 = vmax.f32 %v3149, 0.0
      %v3174 = vmax.f32 %v3169, 0.0
      %v3175 = vld [vmem:[%s402] sm:$0xff]
      %v3176 = vld [vmem:[%s6] sm:$0x1]
      %3178 = vset.pattern.permute.xlu0 0
      %3179 = vperm.xlu0 %3178, %v3175
      %v3180 = vpop.permute.xlu0 %3179
      %v3183 = vperm.slane %v3176, 0
      %v3185 = vmul.f32 %v3180, %v3183
      %v3186 = vld [vmem:[%s7] sm:$0x1]
      %v3188 = vperm.slane %v3186, 0
      %v3190 = vadd.f32 %v3185, %v3188
      %v3191 = vmax.f32 %v3190, 0.0
      %v3192 = vld [vmem:[%s8] sm:$0xff]
      %v3193 = vld [vmem:[%s8 + $0x8] sm:$0xff]
      %v3194 = vld [vmem:[%s8 + $0x10] sm:$0xff]
      %v3195 = vld [vmem:[%s8 + $0x18] sm:$0xff]
      %v3196 = vld [vmem:[%s8 + $0x20] sm:$0xff]
      %v3197 = vld [vmem:[%s8 + $0x28] sm:$0xff]
      %v3198 = vld [vmem:[%s8 + $0x30] sm:$0xff]
      %v3199 = vld [vmem:[%s8 + $0x38] sm:$0xff]
      %v3200 = vld [vmem:[%s8 + $0x40] sm:$0xff]
      %v3201 = vld [vmem:[%s8 + $0x48] sm:$0xff]
      %v3202 = vld [vmem:[%s8 + $0x50] sm:$0xff]
      %v3203 = vld [vmem:[%s8 + $0x58] sm:$0xff]
      %v3204 = vld [vmem:[%s8 + $0x60] sm:$0xff]
      %v3205 = vld [vmem:[%s8 + $0x68] sm:$0xff]
      %v3206 = vld [vmem:[%s8 + $0x70] sm:$0xff]
      %v3207 = vld [vmem:[%s8 + $0x78] sm:$0xff]
      %v3208 = vld [vmem:[%s8 + $0x80] sm:$0xff]
      %v3209 = vld [vmem:[%s8 + $0x88] sm:$0xff]
      %v3210 = vld [vmem:[%s8 + $0x90] sm:$0xff]
      %v3211 = vld [vmem:[%s8 + $0x98] sm:$0xff]
      %v3212 = vld [vmem:[%s8 + $0xa0] sm:$0xff]
      %v3213 = vld [vmem:[%s8 + $0xa8] sm:$0xff]
      %v3214 = vld [vmem:[%s8 + $0xb0] sm:$0xff]
      %v3215 = vld [vmem:[%s8 + $0xb8] sm:$0xff]
      %v3216 = vld [vmem:[%s8 + $0xc0] sm:$0xff]
      %v3217 = vld [vmem:[%s8 + $0xc8] sm:$0xff]
      %v3218 = vld [vmem:[%s8 + $0xd0] sm:$0xff]
      %v3219 = vld [vmem:[%s8 + $0xd8] sm:$0xff]
      %v3220 = vld [vmem:[%s8 + $0xe0] sm:$0xff]
      %v3221 = vld [vmem:[%s8 + $0xe8] sm:$0xff]
      %v3222 = vld [vmem:[%s8 + $0xf0] sm:$0xff]
      %v3223 = vld [vmem:[%s8 + $0xf8] sm:$0xff]
      %v3224 = vld [vmem:[%s8 + $0x100] sm:$0xff]
      %v3225 = vld [vmem:[%s8 + $0x108] sm:$0xff]
      %v3226 = vld [vmem:[%s8 + $0x110] sm:$0xff]
      %v3227 = vld [vmem:[%s8 + $0x118] sm:$0xff]
      %v3228 = vld [vmem:[%s8 + $0x120] sm:$0xff]
      %v3229 = vld [vmem:[%s8 + $0x128] sm:$0xff]
      %v3230 = vld [vmem:[%s8 + $0x130] sm:$0xff]
      %v3231 = vld [vmem:[%s8 + $0x138] sm:$0xff]
      %v3232 = vld [vmem:[%s8 + $0x140] sm:$0xff]
      %v3233 = vld [vmem:[%s8 + $0x148] sm:$0xff]
      %v3234 = vld [vmem:[%s8 + $0x150] sm:$0xff]
      %v3235 = vld [vmem:[%s8 + $0x158] sm:$0xff]
      %v3236 = vld [vmem:[%s8 + $0x160] sm:$0xff]
      %v3237 = vld [vmem:[%s8 + $0x168] sm:$0xff]
      %v3238 = vld [vmem:[%s8 + $0x170] sm:$0xff]
      %v3239 = vld [vmem:[%s8 + $0x178] sm:$0xff]
      %v3240 = vld [vmem:[%s8 + $0x180] sm:$0xff]
      %v3241 = vld [vmem:[%s8 + $0x188] sm:$0xff]
      %v3242 = vld [vmem:[%s8 + $0x190] sm:$0xff]
      %v3243 = vld [vmem:[%s8 + $0x198] sm:$0xff]
      %v3244 = vld [vmem:[%s8 + $0x1a0] sm:$0xff]
      %v3245 = vld [vmem:[%s8 + $0x1a8] sm:$0xff]
      %v3246 = vld [vmem:[%s8 + $0x1b0] sm:$0xff]
      %v3247 = vld [vmem:[%s8 + $0x1b8] sm:$0xff]
      %v3248 = vld [vmem:[%s8 + $0x1c0] sm:$0xff]
      %v3249 = vld [vmem:[%s8 + $0x1c8] sm:$0xff]
      %v3250 = vld [vmem:[%s8 + $0x1d0] sm:$0xff]
      %v3251 = vld [vmem:[%s8 + $0x1d8] sm:$0xff]
      %v3252 = vld [vmem:[%s8 + $0x1e0] sm:$0xff]
      %v3253 = vld [vmem:[%s8 + $0x1e8] sm:$0xff]
      %v3254 = vld [vmem:[%s8 + $0x1f0] sm:$0xff]
      %v3255 = vld [vmem:[%s8 + $0x1f8] sm:$0xff]
      %v3256 = vld [vmem:[%s9] sm:$0xff]
      %v3257 = vld [vmem:[%s9 + $0x8] sm:$0xff]
      %v3258 = vld [vmem:[%s9 + $0x10] sm:$0xff]
      %v3259 = vld [vmem:[%s9 + $0x18] sm:$0xff]
      %vm3260 = vcmask 261120
      %v3262 = vsel %vm3260, %v3191, 0
      %3264 = vmatpush.msra.mxu0 0.0
      %3265 = vmatpush.msra.mxu0 0.0
      %3266 = vmatpush.msra.mxu0 0.0
      %3267 = vmatpush.msra.mxu0 0.0
      %3268 = vmatpush.msra.mxu0 0.0
      %3269 = vmatpush.msra.mxu0 0.0
      %3270 = vmatpush.msra.mxu0 0.0
      %3271 = vmatpush.msra.mxu0 0.0
      %3272 = vmatpush.msra.mxu0 0.0
      %3273 = vmatpush.msra.mxu0 0.0
      %3274 = vmatpush.msra.mxu0 0.0
      %3275 = vmatpush.msra.mxu0 0.0
      %3276 = vmatpush.msra.mxu0 %v3259
      %3277 = vmatpush.msra.mxu0 %v3258
      %3278 = vmatpush.msra.mxu0 %v3257
      %3279 = vmatpush.msra.mxu0 %v3256
      %3280 = vmatmul.f32.gmra.mxu0 %v3262
      %v3281 = vpop.f32.mrf.mxu0
      %v3282 = vadd.f32 0.0, %v3281
      %3283 = vdwg.mxu0
      %3284 = vmatpush.msra.mxu0 %v3207
      %3285 = vmatpush.msra.mxu0 %v3206
      %3286 = vmatpush.msra.mxu0 %v3205
      %3287 = vmatpush.msra.mxu0 %v3204
      %3288 = vmatpush.msra.mxu0 %v3203
      %3289 = vmatpush.msra.mxu0 %v3202
      %3290 = vmatpush.msra.mxu0 %v3201
      %3291 = vmatpush.msra.mxu0 %v3200
      %3292 = vmatpush.msra.mxu0 %v3199
      %3293 = vmatpush.msra.mxu0 %v3198
      %3294 = vmatpush.msra.mxu0 %v3197
      %3295 = vmatpush.msra.mxu0 %v3196
      %3296 = vmatpush.msra.mxu0 %v3195
      %3297 = vmatpush.msra.mxu0 %v3194
      %3298 = vmatpush.msra.mxu0 %v3193
      %3299 = vmatpush.msra.mxu0 %v3192
      %3300 = vmatmul.f32.gmra.mxu0 %v3171
      %v3301 = vpop.f32.mrf.mxu0
      %v3302 = vadd.f32 %v3282, %v3301
      %3303 = vdwg.mxu0
      %3304 = vmatpush.msra.mxu0 %v3223
      %3305 = vmatpush.msra.mxu0 %v3222
      %3306 = vmatpush.msra.mxu0 %v3221
      %3307 = vmatpush.msra.mxu0 %v3220
      %3308 = vmatpush.msra.mxu0 %v3219
      %3309 = vmatpush.msra.mxu0 %v3218
      %3310 = vmatpush.msra.mxu0 %v3217
      %3311 = vmatpush.msra.mxu0 %v3216
      %3312 = vmatpush.msra.mxu0 %v3215
      %3313 = vmatpush.msra.mxu0 %v3214
      %3314 = vmatpush.msra.mxu0 %v3213
      %3315 = vmatpush.msra.mxu0 %v3212
      %3316 = vmatpush.msra.mxu0 %v3211
      %3317 = vmatpush.msra.mxu0 %v3210
      %3318 = vmatpush.msra.mxu0 %v3209
      %3319 = vmatpush.msra.mxu0 %v3208
      %3320 = vmatmul.f32.gmra.mxu0 %v3172
      %v3321 = vpop.f32.mrf.mxu0
      %v3322 = vadd.f32 %v3302, %v3321
      %3323 = vdwg.mxu0
      %3324 = vmatpush.msra.mxu0 %v3239
      %3325 = vmatpush.msra.mxu0 %v3238
      %3326 = vmatpush.msra.mxu0 %v3237
      %3327 = vmatpush.msra.mxu0 %v3236
      %3328 = vmatpush.msra.mxu0 %v3235
      %3329 = vmatpush.msra.mxu0 %v3234
      %3330 = vmatpush.msra.mxu0 %v3233
      %3331 = vmatpush.msra.mxu0 %v3232
      %3332 = vmatpush.msra.mxu0 %v3231
      %3333 = vmatpush.msra.mxu0 %v3230
      %3334 = vmatpush.msra.mxu0 %v3229
      %3335 = vmatpush.msra.mxu0 %v3228
      %3336 = vmatpush.msra.mxu0 %v3227
      %3337 = vmatpush.msra.mxu0 %v3226
      %3338 = vmatpush.msra.mxu0 %v3225
      %3339 = vmatpush.msra.mxu0 %v3224
      %3340 = vmatmul.f32.gmra.mxu0 %v3173
      %v3341 = vpop.f32.mrf.mxu0
      %v3342 = vadd.f32 %v3322, %v3341
      %3343 = vdwg.mxu0
      %3344 = vmatpush.msra.mxu0 %v3255
      %3345 = vmatpush.msra.mxu0 %v3254
      %3346 = vmatpush.msra.mxu0 %v3253
      %3347 = vmatpush.msra.mxu0 %v3252
      %3348 = vmatpush.msra.mxu0 %v3251
      %3349 = vmatpush.msra.mxu0 %v3250
      %3350 = vmatpush.msra.mxu0 %v3249
      %3351 = vmatpush.msra.mxu0 %v3248
      %3352 = vmatpush.msra.mxu0 %v3247
      %3353 = vmatpush.msra.mxu0 %v3246
      %3354 = vmatpush.msra.mxu0 %v3245
      %3355 = vmatpush.msra.mxu0 %v3244
      %3356 = vmatpush.msra.mxu0 %v3243
      %3357 = vmatpush.msra.mxu0 %v3242
      %3358 = vmatpush.msra.mxu0 %v3241
      %3359 = vmatpush.msra.mxu0 %v3240
      %3360 = vmatmul.f32.gmra.mxu0 %v3174
      %v3361 = vpop.f32.mrf.mxu0
      %v3362 = vadd.f32 %v3342, %v3361
      %3363 = vdwg.mxu0
      %v3364 = vld [vmem:[%s10] sm:$0x1]
      %v3366 = vperm.slane %v3364, 0
      %v3368 = vadd.f32 %v3362, %v3366
      %3369 = vst [vmem:[%s406] sm:$0xff] %v3368
      %p3370 = scmp.lt.s32.totalorder %s22, 1
      %s3371 = scalar_select %p3370, %s22, 1
      %s3372 = smul.addr %s3371, 8
      %s3373 = scalar_lea.vmem %s11, %s3372
      // Predicated region
      $region65: #{forward.2} parent=63 // pred_check
        %p3374 = pneg %p281
      $region66: #{forward.2} parent=63 // pred_check_branch
        %3376 = sbr.rel (%p3374) target = $region68
      $region67: #{forward.2} parent=63 // pred_region
        _
      $region68: #{forward.2} parent=63 // pred_fallthru
        _
    $region64: #{forward.2} parent=5 // pred_fallthru
      _
    %p3377 = scmp.le.s32.totalorder 2, %s17
    // Predicated region
    $region69: #{forward.2} parent=5 // pred_check
      %p3378 = pneg %p3377
    $region70: #{forward.2} parent=5 // pred_check_branch
      %3380 = sbr.rel (%p3378) target = $region72
    $region71: #{forward.2} parent=5 // pred_region
      %s3381 = ssub.s32 %s17, 2
      // Predicated region
      $region73: #{forward.2} parent=71 // pred_check
        %p3382 = pneg %p287
      $region74: #{forward.2} parent=71 // pred_check_branch
        %3384 = sbr.rel (%p3382) target = $region76
      $region75: #{forward.2} parent=71 // pred_region
        %p3385 = scmp.lt.s32.totalorder %s23, 1
        %s3386 = scalar_select %p3385, %s23, 1
        %s3387 = smul.addr %s3386, 8
        %s3388 = scalar_lea.vmem %s11, %s3387
      $region76: #{forward.2} parent=71 // pred_fallthru
        _
    $region72: #{forward.2} parent=5 // pred_fallthru
      _
  $region6: #{forward.2} parent=0 // loop_footer
    %s21 = sadd.s32 1, %s17
  $region7: #{forward.2} parent=0 // loop_footer_branch
    %16 = sbr.rel target = $region3
  $region8: #{forward.2} parent=0 // loop_exit
    _

</llo_original>
